<compile_context>
chip_gen: v7x
topology: tpu7x:2x2x1
jax: 0.10.0
libtpu: 0.0.40
codegen_flags: <defaults>
</compile_context>

<pallas_src>
import functools

import jax
import jax.numpy as jnp
from jax import lax
from jax.experimental import pallas as pl
from jax.experimental.pallas import tpu as pltpu

NUM_LAYER = 3
LRELU_SLOPE = 0.2
LN_EPS = 1e-5


def _round_up(x, m):
    return ((x + m - 1) // m) * m


def _largest_divisor_le(n, cap):
    cap = max(1, min(cap, n))
    for d in range(cap, 0, -1):
        if n % d == 0:
            return d
    return 1


def _default_conv_mode():
    # v5e (128x128 MXU, single vector-store slot): prefer the 3-tap K=C formulation
    # (no h3 concat).  v6e/v7x (256-deep MXU): the fused K=3C matmul fills the array.
    try:
        kind = jax.devices()[0].device_kind.lower()
        if "v5 lite" in kind or "v5e" in kind or "v5litepod" in kind:
            return "taps"
    except Exception:
        pass
    return "fused"


def tgram_kernel(blocks_ref, wext_ref, gb_ref, wenc_ref, out_ref, *,
                 t_out, t_pad, bb, num_layer, slope, eps, cdtype, conv_mode):
    # blocks_ref: (1, hop, N)   cdtype  N = bb*t_pad; bb items lane-concatenated
    # wext_ref  : (2C, hop)     cdtype  extractor halves [W_a ; W_b] stacked on M
    # gb_ref    : (L, 2, N)     f32     row 0 = gamma, row 1 = beta (zero past t_out,
    #                                   tiled per item)
    # wenc_ref  : (L, C, 3C) "fused" or (L, 3C, C) "taps"     cdtype
    # out_ref   : (1, C, N)     out dtype
    C = wext_ref.shape[0] // 2
    n = bb * t_pad

    # Valid-time mask (per item inside the lane-concatenated block).
    col = lax.broadcasted_iota(jnp.int32, (1, n), 1)
    valid = (col % t_pad) < t_out
    inv_t = 1.0 / t_out
    n_pad_cols = float(t_pad - t_out)

    blk = blocks_ref[0]                                            # (hop, N)

    # ---- extractor: one (2C, hop) @ (hop, N) MXU matmul (both halves fused) ----
    r = jnp.dot(wext_ref[...], blk, preferred_element_type=jnp.float32)
    p_a = r[:C]
    p_b = r[C:]
    # frame t = [block_t ; block_{t+1}]  ->  h[:, t] = W_a @ blk_t + W_b @ blk_{t+1}.
    # roll by -1 fetches p_b[:, t+1]; item-boundary / global wrap lands only in pad
    # columns (t_pad > t_out) and reads W_b @ block_0 == 0 (block 0 is the left pad).
    h = p_a + pltpu.roll(p_b, shift=n - 1, axis=1)                 # (C, N) f32

    for l in range(num_layer):
        # Zero pad columns before the stats (conv taps leak into columns t_out and
        # t_pad-1 of each item on layers > 0; stats and boundaries must exclude them).
        h = jnp.where(valid, h, 0.0)

        # ---- per-item LayerNorm over time (two-pass, pad-compensated variance) ----
        parts = []
        for i in range(bb):                       # bb <= 8; tile-aligned lane slices
            hi = h[:, i * t_pad:(i + 1) * t_pad]                   # (C, t_pad)
            mean = jnp.sum(hi, axis=-1, keepdims=True) * inv_t     # (C, 1)
            d = hi - mean                                          # pad cols -> -mean
            s2 = jnp.sum(d * d, axis=-1, keepdims=True)
            var = jnp.maximum((s2 - n_pad_cols * mean * mean) * inv_t, 0.0)
            parts.append(d * lax.rsqrt(var + eps))
        hn = jnp.concatenate(parts, axis=1)                        # (C, N) f32

        # ---- affine + LeakyReLU (gamma/beta are 0 past t_out, so pad columns of hn
        #      come out exactly 0 -> the conv's zero boundary; no extra mask needed) ----
        gb = gb_ref[l]                                             # (2, N) f32
        hn = hn * gb[0:1] + gb[1:2]
        hn = jnp.where(hn >= 0.0, hn, slope * hn)

        # ---- Conv1d(C, C, 3, padding=1) as one MXU matmul ----
        hn_c = hn.astype(cdtype)                   # cast ONCE, then roll/concat bf16
        if conv_mode == "fused":
            # W (C, 3C) @ [prev; cur; next]  (K = 3C)
            h_prev = pltpu.roll(hn_c, shift=1, axis=1)             # col t <- hn[t-1]
            h_next = pltpu.roll(hn_c, shift=n - 1, axis=1)         # col t <- hn[t+1]
            h3 = jnp.concatenate([h_prev, hn_c, h_next], axis=0)   # (3C, N) cdtype
            h = jnp.dot(wenc_ref[l], h3, preferred_element_type=jnp.float32)
        else:
            # taps stacked on M: y = [W0;W1;W2] (3C, C) @ hn; roll the MXU outputs
            y = jnp.dot(wenc_ref[l], hn_c, preferred_element_type=jnp.float32)
            h = (pltpu.roll(y[:C], shift=1, axis=1)
                 + y[C:2 * C]
                 + pltpu.roll(y[2 * C:], shift=n - 1, axis=1))

    out_ref[0] = h.astype(out_ref.dtype)


def tgram_forward(x, w_ext, gammas, betas, w_convs, *, win_len, hop_len,
                  compute_dtype=jnp.bfloat16, out_dtype=jnp.float32,
                  batch_block=4, conv_mode=None):
    """x: (B, 1, T) float32.  Returns (B, C, T_out) matching PyTorch TgramNet.

    compute_dtype: MXU input dtype (bf16 default, f32 for exact semantics).
    out_dtype: kernel HBM output dtype (set jnp.bfloat16 on v6e to shave HBM bytes).
    batch_block: items fused per grid step (amortizes per-step overhead, widens N).
    conv_mode: "fused" (v6e/v7x) | "taps" (v5e) | None = auto-detect.
    """
    B, _, T = x.shape
    C = w_ext.shape[0]
    L = w_convs.shape[0]
    assert win_len == 2 * hop_len, "framing identity requires hop_len == win_len // 2"
    if conv_mode is None:
        conv_mode = _default_conv_mode()
    pad = win_len // 2
    t_out = (T + 2 * pad - win_len) // hop_len + 1
    # Lane-dense time axis; strictly > t_out so roll wrap-around lands in pad columns.
    t_pad = _round_up(t_out + 1, 128)
    bb = _largest_divisor_le(B, batch_block)
    n = bb * t_pad

    # ---- framing: non-overlapping hop-blocks of the zero-padded signal, bb items
    #      concatenated along the lane-dense time axis ----
    n_blk = t_out + 1
    xp = jnp.pad(x[:, 0, :], ((0, 0), (pad, pad)))[:, : n_blk * hop_len]
    blocks = jnp.transpose(xp.reshape(B, n_blk, hop_len), (0, 2, 1))     # (B, hop, n_blk)
    blocks = jnp.pad(blocks, ((0, 0), (0, 0), (0, t_pad - n_blk)))
    blocks = blocks.reshape(B // bb, bb, hop_len, t_pad).transpose(0, 2, 1, 3)
    blocks = blocks.reshape(B // bb, hop_len, n).astype(compute_dtype)

    # ---- weights, pre-packed for the kernel ----
    # extractor halves stacked on M -> one (2C, hop) MXU LHS
    w_ext2 = jnp.concatenate([w_ext[:, :hop_len], w_ext[:, hop_len:]],
                             axis=0).astype(compute_dtype)
    # gamma/beta: zero-padded past t_out (conv zero boundary), tiled per item, merged
    gam = jnp.tile(jnp.pad(gammas, ((0, 0), (0, t_pad - t_out))), (1, bb))
    bet = jnp.tile(jnp.pad(betas, ((0, 0), (0, t_pad - t_out))), (1, bb))
    gb = jnp.stack([gam, bet], axis=1).astype(jnp.float32)               # (L, 2, N)
    if conv_mode == "fused":
        # taps concatenated along K -> (L, C, 3C)
        w_enc = jnp.concatenate(
            [w_convs[..., 0], w_convs[..., 1], w_convs[..., 2]], axis=-1)
    else:
        # taps stacked along M -> (L, 3C, C); MXU outputs get rolled instead
        w_enc = jnp.concatenate(
            [w_convs[..., 0], w_convs[..., 1], w_convs[..., 2]], axis=1)
    w_enc = w_enc.astype(compute_dtype)

    kernel = functools.partial(
        tgram_kernel, t_out=t_out, t_pad=t_pad, bb=bb, num_layer=L,
        slope=LRELU_SLOPE, eps=LN_EPS, cdtype=compute_dtype, conv_mode=conv_mode)

    out = pl.pallas_call(
        kernel,
        out_shape=jax.ShapeDtypeStruct((B // bb, C, n), out_dtype),
        grid_spec=pltpu.PrefetchScalarGridSpec(
            num_scalar_prefetch=0,
            grid=(B // bb,),
            in_specs=[
                pl.BlockSpec((1, hop_len, n), lambda b: (b, 0, 0)),
                pl.BlockSpec((2 * C, hop_len), lambda b: (0, 0)),
                pl.BlockSpec((L, 2, n), lambda b: (0, 0, 0)),
                pl.BlockSpec(w_enc.shape, lambda b: (0, 0, 0)),
            ],
            out_specs=pl.BlockSpec((1, C, n), lambda b: (b, 0, 0)),
        ),
        compiler_params=pltpu.CompilerParams(
            dimension_semantics=("parallel",)),
    )(blocks, w_ext2, gb, w_enc)

    # un-batch the lane-concatenated items, drop pad columns
    out = out.reshape(B // bb, C, bb, t_pad).transpose(0, 2, 1, 3).reshape(B, C, t_pad)
    return out[..., :t_out].astype(x.dtype)


def tgram_reference(x, w_ext, gammas, betas, w_convs, *, win_len, hop_len):
    """Pure-JAX reference matching the PyTorch forward (NCT layout)."""
    pad = win_len // 2
    h = lax.conv_general_dilated(x, w_ext[:, None, :], (hop_len,), [(pad, pad)],
                                 dimension_numbers=('NCH', 'OIH', 'NCH'))
    for l in range(NUM_LAYER):
        mean = h.mean(axis=-1, keepdims=True)
        var = ((h - mean) ** 2).mean(axis=-1, keepdims=True)
        hn = (h - mean) / jnp.sqrt(var + LN_EPS) * gammas[l] + betas[l]
        hn = jnp.where(hn >= 0, hn, LRELU_SLOPE * hn)
        h = lax.conv_general_dilated(hn, w_convs[l], (1,), [(1, 1)],
                                     dimension_numbers=('NCH', 'OIH', 'NCH'))
    return h


if __name__ == "__main__":
    # Small shapes consistent with the module (real: mel_bins=128, win=1024, hop=512,
    # T=160000 -> T_out=313, t_pad=384).
    B, T = 8, 128
    mel_bins, win_len, hop_len = 32, 16, 8
    t_out = (T + 2 * (win_len // 2) - win_len) // hop_len + 1   # = 17

    key = jax.random.PRNGKey(0)
    ks = jax.random.split(key, 5)
    x = jax.random.normal(ks[0], (B, 1, T), jnp.float32)
    # Deterministic synthetic parameters (shapes follow nn.Conv1d / nn.LayerNorm).
    w_ext = jax.random.normal(ks[1], (mel_bins, win_len), jnp.float32) / (win_len ** 0.5)
    gammas = 1.0 + 0.1 * jax.random.normal(ks[2], (NUM_LAYER, t_out), jnp.float32)
    betas = 0.1 * jax.random.normal(ks[3], (NUM_LAYER, t_out), jnp.float32)
    w_convs = jax.random.normal(
        ks[4], (NUM_LAYER, mel_bins, mel_bins, 3), jnp.float32) / ((3 * mel_bins) ** 0.5)

    ref = tgram_reference(x, w_ext, gammas, betas, w_convs,
                          win_len=win_len, hop_len=hop_len)

    # Exact-semantics check of both conv formulations: f32 compute path vs pure-JAX ref.
    for mode in ("fused", "taps"):
        out_f32 = jax.block_until_ready(
            tgram_forward(x, w_ext, gammas, betas, w_convs, win_len=win_len,
                          hop_len=hop_len, compute_dtype=jnp.float32,
                          batch_block=4, conv_mode=mode))
        assert out_f32.shape == (B, mel_bins, t_out), out_f32.shape
        err32 = float(jnp.max(jnp.abs(out_f32 - ref)))
        assert jnp.allclose(out_f32, ref, rtol=1e-3, atol=1e-3), \
            f"{mode} f32 max_err={err32}"

    # Performance path: bf16 MXU inputs with f32 accumulation, chip-auto conv mode
    # (looser tolerance is purely bf16 input rounding; semantics are identical).
    out_bf16 = jax.block_until_ready(
        tgram_forward(x, w_ext, gammas, betas, w_convs, win_len=win_len,
                      hop_len=hop_len, compute_dtype=jnp.bfloat16, batch_block=4))
    err16 = float(jnp.max(jnp.abs(out_bf16 - ref)))
    assert jnp.allclose(out_bf16, ref, rtol=5e-2, atol=5e-2), f"bf16 max_err={err16}"

    print("KERNEL_OK")
</pallas_src>

<mosaic_0001>
module attributes {stable_mosaic.version = 11 : i64} {
  func.func @tgram_kernel(%arg0: i32, %arg1: memref<1x8x512xf32, #tpu.memory_space<vmem>>, %arg2: memref<64x8xf32, #tpu.memory_space<vmem>>, %arg3: memref<3x2x512xf32, #tpu.memory_space<vmem>>, %arg4: memref<3x32x96xf32, #tpu.memory_space<vmem>>, %arg5: memref<1x32x512xf32, #tpu.memory_space<vmem>>) attributes {dimension_semantics = [#tpu.dimension_semantics<parallel>], iteration_bounds = array<i64: 2>, scalar_prefetch = 0 : i64, scratch_operands = 0 : i64, tpu.core_type = #tpu.core_type<tc>, window_params = [{transform_indices = @transform_0, window_bounds = array<i64: 1, 8, 512>}, {pipeline_mode = #tpu.pipeline_mode<synchronous>, transform_indices = @transform_1, window_bounds = array<i64: 64, 8>}, {pipeline_mode = #tpu.pipeline_mode<synchronous>, transform_indices = @transform_2, window_bounds = array<i64: 3, 2, 512>}, {pipeline_mode = #tpu.pipeline_mode<synchronous>, transform_indices = @transform_3, window_bounds = array<i64: 3, 32, 96>}, {transform_indices = @transform_4, window_bounds = array<i64: 1, 32, 512>}]} {
    %0 = tpu.iota {dimensions = array<i32: 1>} : vector<1x512xi32>
    %c128_i32 = arith.constant 128 : i32
    %c0_i32 = arith.constant 0 : i32
    %1 = arith.cmpi eq, %c128_i32, %c0_i32 : i32
    %c1_i32 = arith.constant 1 : i32
    %2 = arith.select %1, %c1_i32, %c128_i32 : i32
    %3 = vector.broadcast %2 : i32 to vector<1x512xi32>
    %4 = arith.remsi %0, %3 : vector<1x512xi32>
    %c0_i32_0 = arith.constant 0 : i32
    %5 = vector.broadcast %c0_i32_0 : i32 to vector<1x512xi32>
    %6 = arith.cmpi ne, %4, %5 : vector<1x512xi32>
    %c0_i32_1 = arith.constant 0 : i32
    %7 = vector.broadcast %c0_i32_1 : i32 to vector<1x512xi32>
    %8 = arith.cmpi slt, %4, %7 : vector<1x512xi32>
    %c0_i32_2 = arith.constant 0 : i32
    %9 = arith.cmpi slt, %2, %c0_i32_2 : i32
    %10 = vector.broadcast %9 : i1 to vector<1x512xi1>
    %11 = vector.broadcast %10 : vector<1x512xi1> to vector<1x512xi1>
    %12 = arith.xori %8, %11 : vector<1x512xi1>
    %13 = arith.andi %12, %6 : vector<1x512xi1>
    %14 = vector.broadcast %2 : i32 to vector<1x512xi32>
    %15 = arith.addi %4, %14 : vector<1x512xi32>
    %16 = arith.select %13, %15, %4 : vector<1x512xi1>, vector<1x512xi32>
    %c17_i32 = arith.constant 17 : i32
    %17 = vector.broadcast %c17_i32 : i32 to vector<1x512xi32>
    %18 = arith.cmpi slt, %16, %17 : vector<1x512xi32>
    %c0 = arith.constant 0 : index
    %c0_3 = arith.constant 0 : index
    %c0_4 = arith.constant 0 : index
    %19 = vector.load %arg1[%c0, %c0_3, %c0_4] : memref<1x8x512xf32, #tpu.memory_space<vmem>>, vector<1x8x512xf32>
    %20 = vector.shape_cast %19 : vector<1x8x512xf32> to vector<8x512xf32>
    %c0_5 = arith.constant 0 : index
    %c0_6 = arith.constant 0 : index
    %21 = vector.load %arg2[%c0_5, %c0_6] : memref<64x8xf32, #tpu.memory_space<vmem>>, vector<64x8xf32>
    %cst = arith.constant dense<0.000000e+00> : vector<64x512xf32>
    %22 = tpu.matmul %21, %20, %cst {dimension_numbers = #tpu.dot_dimension_numbers<[1], [0], [0], [1], [0, 0, 1, 1], [], []>} : vector<64x8xf32>, vector<8x512xf32>, vector<64x512xf32> -> vector<64x512xf32>
    %23 = vector.extract_strided_slice %22 {offsets = [0, 0], sizes = [32, 512], strides = [1, 1]} : vector<64x512xf32> to vector<32x512xf32>
    %24 = vector.extract_strided_slice %22 {offsets = [32, 0], sizes = [32, 512], strides = [1, 1]} : vector<64x512xf32> to vector<32x512xf32>
    %c511_i32 = arith.constant 511 : i32
    %25 = tpu.dynamic_rotate %24 by %c511_i32 dim 1 : vector<32x512xf32>, i32 -> vector<32x512xf32>
    %26 = arith.addf %23, %25 : vector<32x512xf32>
    %cst_7 = arith.constant 0.000000e+00 : f32
    %27 = vector.shape_cast %18 : vector<1x512xi1> to vector<1x512xi1>
    %28 = vector.broadcast %27 : vector<1x512xi1> to vector<32x512xi1>
    %29 = vector.broadcast %cst_7 : f32 to vector<32x512xf32>
    %30 = arith.select %28, %26, %29 : vector<32x512xi1>, vector<32x512xf32>
    %31 = vector.extract_strided_slice %30 {offsets = [0, 0], sizes = [32, 128], strides = [1, 1]} : vector<32x512xf32> to vector<32x128xf32>
    %cst_8 = arith.constant dense<0.000000e+00> : vector<32xf32>
    %32 = vector.multi_reduction <add>, %31, %cst_8 [1] : vector<32x128xf32> to vector<32xf32>
    %33 = vector.shape_cast %32 : vector<32xf32> to vector<32x1xf32>
    %cst_9 = arith.constant 0.0588235296 : f32
    %34 = vector.broadcast %cst_9 : f32 to vector<32x1xf32>
    %35 = arith.mulf %33, %34 : vector<32x1xf32>
    %36 = vector.broadcast %35 : vector<32x1xf32> to vector<32x128xf32>
    %37 = arith.subf %31, %36 : vector<32x128xf32>
    %38 = arith.mulf %37, %37 : vector<32x128xf32>
    %cst_10 = arith.constant dense<0.000000e+00> : vector<32xf32>
    %39 = vector.multi_reduction <add>, %38, %cst_10 [1] : vector<32x128xf32> to vector<32xf32>
    %40 = vector.shape_cast %39 : vector<32xf32> to vector<32x1xf32>
    %cst_11 = arith.constant 1.110000e+02 : f32
    %41 = vector.broadcast %cst_11 : f32 to vector<32x1xf32>
    %42 = arith.mulf %41, %35 : vector<32x1xf32>
    %43 = arith.mulf %42, %35 : vector<32x1xf32>
    %44 = arith.subf %40, %43 : vector<32x1xf32>
    %cst_12 = arith.constant 0.0588235296 : f32
    %45 = vector.broadcast %cst_12 : f32 to vector<32x1xf32>
    %46 = arith.mulf %44, %45 : vector<32x1xf32>
    %cst_13 = arith.constant 0.000000e+00 : f32
    %47 = vector.broadcast %cst_13 : f32 to vector<32x1xf32>
    %48 = arith.maximumf %46, %47 : vector<32x1xf32>
    %cst_14 = arith.constant 9.99999974E-6 : f32
    %49 = vector.broadcast %cst_14 : f32 to vector<32x1xf32>
    %50 = arith.addf %48, %49 : vector<32x1xf32>
    %51 = math.rsqrt %50 : vector<32x1xf32>
    %52 = vector.broadcast %51 : vector<32x1xf32> to vector<32x128xf32>
    %53 = arith.mulf %37, %52 : vector<32x128xf32>
    %54 = vector.extract_strided_slice %30 {offsets = [0, 128], sizes = [32, 128], strides = [1, 1]} : vector<32x512xf32> to vector<32x128xf32>
    %cst_15 = arith.constant dense<0.000000e+00> : vector<32xf32>
    %55 = vector.multi_reduction <add>, %54, %cst_15 [1] : vector<32x128xf32> to vector<32xf32>
    %56 = vector.shape_cast %55 : vector<32xf32> to vector<32x1xf32>
    %cst_16 = arith.constant 0.0588235296 : f32
    %57 = vector.broadcast %cst_16 : f32 to vector<32x1xf32>
    %58 = arith.mulf %56, %57 : vector<32x1xf32>
    %59 = vector.broadcast %58 : vector<32x1xf32> to vector<32x128xf32>
    %60 = arith.subf %54, %59 : vector<32x128xf32>
    %61 = arith.mulf %60, %60 : vector<32x128xf32>
    %cst_17 = arith.constant dense<0.000000e+00> : vector<32xf32>
    %62 = vector.multi_reduction <add>, %61, %cst_17 [1] : vector<32x128xf32> to vector<32xf32>
    %63 = vector.shape_cast %62 : vector<32xf32> to vector<32x1xf32>
    %cst_18 = arith.constant 1.110000e+02 : f32
    %64 = vector.broadcast %cst_18 : f32 to vector<32x1xf32>
    %65 = arith.mulf %64, %58 : vector<32x1xf32>
    %66 = arith.mulf %65, %58 : vector<32x1xf32>
    %67 = arith.subf %63, %66 : vector<32x1xf32>
    %cst_19 = arith.constant 0.0588235296 : f32
    %68 = vector.broadcast %cst_19 : f32 to vector<32x1xf32>
    %69 = arith.mulf %67, %68 : vector<32x1xf32>
    %cst_20 = arith.constant 0.000000e+00 : f32
    %70 = vector.broadcast %cst_20 : f32 to vector<32x1xf32>
    %71 = arith.maximumf %69, %70 : vector<32x1xf32>
    %cst_21 = arith.constant 9.99999974E-6 : f32
    %72 = vector.broadcast %cst_21 : f32 to vector<32x1xf32>
    %73 = arith.addf %71, %72 : vector<32x1xf32>
    %74 = math.rsqrt %73 : vector<32x1xf32>
    %75 = vector.broadcast %74 : vector<32x1xf32> to vector<32x128xf32>
    %76 = arith.mulf %60, %75 : vector<32x128xf32>
    %77 = vector.extract_strided_slice %30 {offsets = [0, 256], sizes = [32, 128], strides = [1, 1]} : vector<32x512xf32> to vector<32x128xf32>
    %cst_22 = arith.constant dense<0.000000e+00> : vector<32xf32>
    %78 = vector.multi_reduction <add>, %77, %cst_22 [1] : vector<32x128xf32> to vector<32xf32>
    %79 = vector.shape_cast %78 : vector<32xf32> to vector<32x1xf32>
    %cst_23 = arith.constant 0.0588235296 : f32
    %80 = vector.broadcast %cst_23 : f32 to vector<32x1xf32>
    %81 = arith.mulf %79, %80 : vector<32x1xf32>
    %82 = vector.broadcast %81 : vector<32x1xf32> to vector<32x128xf32>
    %83 = arith.subf %77, %82 : vector<32x128xf32>
    %84 = arith.mulf %83, %83 : vector<32x128xf32>
    %cst_24 = arith.constant dense<0.000000e+00> : vector<32xf32>
    %85 = vector.multi_reduction <add>, %84, %cst_24 [1] : vector<32x128xf32> to vector<32xf32>
    %86 = vector.shape_cast %85 : vector<32xf32> to vector<32x1xf32>
    %cst_25 = arith.constant 1.110000e+02 : f32
    %87 = vector.broadcast %cst_25 : f32 to vector<32x1xf32>
    %88 = arith.mulf %87, %81 : vector<32x1xf32>
    %89 = arith.mulf %88, %81 : vector<32x1xf32>
    %90 = arith.subf %86, %89 : vector<32x1xf32>
    %cst_26 = arith.constant 0.0588235296 : f32
    %91 = vector.broadcast %cst_26 : f32 to vector<32x1xf32>
    %92 = arith.mulf %90, %91 : vector<32x1xf32>
    %cst_27 = arith.constant 0.000000e+00 : f32
    %93 = vector.broadcast %cst_27 : f32 to vector<32x1xf32>
    %94 = arith.maximumf %92, %93 : vector<32x1xf32>
    %cst_28 = arith.constant 9.99999974E-6 : f32
    %95 = vector.broadcast %cst_28 : f32 to vector<32x1xf32>
    %96 = arith.addf %94, %95 : vector<32x1xf32>
    %97 = math.rsqrt %96 : vector<32x1xf32>
    %98 = vector.broadcast %97 : vector<32x1xf32> to vector<32x128xf32>
    %99 = arith.mulf %83, %98 : vector<32x128xf32>
    %100 = vector.extract_strided_slice %30 {offsets = [0, 384], sizes = [32, 128], strides = [1, 1]} : vector<32x512xf32> to vector<32x128xf32>
    %cst_29 = arith.constant dense<0.000000e+00> : vector<32xf32>
    %101 = vector.multi_reduction <add>, %100, %cst_29 [1] : vector<32x128xf32> to vector<32xf32>
    %102 = vector.shape_cast %101 : vector<32xf32> to vector<32x1xf32>
    %cst_30 = arith.constant 0.0588235296 : f32
    %103 = vector.broadcast %cst_30 : f32 to vector<32x1xf32>
    %104 = arith.mulf %102, %103 : vector<32x1xf32>
    %105 = vector.broadcast %104 : vector<32x1xf32> to vector<32x128xf32>
    %106 = arith.subf %100, %105 : vector<32x128xf32>
    %107 = arith.mulf %106, %106 : vector<32x128xf32>
    %cst_31 = arith.constant dense<0.000000e+00> : vector<32xf32>
    %108 = vector.multi_reduction <add>, %107, %cst_31 [1] : vector<32x128xf32> to vector<32xf32>
    %109 = vector.shape_cast %108 : vector<32xf32> to vector<32x1xf32>
    %cst_32 = arith.constant 1.110000e+02 : f32
    %110 = vector.broadcast %cst_32 : f32 to vector<32x1xf32>
    %111 = arith.mulf %110, %104 : vector<32x1xf32>
    %112 = arith.mulf %111, %104 : vector<32x1xf32>
    %113 = arith.subf %109, %112 : vector<32x1xf32>
    %cst_33 = arith.constant 0.0588235296 : f32
    %114 = vector.broadcast %cst_33 : f32 to vector<32x1xf32>
    %115 = arith.mulf %113, %114 : vector<32x1xf32>
    %cst_34 = arith.constant 0.000000e+00 : f32
    %116 = vector.broadcast %cst_34 : f32 to vector<32x1xf32>
    %117 = arith.maximumf %115, %116 : vector<32x1xf32>
    %cst_35 = arith.constant 9.99999974E-6 : f32
    %118 = vector.broadcast %cst_35 : f32 to vector<32x1xf32>
    %119 = arith.addf %117, %118 : vector<32x1xf32>
    %120 = math.rsqrt %119 : vector<32x1xf32>
    %121 = vector.broadcast %120 : vector<32x1xf32> to vector<32x128xf32>
    %122 = arith.mulf %106, %121 : vector<32x128xf32>
    %123 = tpu.concatenate %53, %76, %99, %122 in 1 : vector<32x128xf32>, vector<32x128xf32>, vector<32x128xf32>, vector<32x128xf32> -> vector<32x512xf32>
    %c0_36 = arith.constant 0 : index
    %c0_37 = arith.constant 0 : index
    %c0_38 = arith.constant 0 : index
    %124 = vector.load %arg3[%c0_36, %c0_37, %c0_38] : memref<3x2x512xf32, #tpu.memory_space<vmem>>, vector<1x2x512xf32>
    %125 = vector.shape_cast %124 : vector<1x2x512xf32> to vector<2x512xf32>
    %126 = vector.extract_strided_slice %125 {offsets = [0, 0], sizes = [1, 512], strides = [1, 1]} : vector<2x512xf32> to vector<1x512xf32>
    %127 = vector.broadcast %126 : vector<1x512xf32> to vector<32x512xf32>
    %128 = arith.mulf %123, %127 : vector<32x512xf32>
    %129 = vector.extract_strided_slice %125 {offsets = [1, 0], sizes = [1, 512], strides = [1, 1]} : vector<2x512xf32> to vector<1x512xf32>
    %130 = vector.broadcast %129 : vector<1x512xf32> to vector<32x512xf32>
    %131 = arith.addf %128, %130 : vector<32x512xf32>
    %cst_39 = arith.constant 0.000000e+00 : f32
    %132 = vector.broadcast %cst_39 : f32 to vector<32x512xf32>
    %133 = arith.cmpf oge, %131, %132 : vector<32x512xf32>
    %cst_40 = arith.constant 2.000000e-01 : f32
    %134 = vector.broadcast %cst_40 : f32 to vector<32x512xf32>
    %135 = arith.mulf %134, %131 : vector<32x512xf32>
    %136 = arith.select %133, %131, %135 : vector<32x512xi1>, vector<32x512xf32>
    %c1_i32_41 = arith.constant 1 : i32
    %137 = tpu.dynamic_rotate %136 by %c1_i32_41 dim 1 : vector<32x512xf32>, i32 -> vector<32x512xf32>
    %c511_i32_42 = arith.constant 511 : i32
    %138 = tpu.dynamic_rotate %136 by %c511_i32_42 dim 1 : vector<32x512xf32>, i32 -> vector<32x512xf32>
    %139 = tpu.concatenate %137, %136, %138 in 0 : vector<32x512xf32>, vector<32x512xf32>, vector<32x512xf32> -> vector<96x512xf32>
    %c0_43 = arith.constant 0 : index
    %c0_44 = arith.constant 0 : index
    %c0_45 = arith.constant 0 : index
    %140 = vector.load %arg4[%c0_43, %c0_44, %c0_45] : memref<3x32x96xf32, #tpu.memory_space<vmem>>, vector<1x32x96xf32>
    %141 = vector.shape_cast %140 : vector<1x32x96xf32> to vector<32x96xf32>
    %cst_46 = arith.constant dense<0.000000e+00> : vector<32x512xf32>
    %142 = tpu.matmul %141, %139, %cst_46 {dimension_numbers = #tpu.dot_dimension_numbers<[1], [0], [0], [1], [0, 0, 1, 1], [], []>} : vector<32x96xf32>, vector<96x512xf32>, vector<32x512xf32> -> vector<32x512xf32>
    %cst_47 = arith.constant 0.000000e+00 : f32
    %143 = vector.shape_cast %18 : vector<1x512xi1> to vector<1x512xi1>
    %144 = vector.broadcast %143 : vector<1x512xi1> to vector<32x512xi1>
    %145 = vector.broadcast %cst_47 : f32 to vector<32x512xf32>
    %146 = arith.select %144, %142, %145 : vector<32x512xi1>, vector<32x512xf32>
    %147 = vector.extract_strided_slice %146 {offsets = [0, 0], sizes = [32, 128], strides = [1, 1]} : vector<32x512xf32> to vector<32x128xf32>
    %cst_48 = arith.constant dense<0.000000e+00> : vector<32xf32>
    %148 = vector.multi_reduction <add>, %147, %cst_48 [1] : vector<32x128xf32> to vector<32xf32>
    %149 = vector.shape_cast %148 : vector<32xf32> to vector<32x1xf32>
    %cst_49 = arith.constant 0.0588235296 : f32
    %150 = vector.broadcast %cst_49 : f32 to vector<32x1xf32>
    %151 = arith.mulf %149, %150 : vector<32x1xf32>
    %152 = vector.broadcast %151 : vector<32x1xf32> to vector<32x128xf32>
    %153 = arith.subf %147, %152 : vector<32x128xf32>
    %154 = arith.mulf %153, %153 : vector<32x128xf32>
    %cst_50 = arith.constant dense<0.000000e+00> : vector<32xf32>
    %155 = vector.multi_reduction <add>, %154, %cst_50 [1] : vector<32x128xf32> to vector<32xf32>
    %156 = vector.shape_cast %155 : vector<32xf32> to vector<32x1xf32>
    %cst_51 = arith.constant 1.110000e+02 : f32
    %157 = vector.broadcast %cst_51 : f32 to vector<32x1xf32>
    %158 = arith.mulf %157, %151 : vector<32x1xf32>
    %159 = arith.mulf %158, %151 : vector<32x1xf32>
    %160 = arith.subf %156, %159 : vector<32x1xf32>
    %cst_52 = arith.constant 0.0588235296 : f32
    %161 = vector.broadcast %cst_52 : f32 to vector<32x1xf32>
    %162 = arith.mulf %160, %161 : vector<32x1xf32>
    %cst_53 = arith.constant 0.000000e+00 : f32
    %163 = vector.broadcast %cst_53 : f32 to vector<32x1xf32>
    %164 = arith.maximumf %162, %163 : vector<32x1xf32>
    %cst_54 = arith.constant 9.99999974E-6 : f32
    %165 = vector.broadcast %cst_54 : f32 to vector<32x1xf32>
    %166 = arith.addf %164, %165 : vector<32x1xf32>
    %167 = math.rsqrt %166 : vector<32x1xf32>
    %168 = vector.broadcast %167 : vector<32x1xf32> to vector<32x128xf32>
    %169 = arith.mulf %153, %168 : vector<32x128xf32>
    %170 = vector.extract_strided_slice %146 {offsets = [0, 128], sizes = [32, 128], strides = [1, 1]} : vector<32x512xf32> to vector<32x128xf32>
    %cst_55 = arith.constant dense<0.000000e+00> : vector<32xf32>
    %171 = vector.multi_reduction <add>, %170, %cst_55 [1] : vector<32x128xf32> to vector<32xf32>
    %172 = vector.shape_cast %171 : vector<32xf32> to vector<32x1xf32>
    %cst_56 = arith.constant 0.0588235296 : f32
    %173 = vector.broadcast %cst_56 : f32 to vector<32x1xf32>
    %174 = arith.mulf %172, %173 : vector<32x1xf32>
    %175 = vector.broadcast %174 : vector<32x1xf32> to vector<32x128xf32>
    %176 = arith.subf %170, %175 : vector<32x128xf32>
    %177 = arith.mulf %176, %176 : vector<32x128xf32>
    %cst_57 = arith.constant dense<0.000000e+00> : vector<32xf32>
    %178 = vector.multi_reduction <add>, %177, %cst_57 [1] : vector<32x128xf32> to vector<32xf32>
    %179 = vector.shape_cast %178 : vector<32xf32> to vector<32x1xf32>
    %cst_58 = arith.constant 1.110000e+02 : f32
    %180 = vector.broadcast %cst_58 : f32 to vector<32x1xf32>
    %181 = arith.mulf %180, %174 : vector<32x1xf32>
    %182 = arith.mulf %181, %174 : vector<32x1xf32>
    %183 = arith.subf %179, %182 : vector<32x1xf32>
    %cst_59 = arith.constant 0.0588235296 : f32
    %184 = vector.broadcast %cst_59 : f32 to vector<32x1xf32>
    %185 = arith.mulf %183, %184 : vector<32x1xf32>
    %cst_60 = arith.constant 0.000000e+00 : f32
    %186 = vector.broadcast %cst_60 : f32 to vector<32x1xf32>
    %187 = arith.maximumf %185, %186 : vector<32x1xf32>
    %cst_61 = arith.constant 9.99999974E-6 : f32
    %188 = vector.broadcast %cst_61 : f32 to vector<32x1xf32>
    %189 = arith.addf %187, %188 : vector<32x1xf32>
    %190 = math.rsqrt %189 : vector<32x1xf32>
    %191 = vector.broadcast %190 : vector<32x1xf32> to vector<32x128xf32>
    %192 = arith.mulf %176, %191 : vector<32x128xf32>
    %193 = vector.extract_strided_slice %146 {offsets = [0, 256], sizes = [32, 128], strides = [1, 1]} : vector<32x512xf32> to vector<32x128xf32>
    %cst_62 = arith.constant dense<0.000000e+00> : vector<32xf32>
    %194 = vector.multi_reduction <add>, %193, %cst_62 [1] : vector<32x128xf32> to vector<32xf32>
    %195 = vector.shape_cast %194 : vector<32xf32> to vector<32x1xf32>
    %cst_63 = arith.constant 0.0588235296 : f32
    %196 = vector.broadcast %cst_63 : f32 to vector<32x1xf32>
    %197 = arith.mulf %195, %196 : vector<32x1xf32>
    %198 = vector.broadcast %197 : vector<32x1xf32> to vector<32x128xf32>
    %199 = arith.subf %193, %198 : vector<32x128xf32>
    %200 = arith.mulf %199, %199 : vector<32x128xf32>
    %cst_64 = arith.constant dense<0.000000e+00> : vector<32xf32>
    %201 = vector.multi_reduction <add>, %200, %cst_64 [1] : vector<32x128xf32> to vector<32xf32>
    %202 = vector.shape_cast %201 : vector<32xf32> to vector<32x1xf32>
    %cst_65 = arith.constant 1.110000e+02 : f32
    %203 = vector.broadcast %cst_65 : f32 to vector<32x1xf32>
    %204 = arith.mulf %203, %197 : vector<32x1xf32>
    %205 = arith.mulf %204, %197 : vector<32x1xf32>
    %206 = arith.subf %202, %205 : vector<32x1xf32>
    %cst_66 = arith.constant 0.0588235296 : f32
    %207 = vector.broadcast %cst_66 : f32 to vector<32x1xf32>
    %208 = arith.mulf %206, %207 : vector<32x1xf32>
    %cst_67 = arith.constant 0.000000e+00 : f32
    %209 = vector.broadcast %cst_67 : f32 to vector<32x1xf32>
    %210 = arith.maximumf %208, %209 : vector<32x1xf32>
    %cst_68 = arith.constant 9.99999974E-6 : f32
    %211 = vector.broadcast %cst_68 : f32 to vector<32x1xf32>
    %212 = arith.addf %210, %211 : vector<32x1xf32>
    %213 = math.rsqrt %212 : vector<32x1xf32>
    %214 = vector.broadcast %213 : vector<32x1xf32> to vector<32x128xf32>
    %215 = arith.mulf %199, %214 : vector<32x128xf32>
    %216 = vector.extract_strided_slice %146 {offsets = [0, 384], sizes = [32, 128], strides = [1, 1]} : vector<32x512xf32> to vector<32x128xf32>
    %cst_69 = arith.constant dense<0.000000e+00> : vector<32xf32>
    %217 = vector.multi_reduction <add>, %216, %cst_69 [1] : vector<32x128xf32> to vector<32xf32>
    %218 = vector.shape_cast %217 : vector<32xf32> to vector<32x1xf32>
    %cst_70 = arith.constant 0.0588235296 : f32
    %219 = vector.broadcast %cst_70 : f32 to vector<32x1xf32>
    %220 = arith.mulf %218, %219 : vector<32x1xf32>
    %221 = vector.broadcast %220 : vector<32x1xf32> to vector<32x128xf32>
    %222 = arith.subf %216, %221 : vector<32x128xf32>
    %223 = arith.mulf %222, %222 : vector<32x128xf32>
    %cst_71 = arith.constant dense<0.000000e+00> : vector<32xf32>
    %224 = vector.multi_reduction <add>, %223, %cst_71 [1] : vector<32x128xf32> to vector<32xf32>
    %225 = vector.shape_cast %224 : vector<32xf32> to vector<32x1xf32>
    %cst_72 = arith.constant 1.110000e+02 : f32
    %226 = vector.broadcast %cst_72 : f32 to vector<32x1xf32>
    %227 = arith.mulf %226, %220 : vector<32x1xf32>
    %228 = arith.mulf %227, %220 : vector<32x1xf32>
    %229 = arith.subf %225, %228 : vector<32x1xf32>
    %cst_73 = arith.constant 0.0588235296 : f32
    %230 = vector.broadcast %cst_73 : f32 to vector<32x1xf32>
    %231 = arith.mulf %229, %230 : vector<32x1xf32>
    %cst_74 = arith.constant 0.000000e+00 : f32
    %232 = vector.broadcast %cst_74 : f32 to vector<32x1xf32>
    %233 = arith.maximumf %231, %232 : vector<32x1xf32>
    %cst_75 = arith.constant 9.99999974E-6 : f32
    %234 = vector.broadcast %cst_75 : f32 to vector<32x1xf32>
    %235 = arith.addf %233, %234 : vector<32x1xf32>
    %236 = math.rsqrt %235 : vector<32x1xf32>
    %237 = vector.broadcast %236 : vector<32x1xf32> to vector<32x128xf32>
    %238 = arith.mulf %222, %237 : vector<32x128xf32>
    %239 = tpu.concatenate %169, %192, %215, %238 in 1 : vector<32x128xf32>, vector<32x128xf32>, vector<32x128xf32>, vector<32x128xf32> -> vector<32x512xf32>
    %c1 = arith.constant 1 : index
    %c0_76 = arith.constant 0 : index
    %c0_77 = arith.constant 0 : index
    %240 = vector.load %arg3[%c1, %c0_76, %c0_77] : memref<3x2x512xf32, #tpu.memory_space<vmem>>, vector<1x2x512xf32>
    %241 = vector.shape_cast %240 : vector<1x2x512xf32> to vector<2x512xf32>
    %242 = vector.extract_strided_slice %241 {offsets = [0, 0], sizes = [1, 512], strides = [1, 1]} : vector<2x512xf32> to vector<1x512xf32>
    %243 = vector.broadcast %242 : vector<1x512xf32> to vector<32x512xf32>
    %244 = arith.mulf %239, %243 : vector<32x512xf32>
    %245 = vector.extract_strided_slice %241 {offsets = [1, 0], sizes = [1, 512], strides = [1, 1]} : vector<2x512xf32> to vector<1x512xf32>
    %246 = vector.broadcast %245 : vector<1x512xf32> to vector<32x512xf32>
    %247 = arith.addf %244, %246 : vector<32x512xf32>
    %cst_78 = arith.constant 0.000000e+00 : f32
    %248 = vector.broadcast %cst_78 : f32 to vector<32x512xf32>
    %249 = arith.cmpf oge, %247, %248 : vector<32x512xf32>
    %cst_79 = arith.constant 2.000000e-01 : f32
    %250 = vector.broadcast %cst_79 : f32 to vector<32x512xf32>
    %251 = arith.mulf %250, %247 : vector<32x512xf32>
    %252 = arith.select %249, %247, %251 : vector<32x512xi1>, vector<32x512xf32>
    %c1_i32_80 = arith.constant 1 : i32
    %253 = tpu.dynamic_rotate %252 by %c1_i32_80 dim 1 : vector<32x512xf32>, i32 -> vector<32x512xf32>
    %c511_i32_81 = arith.constant 511 : i32
    %254 = tpu.dynamic_rotate %252 by %c511_i32_81 dim 1 : vector<32x512xf32>, i32 -> vector<32x512xf32>
    %255 = tpu.concatenate %253, %252, %254 in 0 : vector<32x512xf32>, vector<32x512xf32>, vector<32x512xf32> -> vector<96x512xf32>
    %c1_82 = arith.constant 1 : index
    %c0_83 = arith.constant 0 : index
    %c0_84 = arith.constant 0 : index
    %256 = vector.load %arg4[%c1_82, %c0_83, %c0_84] : memref<3x32x96xf32, #tpu.memory_space<vmem>>, vector<1x32x96xf32>
    %257 = vector.shape_cast %256 : vector<1x32x96xf32> to vector<32x96xf32>
    %cst_85 = arith.constant dense<0.000000e+00> : vector<32x512xf32>
    %258 = tpu.matmul %257, %255, %cst_85 {dimension_numbers = #tpu.dot_dimension_numbers<[1], [0], [0], [1], [0, 0, 1, 1], [], []>} : vector<32x96xf32>, vector<96x512xf32>, vector<32x512xf32> -> vector<32x512xf32>
    %cst_86 = arith.constant 0.000000e+00 : f32
    %259 = vector.shape_cast %18 : vector<1x512xi1> to vector<1x512xi1>
    %260 = vector.broadcast %259 : vector<1x512xi1> to vector<32x512xi1>
    %261 = vector.broadcast %cst_86 : f32 to vector<32x512xf32>
    %262 = arith.select %260, %258, %261 : vector<32x512xi1>, vector<32x512xf32>
    %263 = vector.extract_strided_slice %262 {offsets = [0, 0], sizes = [32, 128], strides = [1, 1]} : vector<32x512xf32> to vector<32x128xf32>
    %cst_87 = arith.constant dense<0.000000e+00> : vector<32xf32>
    %264 = vector.multi_reduction <add>, %263, %cst_87 [1] : vector<32x128xf32> to vector<32xf32>
    %265 = vector.shape_cast %264 : vector<32xf32> to vector<32x1xf32>
    %cst_88 = arith.constant 0.0588235296 : f32
    %266 = vector.broadcast %cst_88 : f32 to vector<32x1xf32>
    %267 = arith.mulf %265, %266 : vector<32x1xf32>
    %268 = vector.broadcast %267 : vector<32x1xf32> to vector<32x128xf32>
    %269 = arith.subf %263, %268 : vector<32x128xf32>
    %270 = arith.mulf %269, %269 : vector<32x128xf32>
    %cst_89 = arith.constant dense<0.000000e+00> : vector<32xf32>
    %271 = vector.multi_reduction <add>, %270, %cst_89 [1] : vector<32x128xf32> to vector<32xf32>
    %272 = vector.shape_cast %271 : vector<32xf32> to vector<32x1xf32>
    %cst_90 = arith.constant 1.110000e+02 : f32
    %273 = vector.broadcast %cst_90 : f32 to vector<32x1xf32>
    %274 = arith.mulf %273, %267 : vector<32x1xf32>
    %275 = arith.mulf %274, %267 : vector<32x1xf32>
    %276 = arith.subf %272, %275 : vector<32x1xf32>
    %cst_91 = arith.constant 0.0588235296 : f32
    %277 = vector.broadcast %cst_91 : f32 to vector<32x1xf32>
    %278 = arith.mulf %276, %277 : vector<32x1xf32>
    %cst_92 = arith.constant 0.000000e+00 : f32
    %279 = vector.broadcast %cst_92 : f32 to vector<32x1xf32>
    %280 = arith.maximumf %278, %279 : vector<32x1xf32>
    %cst_93 = arith.constant 9.99999974E-6 : f32
    %281 = vector.broadcast %cst_93 : f32 to vector<32x1xf32>
    %282 = arith.addf %280, %281 : vector<32x1xf32>
    %283 = math.rsqrt %282 : vector<32x1xf32>
    %284 = vector.broadcast %283 : vector<32x1xf32> to vector<32x128xf32>
    %285 = arith.mulf %269, %284 : vector<32x128xf32>
    %286 = vector.extract_strided_slice %262 {offsets = [0, 128], sizes = [32, 128], strides = [1, 1]} : vector<32x512xf32> to vector<32x128xf32>
    %cst_94 = arith.constant dense<0.000000e+00> : vector<32xf32>
    %287 = vector.multi_reduction <add>, %286, %cst_94 [1] : vector<32x128xf32> to vector<32xf32>
    %288 = vector.shape_cast %287 : vector<32xf32> to vector<32x1xf32>
    %cst_95 = arith.constant 0.0588235296 : f32
    %289 = vector.broadcast %cst_95 : f32 to vector<32x1xf32>
    %290 = arith.mulf %288, %289 : vector<32x1xf32>
    %291 = vector.broadcast %290 : vector<32x1xf32> to vector<32x128xf32>
    %292 = arith.subf %286, %291 : vector<32x128xf32>
    %293 = arith.mulf %292, %292 : vector<32x128xf32>
    %cst_96 = arith.constant dense<0.000000e+00> : vector<32xf32>
    %294 = vector.multi_reduction <add>, %293, %cst_96 [1] : vector<32x128xf32> to vector<32xf32>
    %295 = vector.shape_cast %294 : vector<32xf32> to vector<32x1xf32>
    %cst_97 = arith.constant 1.110000e+02 : f32
    %296 = vector.broadcast %cst_97 : f32 to vector<32x1xf32>
    %297 = arith.mulf %296, %290 : vector<32x1xf32>
    %298 = arith.mulf %297, %290 : vector<32x1xf32>
    %299 = arith.subf %295, %298 : vector<32x1xf32>
    %cst_98 = arith.constant 0.0588235296 : f32
    %300 = vector.broadcast %cst_98 : f32 to vector<32x1xf32>
    %301 = arith.mulf %299, %300 : vector<32x1xf32>
    %cst_99 = arith.constant 0.000000e+00 : f32
    %302 = vector.broadcast %cst_99 : f32 to vector<32x1xf32>
    %303 = arith.maximumf %301, %302 : vector<32x1xf32>
    %cst_100 = arith.constant 9.99999974E-6 : f32
    %304 = vector.broadcast %cst_100 : f32 to vector<32x1xf32>
    %305 = arith.addf %303, %304 : vector<32x1xf32>
    %306 = math.rsqrt %305 : vector<32x1xf32>
    %307 = vector.broadcast %306 : vector<32x1xf32> to vector<32x128xf32>
    %308 = arith.mulf %292, %307 : vector<32x128xf32>
    %309 = vector.extract_strided_slice %262 {offsets = [0, 256], sizes = [32, 128], strides = [1, 1]} : vector<32x512xf32> to vector<32x128xf32>
    %cst_101 = arith.constant dense<0.000000e+00> : vector<32xf32>
    %310 = vector.multi_reduction <add>, %309, %cst_101 [1] : vector<32x128xf32> to vector<32xf32>
    %311 = vector.shape_cast %310 : vector<32xf32> to vector<32x1xf32>
    %cst_102 = arith.constant 0.0588235296 : f32
    %312 = vector.broadcast %cst_102 : f32 to vector<32x1xf32>
    %313 = arith.mulf %311, %312 : vector<32x1xf32>
    %314 = vector.broadcast %313 : vector<32x1xf32> to vector<32x128xf32>
    %315 = arith.subf %309, %314 : vector<32x128xf32>
    %316 = arith.mulf %315, %315 : vector<32x128xf32>
    %cst_103 = arith.constant dense<0.000000e+00> : vector<32xf32>
    %317 = vector.multi_reduction <add>, %316, %cst_103 [1] : vector<32x128xf32> to vector<32xf32>
    %318 = vector.shape_cast %317 : vector<32xf32> to vector<32x1xf32>
    %cst_104 = arith.constant 1.110000e+02 : f32
    %319 = vector.broadcast %cst_104 : f32 to vector<32x1xf32>
    %320 = arith.mulf %319, %313 : vector<32x1xf32>
    %321 = arith.mulf %320, %313 : vector<32x1xf32>
    %322 = arith.subf %318, %321 : vector<32x1xf32>
    %cst_105 = arith.constant 0.0588235296 : f32
    %323 = vector.broadcast %cst_105 : f32 to vector<32x1xf32>
    %324 = arith.mulf %322, %323 : vector<32x1xf32>
    %cst_106 = arith.constant 0.000000e+00 : f32
    %325 = vector.broadcast %cst_106 : f32 to vector<32x1xf32>
    %326 = arith.maximumf %324, %325 : vector<32x1xf32>
    %cst_107 = arith.constant 9.99999974E-6 : f32
    %327 = vector.broadcast %cst_107 : f32 to vector<32x1xf32>
    %328 = arith.addf %326, %327 : vector<32x1xf32>
    %329 = math.rsqrt %328 : vector<32x1xf32>
    %330 = vector.broadcast %329 : vector<32x1xf32> to vector<32x128xf32>
    %331 = arith.mulf %315, %330 : vector<32x128xf32>
    %332 = vector.extract_strided_slice %262 {offsets = [0, 384], sizes = [32, 128], strides = [1, 1]} : vector<32x512xf32> to vector<32x128xf32>
    %cst_108 = arith.constant dense<0.000000e+00> : vector<32xf32>
    %333 = vector.multi_reduction <add>, %332, %cst_108 [1] : vector<32x128xf32> to vector<32xf32>
    %334 = vector.shape_cast %333 : vector<32xf32> to vector<32x1xf32>
    %cst_109 = arith.constant 0.0588235296 : f32
    %335 = vector.broadcast %cst_109 : f32 to vector<32x1xf32>
    %336 = arith.mulf %334, %335 : vector<32x1xf32>
    %337 = vector.broadcast %336 : vector<32x1xf32> to vector<32x128xf32>
    %338 = arith.subf %332, %337 : vector<32x128xf32>
    %339 = arith.mulf %338, %338 : vector<32x128xf32>
    %cst_110 = arith.constant dense<0.000000e+00> : vector<32xf32>
    %340 = vector.multi_reduction <add>, %339, %cst_110 [1] : vector<32x128xf32> to vector<32xf32>
    %341 = vector.shape_cast %340 : vector<32xf32> to vector<32x1xf32>
    %cst_111 = arith.constant 1.110000e+02 : f32
    %342 = vector.broadcast %cst_111 : f32 to vector<32x1xf32>
    %343 = arith.mulf %342, %336 : vector<32x1xf32>
    %344 = arith.mulf %343, %336 : vector<32x1xf32>
    %345 = arith.subf %341, %344 : vector<32x1xf32>
    %cst_112 = arith.constant 0.0588235296 : f32
    %346 = vector.broadcast %cst_112 : f32 to vector<32x1xf32>
    %347 = arith.mulf %345, %346 : vector<32x1xf32>
    %cst_113 = arith.constant 0.000000e+00 : f32
    %348 = vector.broadcast %cst_113 : f32 to vector<32x1xf32>
    %349 = arith.maximumf %347, %348 : vector<32x1xf32>
    %cst_114 = arith.constant 9.99999974E-6 : f32
    %350 = vector.broadcast %cst_114 : f32 to vector<32x1xf32>
    %351 = arith.addf %349, %350 : vector<32x1xf32>
    %352 = math.rsqrt %351 : vector<32x1xf32>
    %353 = vector.broadcast %352 : vector<32x1xf32> to vector<32x128xf32>
    %354 = arith.mulf %338, %353 : vector<32x128xf32>
    %355 = tpu.concatenate %285, %308, %331, %354 in 1 : vector<32x128xf32>, vector<32x128xf32>, vector<32x128xf32>, vector<32x128xf32> -> vector<32x512xf32>
    %c2 = arith.constant 2 : index
    %c0_115 = arith.constant 0 : index
    %c0_116 = arith.constant 0 : index
    %356 = vector.load %arg3[%c2, %c0_115, %c0_116] : memref<3x2x512xf32, #tpu.memory_space<vmem>>, vector<1x2x512xf32>
    %357 = vector.shape_cast %356 : vector<1x2x512xf32> to vector<2x512xf32>
    %358 = vector.extract_strided_slice %357 {offsets = [0, 0], sizes = [1, 512], strides = [1, 1]} : vector<2x512xf32> to vector<1x512xf32>
    %359 = vector.broadcast %358 : vector<1x512xf32> to vector<32x512xf32>
    %360 = arith.mulf %355, %359 : vector<32x512xf32>
    %361 = vector.extract_strided_slice %357 {offsets = [1, 0], sizes = [1, 512], strides = [1, 1]} : vector<2x512xf32> to vector<1x512xf32>
    %362 = vector.broadcast %361 : vector<1x512xf32> to vector<32x512xf32>
    %363 = arith.addf %360, %362 : vector<32x512xf32>
    %cst_117 = arith.constant 0.000000e+00 : f32
    %364 = vector.broadcast %cst_117 : f32 to vector<32x512xf32>
    %365 = arith.cmpf oge, %363, %364 : vector<32x512xf32>
    %cst_118 = arith.constant 2.000000e-01 : f32
    %366 = vector.broadcast %cst_118 : f32 to vector<32x512xf32>
    %367 = arith.mulf %366, %363 : vector<32x512xf32>
    %368 = arith.select %365, %363, %367 : vector<32x512xi1>, vector<32x512xf32>
    %c1_i32_119 = arith.constant 1 : i32
    %369 = tpu.dynamic_rotate %368 by %c1_i32_119 dim 1 : vector<32x512xf32>, i32 -> vector<32x512xf32>
    %c511_i32_120 = arith.constant 511 : i32
    %370 = tpu.dynamic_rotate %368 by %c511_i32_120 dim 1 : vector<32x512xf32>, i32 -> vector<32x512xf32>
    %371 = tpu.concatenate %369, %368, %370 in 0 : vector<32x512xf32>, vector<32x512xf32>, vector<32x512xf32> -> vector<96x512xf32>
    %c2_121 = arith.constant 2 : index
    %c0_122 = arith.constant 0 : index
    %c0_123 = arith.constant 0 : index
    %372 = vector.load %arg4[%c2_121, %c0_122, %c0_123] : memref<3x32x96xf32, #tpu.memory_space<vmem>>, vector<1x32x96xf32>
    %373 = vector.shape_cast %372 : vector<1x32x96xf32> to vector<32x96xf32>
    %cst_124 = arith.constant dense<0.000000e+00> : vector<32x512xf32>
    %374 = tpu.matmul %373, %371, %cst_124 {dimension_numbers = #tpu.dot_dimension_numbers<[1], [0], [0], [1], [0, 0, 1, 1], [], []>} : vector<32x96xf32>, vector<96x512xf32>, vector<32x512xf32> -> vector<32x512xf32>
    %c0_125 = arith.constant 0 : index
    %c0_126 = arith.constant 0 : index
    %c0_127 = arith.constant 0 : index
    %375 = vector.load %arg5[%c0_125, %c0_126, %c0_127] : memref<1x32x512xf32, #tpu.memory_space<vmem>>, vector<1x32x512xf32>
    %376 = vector.shape_cast %375 : vector<1x32x512xf32> to vector<32x512xf32>
    %377 = vector.shape_cast %374 : vector<32x512xf32> to vector<1x32x512xf32>
    tpu.vector_store %arg5[%c0_125, %c0_126, %c0_127], %377 {strides = array<i32>} : memref<1x32x512xf32, #tpu.memory_space<vmem>>, vector<1x32x512xf32>,
    return
  }
  func.func @transform_0(%arg0: i32) -> (i32, i32, i32) {
    %c0_i32 = arith.constant 0 : i32
    %c0_i32_0 = arith.constant 0 : i32
    %c0_i32_1 = arith.constant 0 : i32
    return %arg0, %c0_i32, %c0_i32_0 : i32, i32, i32
  }
  func.func @transform_1(%arg0: i32) -> (i32, i32) {
    %c0_i32 = arith.constant 0 : i32
    %c0_i32_0 = arith.constant 0 : i32
    %c0_i32_1 = arith.constant 0 : i32
    return %c0_i32, %c0_i32_0 : i32, i32
  }
  func.func @transform_2(%arg0: i32) -> (i32, i32, i32) {
    %c0_i32 = arith.constant 0 : i32
    %c0_i32_0 = arith.constant 0 : i32
    %c0_i32_1 = arith.constant 0 : i32
    %c0_i32_2 = arith.constant 0 : i32
    return %c0_i32, %c0_i32_0, %c0_i32_1 : i32, i32, i32
  }
  func.func @transform_3(%arg0: i32) -> (i32, i32, i32) {
    %c0_i32 = arith.constant 0 : i32
    %c0_i32_0 = arith.constant 0 : i32
    %c0_i32_1 = arith.constant 0 : i32
    %c0_i32_2 = arith.constant 0 : i32
    return %c0_i32, %c0_i32_0, %c0_i32_1 : i32, i32, i32
  }
  func.func @transform_4(%arg0: i32) -> (i32, i32, i32) {
    %c0_i32 = arith.constant 0 : i32
    %c0_i32_0 = arith.constant 0 : i32
    %c0_i32_1 = arith.constant 0 : i32
    return %arg0, %c0_i32, %c0_i32_0 : i32, i32, i32
  }
}

</mosaic_0001>

<llo_original>
// kernel: tpu_custom_call.1
$region0: #{tpu_custom_call.1}
  #allocation0 [shape = 'u32[]', space=smem, size = 0x4, offset = 0x4, fixed_abs, tag = 'smem constant byte address 0x4 - core index']
  #allocation1 [shape = 'u32[144,128]{1,0:T(1,128)}', space=vmem, size = 0x12000, scoped, tag = 'internal scratch']
  %s0 = inlined_call_operand.vmem [shape: f32[2,8,512], index: 0, kind: input, shape index: {}]
  %s1 = inlined_call_operand.vmem [shape: f32[64,8], index: 1, kind: input, shape index: {}]
  %s2 = inlined_call_operand.hbm [shape: f32[3,2,512], index: 2, kind: input, shape index: {}]
  %s3 = inlined_call_operand.hbm [shape: f32[3,32,96], index: 3, kind: input, shape index: {}]
  %s4 = inlined_call_operand.hbm [shape: f32[2,32,512], index: 4, kind: output, shape index: {}]
  %s5 = sld [smem:[#allocation0]]
  $region57: #{tpu_custom_call.1} parent=0
    _
  %s7 = ssub.s32 1, %s5
  %s8 = scalar_select 0, %s7, %s5
  $region1: #{tpu_custom_call.1} parent=0
    #allocation2 [shape = 'u8[12288]{0}', space=vmem, size = 0x3000, scoped, tag = 'input window, operand 2, single buffered']
    #allocation3 [shape = 's32[2]{0}', space=sflag, size = 0x8, scoped, tag = 'scoped memory for tpu_custom_call.1']
    #allocation4 [shape = 's32[2]{0}', space=sflag, size = 0x8, scoped, tag = 'scoped memory for tpu_custom_call.1']
    #allocation5 [shape = 'u8[49152]{0}', space=vmem, size = 0xc000, scoped, tag = 'input window, operand 3, single buffered']
    #allocation6 [shape = 's32[1]{0}', space=sflag, size = 0x4, scoped, tag = 'scoped memory for tpu_custom_call.1']
    #allocation7 [shape = 'u8[131072]{0}', space=vmem, size = 0x20000, scoped, tag = 'output window, operand 0']
    %9 = vsyncpa [#allocation3], 0
    %10 = vsyncpa [#allocation6], 0
    %11 = vsyncpa [#allocation4], 0
    %s12 = scalar_lea.sflag [#allocation4], 1
    %13 = vsyncpa %s12, 0
    loop: start=0, step=1, limit=4
    $region2: #{tpu_custom_call.1} parent=1 // loop_pre_header
      _
    $region3: #{tpu_custom_call.1} parent=1 // loop_header
      %s15 = sphi 0, %s19
      %p16 = scmp.ge.s32.totalorder %s15, 4
      %s25 = sphi 0, %s27
      %s28 = sphi 0, %s25
      %s29 = sphi 0, %s28
      %s45 = sphi 0, %s29
      %s49 = sphi 0, %s49
      %s51 = sphi 0, %s49
      %s52 = sphi 0, %s51
      %s66 = sphi 0, %s52
      %s70 = sphi 0, %s70
      %s72 = sphi 0, %s70
      %s73 = sphi 0, %s72
      %s87 = sphi 0, %s73
      %s91 = sphi 0, %s91
      %s93 = sphi 0, %s91
      %s94 = sphi 0, %s93
      %s108 = sphi 0, %s94
      %s114 = sphi 0, %s116
      %s117 = sphi 0, %s114
      %s118 = sphi 0, %s117
      %s134 = sphi 0, %s118
    $region4: #{tpu_custom_call.1} parent=1 // loop_header_branch
      %18 = sbr.rel (%p16) target = $region8
    $region5: #{tpu_custom_call.1} parent=1 // loop_body
      %s20 = ssub.s32 %s15, 1
      %s21 = ssub.s32 %s15, 2
      %s22 = sadd.s32 %s15, 1
      %s23 = ssub.s32 %s15, %s22
      %p24 = scmp.eq.s32.totalorder %s23, 0
      %s26 = sadd.s32 %s25, 1
      %s27 = scalar_select %p24, %s25, %s26
      %p30 = pneg %p24
      %p31 = scmp.eq.s32.totalorder %s15, 1
      %p32 = por %p30, %p31
      %p33 = scmp.ne.s32.totalorder %s25, %s28
      %p34 = scmp.eq.s32.totalorder %s15, 0
      %p35 = por %p33, %p34
      %p36 = scmp.ne.s32.totalorder %s25, %s28
      %p37 = scmp.eq.s32.totalorder %s20, 1
      %p38 = por %p36, %p37
      %p39 = scmp.ne.s32.totalorder %s28, %s29
      %p40 = scmp.eq.s32.totalorder %s20, 0
      %p41 = por %p39, %p40
      %p42 = scmp.ne.s32.totalorder %s28, %s29
      %p43 = scmp.eq.s32.totalorder %s21, 1
      %p44 = por %p42, %p43
      %p46 = scmp.ne.s32.totalorder %s29, %s45
      %p47 = scmp.eq.s32.totalorder %s21, 0
      %p48 = por %p46, %p47
      %s50 = sadd.s32 %s49, 1
      %p53 = scmp.eq.s32.totalorder %s15, 1
      %p54 = scmp.ne.s32.totalorder %s49, %s51
      %p55 = scmp.eq.s32.totalorder %s15, 0
      %p56 = por %p54, %p55
      %p57 = scmp.ne.s32.totalorder %s49, %s51
      %p58 = scmp.eq.s32.totalorder %s20, 1
      %p59 = por %p57, %p58
      %p60 = scmp.ne.s32.totalorder %s51, %s52
      %p61 = scmp.eq.s32.totalorder %s20, 0
      %p62 = por %p60, %p61
      %p63 = scmp.ne.s32.totalorder %s51, %s52
      %p64 = scmp.eq.s32.totalorder %s21, 1
      %p65 = por %p63, %p64
      %p67 = scmp.ne.s32.totalorder %s52, %s66
      %p68 = scmp.eq.s32.totalorder %s21, 0
      %p69 = por %p67, %p68
      %s71 = sadd.s32 %s70, 1
      %p74 = scmp.eq.s32.totalorder %s15, 1
      %p75 = scmp.ne.s32.totalorder %s70, %s72
      %p76 = scmp.eq.s32.totalorder %s15, 0
      %p77 = por %p75, %p76
      %p78 = scmp.ne.s32.totalorder %s70, %s72
      %p79 = scmp.eq.s32.totalorder %s20, 1
      %p80 = por %p78, %p79
      %p81 = scmp.ne.s32.totalorder %s72, %s73
      %p82 = scmp.eq.s32.totalorder %s20, 0
      %p83 = por %p81, %p82
      %p84 = scmp.ne.s32.totalorder %s72, %s73
      %p85 = scmp.eq.s32.totalorder %s21, 1
      %p86 = por %p84, %p85
      %p88 = scmp.ne.s32.totalorder %s73, %s87
      %p89 = scmp.eq.s32.totalorder %s21, 0
      %p90 = por %p88, %p89
      %s92 = sadd.s32 %s91, 1
      %p95 = scmp.eq.s32.totalorder %s15, 1
      %p96 = scmp.ne.s32.totalorder %s91, %s93
      %p97 = scmp.eq.s32.totalorder %s15, 0
      %p98 = por %p96, %p97
      %p99 = scmp.ne.s32.totalorder %s91, %s93
      %p100 = scmp.eq.s32.totalorder %s20, 1
      %p101 = por %p99, %p100
      %p102 = scmp.ne.s32.totalorder %s93, %s94
      %p103 = scmp.eq.s32.totalorder %s20, 0
      %p104 = por %p102, %p103
      %p105 = scmp.ne.s32.totalorder %s93, %s94
      %p106 = scmp.eq.s32.totalorder %s21, 1
      %p107 = por %p105, %p106
      %p109 = scmp.ne.s32.totalorder %s94, %s108
      %p110 = scmp.eq.s32.totalorder %s21, 0
      %p111 = por %p109, %p110
      %s112 = ssub.s32 %s15, %s22
      %p113 = scmp.eq.s32.totalorder %s112, 0
      %s115 = sadd.s32 %s114, 1
      %s116 = scalar_select %p113, %s114, %s115
      %p119 = pneg %p113
      %p120 = scmp.eq.s32.totalorder %s15, 1
      %p121 = por %p119, %p120
      %p122 = scmp.ne.s32.totalorder %s114, %s117
      %p123 = scmp.eq.s32.totalorder %s15, 0
      %p124 = por %p122, %p123
      %p125 = scmp.ne.s32.totalorder %s114, %s117
      %p126 = scmp.eq.s32.totalorder %s20, 1
      %p127 = por %p125, %p126
      %p128 = scmp.ne.s32.totalorder %s117, %s118
      %p129 = scmp.eq.s32.totalorder %s20, 0
      %p130 = por %p128, %p129
      %p131 = scmp.ne.s32.totalorder %s117, %s118
      %p132 = scmp.eq.s32.totalorder %s21, 1
      %p133 = por %p131, %p132
      %p135 = scmp.ne.s32.totalorder %s118, %s134
      %p136 = scmp.eq.s32.totalorder %s21, 0
      %p137 = por %p135, %p136
      %p138 = scmp.le.s32.totalorder 1, %s15
      %p139 = scmp.lt.s32.totalorder %s15, 3
      %p140 = pnand %p138, %p139
      %p141 = pneg %p140
      // Predicated region
      $region9: #{tpu_custom_call.1} parent=5 // pred_check
        _
      $region10: #{tpu_custom_call.1} parent=5 // pred_check_branch
        %143 = sbr.rel (%p140) target = $region12
      $region11: #{tpu_custom_call.1} parent=5 // pred_region
        %s144 = ssub.s32 %s15, 1
        // Predicated region
        $region13: #{tpu_custom_call.1} parent=11 // pred_check
          %p145 = pneg %p62
        $region14: #{tpu_custom_call.1} parent=11 // pred_check_branch
          %147 = sbr.rel (%p145) target = $region16
        $region15: #{tpu_custom_call.1} parent=11 // pred_region
          _
        $region16: #{tpu_custom_call.1} parent=11 // pred_fallthru
          _
        // Predicated region
        $region17: #{tpu_custom_call.1} parent=11 // pred_check
          %p148 = pneg %p83
        $region18: #{tpu_custom_call.1} parent=11 // pred_check_branch
          %150 = sbr.rel (%p148) target = $region20
        $region19: #{tpu_custom_call.1} parent=11 // pred_region
          %s152 = ssub.s32 384, 384
          %153 = vsyncadd [#allocation3], %s152
          %s154 = sshll.u32 [#allocation2], 4
          %s155 = int_to_ptr.vmem [resolvable:$true] %s154
          %160 = dma.hbm_to_vmem [thread:$0]  %s2, 384, %s155, [#allocation3], 128, 128, 8
        $region20: #{tpu_custom_call.1} parent=11 // pred_fallthru
          _
        // Predicated region
        $region21: #{tpu_custom_call.1} parent=11 // pred_check
          %p161 = pneg %p104
        $region22: #{tpu_custom_call.1} parent=11 // pred_check_branch
          %163 = sbr.rel (%p161) target = $region24
        $region23: #{tpu_custom_call.1} parent=11 // pred_region
          %s165 = ssub.s32 1536, 1536
          %166 = vsyncadd [#allocation6], %s165
          %s167 = sshll.u32 [#allocation5], 4
          %s168 = int_to_ptr.vmem [resolvable:$true] %s167
          %173 = dma.hbm_to_vmem [thread:$0]  %s3, 1536, %s168, [#allocation6], 128, 128, 8
        $region24: #{tpu_custom_call.1} parent=11 // pred_fallthru
          _
      $region12: #{tpu_custom_call.1} parent=5 // pred_fallthru
        _
      %p174 = scmp.lt.s32.totalorder %s15, 2
      // Predicated region
      $region25: #{tpu_custom_call.1} parent=5 // pred_check
        %p175 = pneg %p174
      $region26: #{tpu_custom_call.1} parent=5 // pred_check_branch
        %177 = sbr.rel (%p175) target = $region28
      $region27: #{tpu_custom_call.1} parent=5 // pred_region
        // Predicated region
        $region29: #{tpu_custom_call.1} parent=27 // pred_check
          %p178 = pneg %p35
        $region30: #{tpu_custom_call.1} parent=27 // pred_check_branch
          %180 = sbr.rel (%p178) target = $region32
        $region31: #{tpu_custom_call.1} parent=27 // pred_region
          %p181 = scmp.lt.s32.totalorder %s15, 1
          %s182 = scalar_select %p181, %s15, 1
          %s183 = smul.addr %s182, 4
          %s184 = smul.addr %s183, 8
          %s185 = scalar_lea.vmem %s0, %s184
        $region32: #{tpu_custom_call.1} parent=27 // pred_fallthru
          _
      $region28: #{tpu_custom_call.1} parent=5 // pred_fallthru
        _
      %p186 = scmp.le.s32.totalorder 1, %s15
      %p187 = scmp.lt.s32.totalorder %s15, 3
      %p188 = pnand %p186, %p187
      %p189 = pneg %p188
      // Predicated region
      $region33: #{tpu_custom_call.1} parent=5 // pred_check
        _
      $region34: #{tpu_custom_call.1} parent=5 // pred_check_branch
        %191 = sbr.rel (%p188) target = $region36
      $region35: #{tpu_custom_call.1} parent=5 // pred_region
        %s192 = ssub.s32 %s15, 1
        // Predicated region
        $region37: #{tpu_custom_call.1} parent=35 // pred_check
          %p193 = pneg %p83
        $region38: #{tpu_custom_call.1} parent=35 // pred_check_branch
          %195 = sbr.rel (%p193) target = $region40
        $region39: #{tpu_custom_call.1} parent=35 // pred_region
          %196 = dma.done [#allocation3], 384
        $region40: #{tpu_custom_call.1} parent=35 // pred_fallthru
          _
        // Predicated region
        $region41: #{tpu_custom_call.1} parent=35 // pred_check
          %p197 = pneg %p104
        $region42: #{tpu_custom_call.1} parent=35 // pred_check_branch
          %199 = sbr.rel (%p197) target = $region44
        $region43: #{tpu_custom_call.1} parent=35 // pred_region
          %200 = dma.done [#allocation6], 1536
        $region44: #{tpu_custom_call.1} parent=35 // pred_fallthru
          _
        %p201 = scmp.lt.s32.totalorder %s20, 1
        %s202 = scalar_select %p201, %s20, 1
        %s203 = smul.addr %s202, 4
        %s204 = smul.addr %s203, 8
        %s205 = scalar_lea.vmem %s0, %s204
        %p206 = pneg %p41
        %p207 = pneg %p38
        %p208 = pneg %p62
        %p209 = pneg %p59
        %p210 = pneg %p83
        %p211 = pneg %p80
        %p212 = pneg %p104
        %p213 = pneg %p101
        %p214 = pneg %p130
        %p215 = pneg %p127
        %s216 = sand.u32 %s117, 1
        %s217 = scalar_lea.sflag [#allocation4], %s216
        %s218 = sand.u32 %s117, 1
        %s219 = smul.addr %s218, 128
        %s220 = scalar_lea.vmem [#allocation7], %s219
        %p221 = scmp.lt.s32.totalorder %s20, 1
        %s222 = scalar_select %p221, %s20, 1
        %s223 = smul.addr %s222, 4
        %s224 = smul.addr %s223, 8
        %s225 = scalar_lea.vmem %s0, %s224
        %v226 = vlaneseq
        %v227 = vand.u32 %v226, 127
        %v228 = vadd.s32 %v227, 128
        %v229 = vadd.s32 %v227, 256
        %v230 = vadd.s32 %v227, 384
        %vm231 = vcmp.lt.s32.totalorder %v227, 0
        %v232 = vsub.s32 0, %v227
        %v233 = vsel %vm231, %v232, %v227
        %v234 = vshrl.u32 %v233, 7
        %v235 = vand.u32 %v233, 127
        %v236 = vsub.s32 0, %v235
        %v237 = vsel %vm231, %v236, %v235
        %vm238 = vcmp.lt.s32.totalorder %v228, 0
        %v239 = vsub.s32 0, %v228
        %v240 = vsel %vm238, %v239, %v228
        %v241 = vshrl.u32 %v240, 7
        %v242 = vand.u32 %v240, 127
        %v243 = vsub.s32 0, %v242
        %v244 = vsel %vm238, %v243, %v242
        %vm245 = vcmp.lt.s32.totalorder %v229, 0
        %v246 = vsub.s32 0, %v229
        %v247 = vsel %vm245, %v246, %v229
        %v248 = vshrl.u32 %v247, 7
        %v249 = vand.u32 %v247, 127
        %v250 = vsub.s32 0, %v249
        %v251 = vsel %vm245, %v250, %v249
        %vm252 = vcmp.lt.s32.totalorder %v230, 0
        %v253 = vsub.s32 0, %v230
        %v254 = vsel %vm252, %v253, %v230
        %v255 = vshrl.u32 %v254, 7
        %v256 = vand.u32 %v254, 127
        %v257 = vsub.s32 0, %v256
        %v258 = vsel %vm252, %v257, %v256
        %vm259 = vcmp.ne.s32.totalorder %v237, 0
        %vm260 = vcmp.ne.s32.totalorder %v244, 0
        %vm261 = vcmp.ne.s32.totalorder %v251, 0
        %vm262 = vcmp.ne.s32.totalorder %v258, 0
        %vm263 = vcmp.lt.s32.totalorder %v237, 0
        %vm264 = vcmp.lt.s32.totalorder %v244, 0
        %vm265 = vcmp.lt.s32.totalorder %v251, 0
        %vm266 = vcmp.lt.s32.totalorder %v258, 0
        %vm267 = vmand %vm263, %vm259
        %vm268 = vmand %vm264, %vm260
        %vm269 = vmand %vm265, %vm261
        %vm270 = vmand %vm266, %vm262
        %v271 = vadd.s32 %v237, 128
        %v272 = vadd.s32 %v244, 128
        %v273 = vadd.s32 %v251, 128
        %v274 = vadd.s32 %v258, 128
        %v275 = vsel %vm267, %v271, %v237
        %v276 = vsel %vm268, %v272, %v244
        %v277 = vsel %vm269, %v273, %v251
        %v278 = vsel %vm270, %v274, %v258
        %vm279 = vcmp.lt.s32.totalorder %v275, 17
        %vm280 = vcmp.lt.s32.totalorder %v276, 17
        %vm281 = vcmp.lt.s32.totalorder %v277, 17
        %vm282 = vcmp.lt.s32.totalorder %v278, 17
        %v283 = vld [vmem:[%s225] sm:$0xff]
        %v284 = vld [vmem:[%s225 + $0x8] sm:$0xff]
        %v285 = vld [vmem:[%s225 + $0x10] sm:$0xff]
        %v286 = vld [vmem:[%s225 + $0x18] sm:$0xff]
        %v287 = vld [vmem:[%s1] sm:$0xff]
        %v288 = vld [vmem:[%s1 + $0x8] sm:$0xff]
        %v289 = vld [vmem:[%s1 + $0x10] sm:$0xff]
        %v290 = vld [vmem:[%s1 + $0x18] sm:$0xff]
        %v291 = vld [vmem:[%s1 + $0x20] sm:$0xff]
        %v292 = vld [vmem:[%s1 + $0x28] sm:$0xff]
        %v293 = vld [vmem:[%s1 + $0x30] sm:$0xff]
        %v294 = vld [vmem:[%s1 + $0x38] sm:$0xff]
        %vm295 = vcmask 64512
        %v297 = vsel %vm295, %v287, 0
        %v300 = vsel %vm295, %v288, 0
        %v303 = vsel %vm295, %v289, 0
        %v306 = vsel %vm295, %v290, 0
        %v309 = vsel %vm295, %v291, 0
        %v312 = vsel %vm295, %v292, 0
        %v315 = vsel %vm295, %v293, 0
        %v318 = vsel %vm295, %v294, 0
        %320 = vmatprep.subr.mxu0 %v284
        %321 = vmatpush1.msra.mxu0 %v283
        %322 = vmatprep.subr.mxu0 0.0
        %323 = vmatpush1.msra.mxu0 0.0
        %324 = vmatprep.subr.mxu0 0.0
        %325 = vmatpush1.msra.mxu0 0.0
        %326 = vmatprep.subr.mxu0 0.0
        %327 = vmatpush1.msra.mxu0 0.0
        %328 = vmatprep.subr.mxu0 0.0
        %329 = vmatpush1.msra.mxu0 0.0
        %330 = vmatprep.subr.mxu0 0.0
        %331 = vmatpush1.msra.mxu0 0.0
        %332 = vmatprep.subr.mxu0 0.0
        %333 = vmatpush1.msra.mxu0 0.0
        %334 = vmatprep.subr.mxu0 0.0
        %335 = vmatpush1.msra.mxu0 0.0
        %336 = vmatprep.subr.mxu0 0.0
        %337 = vmatpush1.msra.mxu0 0.0
        %338 = vmatprep.subr.mxu0 0.0
        %339 = vmatpush1.msra.mxu0 0.0
        %340 = vmatprep.subr.mxu0 0.0
        %341 = vmatpush1.msra.mxu0 0.0
        %342 = vmatprep.subr.mxu0 0.0
        %343 = vmatpush1.msra.mxu0 0.0
        %344 = vmatprep.subr.mxu0 0.0
        %345 = vmatpush1.msra.mxu0 0.0
        %346 = vmatprep.subr.mxu0 0.0
        %347 = vmatpush1.msra.mxu0 0.0
        %348 = vmatprep.subr.mxu0 0.0
        %349 = vmatpush1.msra.mxu0 0.0
        %350 = vmatprep.subr.mxu0 0.0
        %351 = vmatpush1.msra.mxu0 0.0
        %352 = vmatprep.subr.mxu0 0.0
        %353 = vmatpush1.msra.mxu0 0.0
        %354 = vmatprep.subr.mxu0 0.0
        %355 = vmatpush1.msra.mxu0 0.0
        %356 = vmatprep.subr.mxu0 0.0
        %357 = vmatpush1.msra.mxu0 0.0
        %358 = vmatprep.subr.mxu0 0.0
        %359 = vmatpush1.msra.mxu0 0.0
        %360 = vmatprep.subr.mxu0 0.0
        %361 = vmatpush1.msra.mxu0 0.0
        %362 = vmatprep.subr.mxu0 0.0
        %363 = vmatpush1.msra.mxu0 0.0
        %364 = vmatprep.subr.mxu0 0.0
        %365 = vmatpush1.msra.mxu0 0.0
        %366 = vmatprep.subr.mxu0 0.0
        %367 = vmatpush1.msra.mxu0 0.0
        %368 = vmatprep.subr.mxu0 0.0
        %369 = vmatpush1.msra.mxu0 0.0
        %370 = vmatprep.subr.mxu0 0.0
        %371 = vmatpush1.msra.mxu0 0.0
        %372 = vmatprep.subr.mxu0 0.0
        %373 = vmatpush1.msra.mxu0 0.0
        %374 = vmatprep.subr.mxu0 0.0
        %375 = vmatpush1.msra.mxu0 0.0
        %376 = vmatprep.subr.mxu0 0.0
        %377 = vmatpush1.msra.mxu0 0.0
        %378 = vmatprep.subr.mxu0 0.0
        %379 = vmatpush1.msra.mxu0 0.0
        %380 = vmatprep.subr.mxu0 0.0
        %381 = vmatpush1.msra.mxu0 0.0
        %382 = vmatprep.subr.mxu0 0.0
        %383 = vmatpush1.msra.mxu0 0.0
        %384 = vmatprep.mubr.f32.mxu0 0.0
        %385 = vmatmul.mubr.f32.gmra.mrb[0].mxu0 %v297
        %v386 = vpop.f32.mrb[0].mxu0
        %v387 = vadd.f32 0.0, %v386
        %v388 = vpop.f32.mrb[0].mxu0
        %v389 = vadd.f32 0.0, %v388
        %390 = vmatprep.mubr.f32.mxu0 0.0
        %391 = vmatmul.mubr.f32.gmra.mrb[0].mxu0 %v300
        %v392 = vpop.f32.mrb[0].mxu0
        %v393 = vadd.f32 0.0, %v392
        %v394 = vpop.f32.mrb[0].mxu0
        %v395 = vadd.f32 0.0, %v394
        %396 = vmatprep.mubr.f32.mxu0 0.0
        %397 = vmatmul.mubr.f32.gmra.mrb[0].mxu0 %v303
        %v398 = vpop.f32.mrb[0].mxu0
        %v399 = vadd.f32 0.0, %v398
        %v400 = vpop.f32.mrb[0].mxu0
        %v401 = vadd.f32 0.0, %v400
        %402 = vmatprep.mubr.f32.mxu0 0.0
        %403 = vmatmul.mubr.f32.gmra.mrb[0].mxu0 %v306
        %v404 = vpop.f32.mrb[0].mxu0
        %v405 = vadd.f32 0.0, %v404
        %v406 = vpop.f32.mrb[0].mxu0
        %v407 = vadd.f32 0.0, %v406
        %408 = vmatprep.mubr.f32.mxu0 0.0
        %409 = vmatmul.mubr.f32.gmra.mrb[0].mxu0 %v309
        %v410 = vpop.f32.mrb[0].mxu0
        %v411 = vadd.f32 0.0, %v410
        %v412 = vpop.f32.mrb[0].mxu0
        %v413 = vadd.f32 0.0, %v412
        %414 = vmatprep.mubr.f32.mxu0 0.0
        %415 = vmatmul.mubr.f32.gmra.mrb[0].mxu0 %v312
        %v416 = vpop.f32.mrb[0].mxu0
        %v417 = vadd.f32 0.0, %v416
        %v418 = vpop.f32.mrb[0].mxu0
        %v419 = vadd.f32 0.0, %v418
        %420 = vmatprep.mubr.f32.mxu0 0.0
        %421 = vmatmul.mubr.f32.gmra.mrb[0].mxu0 %v315
        %v422 = vpop.f32.mrb[0].mxu0
        %v423 = vadd.f32 0.0, %v422
        %v424 = vpop.f32.mrb[0].mxu0
        %v425 = vadd.f32 0.0, %v424
        %426 = vmatprep.mubr.f32.mxu0 0.0
        %427 = vmatmul.mubr.f32.gmra.mrb[0].mxu0 %v318
        %v428 = vpop.f32.mrb[0].mxu0
        %v429 = vadd.f32 0.0, %v428
        %v430 = vpop.f32.mrb[0].mxu0
        %v431 = vadd.f32 0.0, %v430
        %432 = vdwg.mxu0
        %433 = vmatprep.subr.mxu0 %v286
        %434 = vmatpush1.msra.mxu0 %v285
        %435 = vmatprep.subr.mxu0 0.0
        %436 = vmatpush1.msra.mxu0 0.0
        %437 = vmatprep.subr.mxu0 0.0
        %438 = vmatpush1.msra.mxu0 0.0
        %439 = vmatprep.subr.mxu0 0.0
        %440 = vmatpush1.msra.mxu0 0.0
        %441 = vmatprep.subr.mxu0 0.0
        %442 = vmatpush1.msra.mxu0 0.0
        %443 = vmatprep.subr.mxu0 0.0
        %444 = vmatpush1.msra.mxu0 0.0
        %445 = vmatprep.subr.mxu0 0.0
        %446 = vmatpush1.msra.mxu0 0.0
        %447 = vmatprep.subr.mxu0 0.0
        %448 = vmatpush1.msra.mxu0 0.0
        %449 = vmatprep.subr.mxu0 0.0
        %450 = vmatpush1.msra.mxu0 0.0
        %451 = vmatprep.subr.mxu0 0.0
        %452 = vmatpush1.msra.mxu0 0.0
        %453 = vmatprep.subr.mxu0 0.0
        %454 = vmatpush1.msra.mxu0 0.0
        %455 = vmatprep.subr.mxu0 0.0
        %456 = vmatpush1.msra.mxu0 0.0
        %457 = vmatprep.subr.mxu0 0.0
        %458 = vmatpush1.msra.mxu0 0.0
        %459 = vmatprep.subr.mxu0 0.0
        %460 = vmatpush1.msra.mxu0 0.0
        %461 = vmatprep.subr.mxu0 0.0
        %462 = vmatpush1.msra.mxu0 0.0
        %463 = vmatprep.subr.mxu0 0.0
        %464 = vmatpush1.msra.mxu0 0.0
        %465 = vmatprep.subr.mxu0 0.0
        %466 = vmatpush1.msra.mxu0 0.0
        %467 = vmatprep.subr.mxu0 0.0
        %468 = vmatpush1.msra.mxu0 0.0
        %469 = vmatprep.subr.mxu0 0.0
        %470 = vmatpush1.msra.mxu0 0.0
        %471 = vmatprep.subr.mxu0 0.0
        %472 = vmatpush1.msra.mxu0 0.0
        %473 = vmatprep.subr.mxu0 0.0
        %474 = vmatpush1.msra.mxu0 0.0
        %475 = vmatprep.subr.mxu0 0.0
        %476 = vmatpush1.msra.mxu0 0.0
        %477 = vmatprep.subr.mxu0 0.0
        %478 = vmatpush1.msra.mxu0 0.0
        %479 = vmatprep.subr.mxu0 0.0
        %480 = vmatpush1.msra.mxu0 0.0
        %481 = vmatprep.subr.mxu0 0.0
        %482 = vmatpush1.msra.mxu0 0.0
        %483 = vmatprep.subr.mxu0 0.0
        %484 = vmatpush1.msra.mxu0 0.0
        %485 = vmatprep.subr.mxu0 0.0
        %486 = vmatpush1.msra.mxu0 0.0
        %487 = vmatprep.subr.mxu0 0.0
        %488 = vmatpush1.msra.mxu0 0.0
        %489 = vmatprep.subr.mxu0 0.0
        %490 = vmatpush1.msra.mxu0 0.0
        %491 = vmatprep.subr.mxu0 0.0
        %492 = vmatpush1.msra.mxu0 0.0
        %493 = vmatprep.subr.mxu0 0.0
        %494 = vmatpush1.msra.mxu0 0.0
        %495 = vmatprep.subr.mxu0 0.0
        %496 = vmatpush1.msra.mxu0 0.0
        %497 = vmatprep.mubr.f32.mxu0 0.0
        %498 = vmatmul.mubr.f32.gmra.mrb[0].mxu0 %v297
        %v499 = vpop.f32.mrb[0].mxu0
        %v500 = vadd.f32 0.0, %v499
        %v501 = vpop.f32.mrb[0].mxu0
        %v502 = vadd.f32 0.0, %v501
        %503 = vmatprep.mubr.f32.mxu0 0.0
        %504 = vmatmul.mubr.f32.gmra.mrb[0].mxu0 %v300
        %v505 = vpop.f32.mrb[0].mxu0
        %v506 = vadd.f32 0.0, %v505
        %v507 = vpop.f32.mrb[0].mxu0
        %v508 = vadd.f32 0.0, %v507
        %509 = vmatprep.mubr.f32.mxu0 0.0
        %510 = vmatmul.mubr.f32.gmra.mrb[0].mxu0 %v303
        %v511 = vpop.f32.mrb[0].mxu0
        %v512 = vadd.f32 0.0, %v511
        %v513 = vpop.f32.mrb[0].mxu0
        %v514 = vadd.f32 0.0, %v513
        %515 = vmatprep.mubr.f32.mxu0 0.0
        %516 = vmatmul.mubr.f32.gmra.mrb[0].mxu0 %v306
        %v517 = vpop.f32.mrb[0].mxu0
        %v518 = vadd.f32 0.0, %v517
        %v519 = vpop.f32.mrb[0].mxu0
        %v520 = vadd.f32 0.0, %v519
        %521 = vmatprep.mubr.f32.mxu0 0.0
        %522 = vmatmul.mubr.f32.gmra.mrb[0].mxu0 %v309
        %v523 = vpop.f32.mrb[0].mxu0
        %v524 = vadd.f32 0.0, %v523
        %v525 = vpop.f32.mrb[0].mxu0
        %v526 = vadd.f32 0.0, %v525
        %527 = vmatprep.mubr.f32.mxu0 0.0
        %528 = vmatmul.mubr.f32.gmra.mrb[0].mxu0 %v312
        %v529 = vpop.f32.mrb[0].mxu0
        %v530 = vadd.f32 0.0, %v529
        %v531 = vpop.f32.mrb[0].mxu0
        %v532 = vadd.f32 0.0, %v531
        %533 = vmatprep.mubr.f32.mxu0 0.0
        %534 = vmatmul.mubr.f32.gmra.mrb[0].mxu0 %v315
        %v535 = vpop.f32.mrb[0].mxu0
        %v536 = vadd.f32 0.0, %v535
        %v537 = vpop.f32.mrb[0].mxu0
        %v538 = vadd.f32 0.0, %v537
        %539 = vmatprep.mubr.f32.mxu0 0.0
        %540 = vmatmul.mubr.f32.gmra.mrb[0].mxu0 %v318
        %v541 = vpop.f32.mrb[0].mxu0
        %v542 = vadd.f32 0.0, %v541
        %v543 = vpop.f32.mrb[0].mxu0
        %v544 = vadd.f32 0.0, %v543
        %545 = vdwg.mxu0
        %546 = vrot.lane.b32.xlu0 %v411, 127
        %v547 = vpop.permute.xlu0 %546
        %548 = vrot.lane.b32.xlu0 %v417, 127
        %v549 = vpop.permute.xlu0 %548
        %550 = vrot.lane.b32.xlu0 %v423, 127
        %v551 = vpop.permute.xlu0 %550
        %552 = vrot.lane.b32.xlu0 %v429, 127
        %v553 = vpop.permute.xlu0 %552
        %554 = vrot.lane.b32.xlu0 %v413, 127
        %v555 = vpop.permute.xlu0 %554
        %556 = vrot.lane.b32.xlu0 %v419, 127
        %v557 = vpop.permute.xlu0 %556
        %558 = vrot.lane.b32.xlu0 %v425, 127
        %v559 = vpop.permute.xlu0 %558
        %560 = vrot.lane.b32.xlu0 %v431, 127
        %v561 = vpop.permute.xlu0 %560
        %562 = vrot.lane.b32.xlu0 %v524, 127
        %v563 = vpop.permute.xlu0 %562
        %564 = vrot.lane.b32.xlu0 %v530, 127
        %v565 = vpop.permute.xlu0 %564
        %566 = vrot.lane.b32.xlu0 %v536, 127
        %v567 = vpop.permute.xlu0 %566
        %568 = vrot.lane.b32.xlu0 %v542, 127
        %v569 = vpop.permute.xlu0 %568
        %570 = vrot.lane.b32.xlu0 %v526, 127
        %v571 = vpop.permute.xlu0 %570
        %572 = vrot.lane.b32.xlu0 %v532, 127
        %v573 = vpop.permute.xlu0 %572
        %574 = vrot.lane.b32.xlu0 %v538, 127
        %v575 = vpop.permute.xlu0 %574
        %576 = vrot.lane.b32.xlu0 %v544, 127
        %v577 = vpop.permute.xlu0 %576
        %vm578 = vcmp.lt.s32.totalorder %v227, 127
        %v579 = vsel %vm578, %v563, %v571
        %v580 = vsel %vm578, %v565, %v573
        %v581 = vsel %vm578, %v567, %v575
        %v582 = vsel %vm578, %v569, %v577
        %v583 = vsel %vm578, %v555, %v563
        %v584 = vsel %vm578, %v557, %v565
        %v585 = vsel %vm578, %v559, %v567
        %v586 = vsel %vm578, %v561, %v569
        %v587 = vsel %vm578, %v547, %v555
        %v588 = vsel %vm578, %v549, %v557
        %v589 = vsel %vm578, %v551, %v559
        %v590 = vsel %vm578, %v553, %v561
        %v591 = vsel %vm578, %v571, %v547
        %v592 = vsel %vm578, %v573, %v549
        %v593 = vsel %vm578, %v575, %v551
        %v594 = vsel %vm578, %v577, %v553
        %v595 = vadd.f32 %v387, %v587
        %v596 = vadd.f32 %v389, %v583
        %v597 = vadd.f32 %v500, %v579
        %v598 = vadd.f32 %v502, %v591
        %v599 = vadd.f32 %v393, %v588
        %v600 = vadd.f32 %v395, %v584
        %v601 = vadd.f32 %v506, %v580
        %v602 = vadd.f32 %v508, %v592
        %v603 = vadd.f32 %v399, %v589
        %v604 = vadd.f32 %v401, %v585
        %v605 = vadd.f32 %v512, %v581
        %v606 = vadd.f32 %v514, %v593
        %v607 = vadd.f32 %v405, %v590
        %v608 = vadd.f32 %v407, %v586
        %v609 = vadd.f32 %v518, %v582
        %v610 = vadd.f32 %v520, %v594
        %v611 = vsel %vm279, 1, 0
        %v612 = vsel %vm280, 1, 0
        %v613 = vsel %vm281, 1, 0
        %v614 = vsel %vm282, 1, 0
        %vm615 = vcmp.eq.s32.totalorder %v611, 1
        %vm616 = vcmp.eq.s32.totalorder %v612, 1
        %vm617 = vcmp.eq.s32.totalorder %v613, 1
        %vm618 = vcmp.eq.s32.totalorder %v614, 1
        %v619 = vsel %vm615, %v595, 0.0
        %v620 = vsel %vm616, %v596, 0.0
        %v621 = vsel %vm617, %v597, 0.0
        %v622 = vsel %vm618, %v598, 0.0
        %v623 = vsel %vm615, %v599, 0.0
        %v624 = vsel %vm616, %v600, 0.0
        %v625 = vsel %vm617, %v601, 0.0
        %v626 = vsel %vm618, %v602, 0.0
        %v627 = vsel %vm615, %v603, 0.0
        %v628 = vsel %vm616, %v604, 0.0
        %v629 = vsel %vm617, %v605, 0.0
        %v630 = vsel %vm618, %v606, 0.0
        %v631 = vsel %vm615, %v607, 0.0
        %v632 = vsel %vm616, %v608, 0.0
        %v633 = vsel %vm617, %v609, 0.0
        %v634 = vsel %vm618, %v610, 0.0
        %635 = vadd.xlane.f32.xlu0 %v619
        %v636 = vpop.xlane.xlu0 %635
        %637 = vadd.xlane.f32.xlu0 %v623
        %v638 = vpop.xlane.xlu0 %637
        %639 = vadd.xlane.f32.xlu0 %v627
        %v640 = vpop.xlane.xlu0 %639
        %641 = vadd.xlane.f32.xlu0 %v631
        %v642 = vpop.xlane.xlu0 %641
        %v643 = vmul.f32 %v636, 0.05882353
        %v644 = vmul.f32 %v638, 0.05882353
        %v645 = vmul.f32 %v640, 0.05882353
        %v646 = vmul.f32 %v642, 0.05882353
        %v647 = vsub.f32 %v619, %v643
        %v648 = vsub.f32 %v623, %v644
        %v649 = vsub.f32 %v627, %v645
        %v650 = vsub.f32 %v631, %v646
        %v651 = vmul.f32 %v647, %v647
        %v652 = vmul.f32 %v648, %v648
        %v653 = vmul.f32 %v649, %v649
        %v654 = vmul.f32 %v650, %v650
        %655 = vadd.xlane.f32.xlu0 %v651
        %v656 = vpop.xlane.xlu0 %655
        %657 = vadd.xlane.f32.xlu0 %v652
        %v658 = vpop.xlane.xlu0 %657
        %659 = vadd.xlane.f32.xlu0 %v653
        %v660 = vpop.xlane.xlu0 %659
        %661 = vadd.xlane.f32.xlu0 %v654
        %v662 = vpop.xlane.xlu0 %661
        %v663 = vmul.f32 %v643, 111.0
        %v664 = vmul.f32 %v644, 111.0
        %v665 = vmul.f32 %v645, 111.0
        %v666 = vmul.f32 %v646, 111.0
        %v667 = vmul.f32 %v663, %v643
        %v668 = vmul.f32 %v664, %v644
        %v669 = vmul.f32 %v665, %v645
        %v670 = vmul.f32 %v666, %v646
        %v671 = vsub.f32 %v656, %v667
        %v672 = vsub.f32 %v658, %v668
        %v673 = vsub.f32 %v660, %v669
        %v674 = vsub.f32 %v662, %v670
        %v675 = vmul.f32 %v671, 0.05882353
        %v676 = vmul.f32 %v672, 0.05882353
        %v677 = vmul.f32 %v673, 0.05882353
        %v678 = vmul.f32 %v674, 0.05882353
        %v679 = vmax.f32 %v675, 0.0
        %v680 = vmax.f32 %v676, 0.0
        %v681 = vmax.f32 %v677, 0.0
        %v682 = vmax.f32 %v678, 0.0
        %v683 = vadd.f32 %v679, 1e-05
        %v684 = vadd.f32 %v680, 1e-05
        %v685 = vadd.f32 %v681, 1e-05
        %v686 = vadd.f32 %v682, 1e-05
        %v687 = vrsqrt.pop %v683
        %v688 = vrsqrt.pop %v684
        %v689 = vrsqrt.pop %v685
        %v690 = vrsqrt.pop %v686
        %v691 = vmul.f32 %v647, %v687
        %v692 = vmul.f32 %v648, %v688
        %v693 = vmul.f32 %v649, %v689
        %v694 = vmul.f32 %v650, %v690
        %695 = vadd.xlane.f32.xlu0 %v620
        %v696 = vpop.xlane.xlu0 %695
        %697 = vadd.xlane.f32.xlu0 %v624
        %v698 = vpop.xlane.xlu0 %697
        %699 = vadd.xlane.f32.xlu0 %v628
        %v700 = vpop.xlane.xlu0 %699
        %701 = vadd.xlane.f32.xlu0 %v632
        %v702 = vpop.xlane.xlu0 %701
        %v703 = vmul.f32 %v696, 0.05882353
        %v704 = vmul.f32 %v698, 0.05882353
        %v705 = vmul.f32 %v700, 0.05882353
        %v706 = vmul.f32 %v702, 0.05882353
        %v707 = vsub.f32 %v620, %v703
        %v708 = vsub.f32 %v624, %v704
        %v709 = vsub.f32 %v628, %v705
        %v710 = vsub.f32 %v632, %v706
        %v711 = vmul.f32 %v707, %v707
        %v712 = vmul.f32 %v708, %v708
        %v713 = vmul.f32 %v709, %v709
        %v714 = vmul.f32 %v710, %v710
        %715 = vadd.xlane.f32.xlu0 %v711
        %v716 = vpop.xlane.xlu0 %715
        %717 = vadd.xlane.f32.xlu0 %v712
        %v718 = vpop.xlane.xlu0 %717
        %719 = vadd.xlane.f32.xlu0 %v713
        %v720 = vpop.xlane.xlu0 %719
        %721 = vadd.xlane.f32.xlu0 %v714
        %v722 = vpop.xlane.xlu0 %721
        %v723 = vmul.f32 %v703, 111.0
        %v724 = vmul.f32 %v704, 111.0
        %v725 = vmul.f32 %v705, 111.0
        %v726 = vmul.f32 %v706, 111.0
        %v727 = vmul.f32 %v723, %v703
        %v728 = vmul.f32 %v724, %v704
        %v729 = vmul.f32 %v725, %v705
        %v730 = vmul.f32 %v726, %v706
        %v731 = vsub.f32 %v716, %v727
        %v732 = vsub.f32 %v718, %v728
        %v733 = vsub.f32 %v720, %v729
        %v734 = vsub.f32 %v722, %v730
        %v735 = vmul.f32 %v731, 0.05882353
        %v736 = vmul.f32 %v732, 0.05882353
        %v737 = vmul.f32 %v733, 0.05882353
        %v738 = vmul.f32 %v734, 0.05882353
        %v739 = vmax.f32 %v735, 0.0
        %v740 = vmax.f32 %v736, 0.0
        %v741 = vmax.f32 %v737, 0.0
        %v742 = vmax.f32 %v738, 0.0
        %v743 = vadd.f32 %v739, 1e-05
        %v744 = vadd.f32 %v740, 1e-05
        %v745 = vadd.f32 %v741, 1e-05
        %v746 = vadd.f32 %v742, 1e-05
        %v747 = vrsqrt.pop %v743
        %v748 = vrsqrt.pop %v744
        %v749 = vrsqrt.pop %v745
        %v750 = vrsqrt.pop %v746
        %v751 = vmul.f32 %v707, %v747
        %v752 = vmul.f32 %v708, %v748
        %v753 = vmul.f32 %v709, %v749
        %v754 = vmul.f32 %v710, %v750
        %755 = vadd.xlane.f32.xlu0 %v621
        %v756 = vpop.xlane.xlu0 %755
        %757 = vadd.xlane.f32.xlu0 %v625
        %v758 = vpop.xlane.xlu0 %757
        %759 = vadd.xlane.f32.xlu0 %v629
        %v760 = vpop.xlane.xlu0 %759
        %761 = vadd.xlane.f32.xlu0 %v633
        %v762 = vpop.xlane.xlu0 %761
        %v763 = vmul.f32 %v756, 0.05882353
        %v764 = vmul.f32 %v758, 0.05882353
        %v765 = vmul.f32 %v760, 0.05882353
        %v766 = vmul.f32 %v762, 0.05882353
        %v767 = vsub.f32 %v621, %v763
        %v768 = vsub.f32 %v625, %v764
        %v769 = vsub.f32 %v629, %v765
        %v770 = vsub.f32 %v633, %v766
        %v771 = vmul.f32 %v767, %v767
        %v772 = vmul.f32 %v768, %v768
        %v773 = vmul.f32 %v769, %v769
        %v774 = vmul.f32 %v770, %v770
        %775 = vadd.xlane.f32.xlu0 %v771
        %v776 = vpop.xlane.xlu0 %775
        %777 = vadd.xlane.f32.xlu0 %v772
        %v778 = vpop.xlane.xlu0 %777
        %779 = vadd.xlane.f32.xlu0 %v773
        %v780 = vpop.xlane.xlu0 %779
        %781 = vadd.xlane.f32.xlu0 %v774
        %v782 = vpop.xlane.xlu0 %781
        %v783 = vmul.f32 %v763, 111.0
        %v784 = vmul.f32 %v764, 111.0
        %v785 = vmul.f32 %v765, 111.0
        %v786 = vmul.f32 %v766, 111.0
        %v787 = vmul.f32 %v783, %v763
        %v788 = vmul.f32 %v784, %v764
        %v789 = vmul.f32 %v785, %v765
        %v790 = vmul.f32 %v786, %v766
        %v791 = vsub.f32 %v776, %v787
        %v792 = vsub.f32 %v778, %v788
        %v793 = vsub.f32 %v780, %v789
        %v794 = vsub.f32 %v782, %v790
        %v795 = vmul.f32 %v791, 0.05882353
        %v796 = vmul.f32 %v792, 0.05882353
        %v797 = vmul.f32 %v793, 0.05882353
        %v798 = vmul.f32 %v794, 0.05882353
        %v799 = vmax.f32 %v795, 0.0
        %v800 = vmax.f32 %v796, 0.0
        %v801 = vmax.f32 %v797, 0.0
        %v802 = vmax.f32 %v798, 0.0
        %v803 = vadd.f32 %v799, 1e-05
        %v804 = vadd.f32 %v800, 1e-05
        %v805 = vadd.f32 %v801, 1e-05
        %v806 = vadd.f32 %v802, 1e-05
        %v807 = vrsqrt.pop %v803
        %v808 = vrsqrt.pop %v804
        %v809 = vrsqrt.pop %v805
        %v810 = vrsqrt.pop %v806
        %v811 = vmul.f32 %v767, %v807
        %v812 = vmul.f32 %v768, %v808
        %v813 = vmul.f32 %v769, %v809
        %v814 = vmul.f32 %v770, %v810
        %815 = vadd.xlane.f32.xlu0 %v622
        %v816 = vpop.xlane.xlu0 %815
        %817 = vadd.xlane.f32.xlu0 %v626
        %v818 = vpop.xlane.xlu0 %817
        %819 = vadd.xlane.f32.xlu0 %v630
        %v820 = vpop.xlane.xlu0 %819
        %821 = vadd.xlane.f32.xlu0 %v634
        %v822 = vpop.xlane.xlu0 %821
        %v823 = vmul.f32 %v816, 0.05882353
        %v824 = vmul.f32 %v818, 0.05882353
        %v825 = vmul.f32 %v820, 0.05882353
        %v826 = vmul.f32 %v822, 0.05882353
        %v827 = vsub.f32 %v622, %v823
        %v828 = vsub.f32 %v626, %v824
        %v829 = vsub.f32 %v630, %v825
        %v830 = vsub.f32 %v634, %v826
        %v831 = vmul.f32 %v827, %v827
        %v832 = vmul.f32 %v828, %v828
        %v833 = vmul.f32 %v829, %v829
        %v834 = vmul.f32 %v830, %v830
        %835 = vadd.xlane.f32.xlu0 %v831
        %v836 = vpop.xlane.xlu0 %835
        %837 = vadd.xlane.f32.xlu0 %v832
        %v838 = vpop.xlane.xlu0 %837
        %839 = vadd.xlane.f32.xlu0 %v833
        %v840 = vpop.xlane.xlu0 %839
        %841 = vadd.xlane.f32.xlu0 %v834
        %v842 = vpop.xlane.xlu0 %841
        %v843 = vmul.f32 %v823, 111.0
        %v844 = vmul.f32 %v824, 111.0
        %v845 = vmul.f32 %v825, 111.0
        %v846 = vmul.f32 %v826, 111.0
        %v847 = vmul.f32 %v843, %v823
        %v848 = vmul.f32 %v844, %v824
        %v849 = vmul.f32 %v845, %v825
        %v850 = vmul.f32 %v846, %v826
        %v851 = vsub.f32 %v836, %v847
        %v852 = vsub.f32 %v838, %v848
        %v853 = vsub.f32 %v840, %v849
        %v854 = vsub.f32 %v842, %v850
        %v855 = vmul.f32 %v851, 0.05882353
        %v856 = vmul.f32 %v852, 0.05882353
        %v857 = vmul.f32 %v853, 0.05882353
        %v858 = vmul.f32 %v854, 0.05882353
        %v859 = vmax.f32 %v855, 0.0
        %v860 = vmax.f32 %v856, 0.0
        %v861 = vmax.f32 %v857, 0.0
        %v862 = vmax.f32 %v858, 0.0
        %v863 = vadd.f32 %v859, 1e-05
        %v864 = vadd.f32 %v860, 1e-05
        %v865 = vadd.f32 %v861, 1e-05
        %v866 = vadd.f32 %v862, 1e-05
        %v867 = vrsqrt.pop %v863
        %v868 = vrsqrt.pop %v864
        %v869 = vrsqrt.pop %v865
        %v870 = vrsqrt.pop %v866
        %v871 = vmul.f32 %v827, %v867
        %v872 = vmul.f32 %v828, %v868
        %v873 = vmul.f32 %v829, %v869
        %v874 = vmul.f32 %v830, %v870
        %v875 = vld [vmem:[#allocation2] sm:$0xff]
        %v877 = vlaneseq
        %v878 = vshrl.u32 %v877, 7
        %v879 = vsub.s32 0, %v878
        %v880 = vrot.slane %v875, %v879
        %v881 = vlaneseq
        %v882 = vshrl.u32 %v881, 7
        %v883 = vsub.s32 2, %v882
        %v884 = vrot.slane %v875, %v883
        %v885 = vlaneseq
        %v886 = vshrl.u32 %v885, 7
        %v887 = vsub.s32 4, %v886
        %v888 = vrot.slane %v875, %v887
        %v889 = vlaneseq
        %v890 = vshrl.u32 %v889, 7
        %v891 = vsub.s32 6, %v890
        %v892 = vrot.slane %v875, %v891
        %v897 = vlaneseq
        %v898 = vshrl.u32 %v897, 7
        %v899 = vsub.s32 0, %v898
        %v900 = vrot.slane %v880, %v899
        %v901 = vlaneseq
        %v902 = vshrl.u32 %v901, 7
        %v903 = vsub.s32 0, %v902
        %v904 = vrot.slane %v884, %v903
        %v905 = vlaneseq
        %v906 = vshrl.u32 %v905, 7
        %v907 = vsub.s32 0, %v906
        %v908 = vrot.slane %v888, %v907
        %v909 = vlaneseq
        %v910 = vshrl.u32 %v909, 7
        %v911 = vsub.s32 0, %v910
        %v912 = vrot.slane %v892, %v911
        %v913 = vmul.f32 %v691, %v900
        %v914 = vmul.f32 %v751, %v904
        %v915 = vmul.f32 %v811, %v908
        %v916 = vmul.f32 %v871, %v912
        %v917 = vmul.f32 %v692, %v900
        %v918 = vmul.f32 %v752, %v904
        %v919 = vmul.f32 %v812, %v908
        %v920 = vmul.f32 %v872, %v912
        %v921 = vmul.f32 %v693, %v900
        %v922 = vmul.f32 %v753, %v904
        %v923 = vmul.f32 %v813, %v908
        %v924 = vmul.f32 %v873, %v912
        %v925 = vmul.f32 %v694, %v900
        %v926 = vmul.f32 %v754, %v904
        %v927 = vmul.f32 %v814, %v908
        %v928 = vmul.f32 %v874, %v912
        %v929 = vlaneseq
        %v930 = vshrl.u32 %v929, 7
        %v931 = vsub.s32 1, %v930
        %v932 = vrot.slane %v875, %v931
        %v933 = vlaneseq
        %v934 = vshrl.u32 %v933, 7
        %v935 = vsub.s32 3, %v934
        %v936 = vrot.slane %v875, %v935
        %v937 = vlaneseq
        %v938 = vshrl.u32 %v937, 7
        %v939 = vsub.s32 5, %v938
        %v940 = vrot.slane %v875, %v939
        %v941 = vlaneseq
        %v942 = vshrl.u32 %v941, 7
        %v943 = vsub.s32 7, %v942
        %v944 = vrot.slane %v875, %v943
        %v949 = vlaneseq
        %v950 = vshrl.u32 %v949, 7
        %v951 = vsub.s32 1, %v950
        %v952 = vrot.slane %v932, %v951
        %v953 = vlaneseq
        %v954 = vshrl.u32 %v953, 7
        %v955 = vsub.s32 1, %v954
        %v956 = vrot.slane %v936, %v955
        %v957 = vlaneseq
        %v958 = vshrl.u32 %v957, 7
        %v959 = vsub.s32 1, %v958
        %v960 = vrot.slane %v940, %v959
        %v961 = vlaneseq
        %v962 = vshrl.u32 %v961, 7
        %v963 = vsub.s32 1, %v962
        %v964 = vrot.slane %v944, %v963
        %v965 = vadd.f32 %v913, %v952
        %v966 = vadd.f32 %v914, %v956
        %v967 = vadd.f32 %v915, %v960
        %v968 = vadd.f32 %v916, %v964
        %v969 = vadd.f32 %v917, %v952
        %v970 = vadd.f32 %v918, %v956
        %v971 = vadd.f32 %v919, %v960
        %v972 = vadd.f32 %v920, %v964
        %v973 = vadd.f32 %v921, %v952
        %v974 = vadd.f32 %v922, %v956
        %v975 = vadd.f32 %v923, %v960
        %v976 = vadd.f32 %v924, %v964
        %v977 = vadd.f32 %v925, %v952
        %v978 = vadd.f32 %v926, %v956
        %v979 = vadd.f32 %v927, %v960
        %v980 = vadd.f32 %v928, %v964
        %vm981 = vcmp.ge.f32.partialorder %v965, 0.0
        %vm982 = vcmp.ge.f32.partialorder %v966, 0.0
        %vm983 = vcmp.ge.f32.partialorder %v967, 0.0
        %vm984 = vcmp.ge.f32.partialorder %v968, 0.0
        %vm985 = vcmp.ge.f32.partialorder %v969, 0.0
        %vm986 = vcmp.ge.f32.partialorder %v970, 0.0
        %vm987 = vcmp.ge.f32.partialorder %v971, 0.0
        %vm988 = vcmp.ge.f32.partialorder %v972, 0.0
        %vm989 = vcmp.ge.f32.partialorder %v973, 0.0
        %vm990 = vcmp.ge.f32.partialorder %v974, 0.0
        %vm991 = vcmp.ge.f32.partialorder %v975, 0.0
        %vm992 = vcmp.ge.f32.partialorder %v976, 0.0
        %vm993 = vcmp.ge.f32.partialorder %v977, 0.0
        %vm994 = vcmp.ge.f32.partialorder %v978, 0.0
        %vm995 = vcmp.ge.f32.partialorder %v979, 0.0
        %vm996 = vcmp.ge.f32.partialorder %v980, 0.0
        %v997 = vmul.f32 %v965, 0.2
        %v998 = vmul.f32 %v966, 0.2
        %v999 = vmul.f32 %v967, 0.2
        %v1000 = vmul.f32 %v968, 0.2
        %v1001 = vmul.f32 %v969, 0.2
        %v1002 = vmul.f32 %v970, 0.2
        %v1003 = vmul.f32 %v971, 0.2
        %v1004 = vmul.f32 %v972, 0.2
        %v1005 = vmul.f32 %v973, 0.2
        %v1006 = vmul.f32 %v974, 0.2
        %v1007 = vmul.f32 %v975, 0.2
        %v1008 = vmul.f32 %v976, 0.2
        %v1009 = vmul.f32 %v977, 0.2
        %v1010 = vmul.f32 %v978, 0.2
        %v1011 = vmul.f32 %v979, 0.2
        %v1012 = vmul.f32 %v980, 0.2
        %v1013 = vsel %vm981, %v965, %v997
        %v1014 = vsel %vm982, %v966, %v998
        %v1015 = vsel %vm983, %v967, %v999
        %v1016 = vsel %vm984, %v968, %v1000
        %v1017 = vsel %vm985, %v969, %v1001
        %v1018 = vsel %vm986, %v970, %v1002
        %v1019 = vsel %vm987, %v971, %v1003
        %v1020 = vsel %vm988, %v972, %v1004
        %v1021 = vsel %vm989, %v973, %v1005
        %v1022 = vsel %vm990, %v974, %v1006
        %v1023 = vsel %vm991, %v975, %v1007
        %v1024 = vsel %vm992, %v976, %v1008
        %v1025 = vsel %vm993, %v977, %v1009
        %v1026 = vsel %vm994, %v978, %v1010
        %v1027 = vsel %vm995, %v979, %v1011
        %v1028 = vsel %vm996, %v980, %v1012
        %1029 = vrot.lane.b32.xlu0 %v1013, 1
        %v1030 = vpop.permute.xlu0 %1029
        %1031 = vrot.lane.b32.xlu0 %v1017, 1
        %v1032 = vpop.permute.xlu0 %1031
        %1033 = vrot.lane.b32.xlu0 %v1021, 1
        %v1034 = vpop.permute.xlu0 %1033
        %1035 = vrot.lane.b32.xlu0 %v1025, 1
        %v1036 = vpop.permute.xlu0 %1035
        %1037 = vrot.lane.b32.xlu0 %v1014, 1
        %v1038 = vpop.permute.xlu0 %1037
        %1039 = vrot.lane.b32.xlu0 %v1018, 1
        %v1040 = vpop.permute.xlu0 %1039
        %1041 = vrot.lane.b32.xlu0 %v1022, 1
        %v1042 = vpop.permute.xlu0 %1041
        %1043 = vrot.lane.b32.xlu0 %v1026, 1
        %v1044 = vpop.permute.xlu0 %1043
        %1045 = vrot.lane.b32.xlu0 %v1015, 1
        %v1046 = vpop.permute.xlu0 %1045
        %1047 = vrot.lane.b32.xlu0 %v1019, 1
        %v1048 = vpop.permute.xlu0 %1047
        %1049 = vrot.lane.b32.xlu0 %v1023, 1
        %v1050 = vpop.permute.xlu0 %1049
        %1051 = vrot.lane.b32.xlu0 %v1027, 1
        %v1052 = vpop.permute.xlu0 %1051
        %1053 = vrot.lane.b32.xlu0 %v1016, 1
        %v1054 = vpop.permute.xlu0 %1053
        %1055 = vrot.lane.b32.xlu0 %v1020, 1
        %v1056 = vpop.permute.xlu0 %1055
        %1057 = vrot.lane.b32.xlu0 %v1024, 1
        %v1058 = vpop.permute.xlu0 %1057
        %1059 = vrot.lane.b32.xlu0 %v1028, 1
        %v1060 = vpop.permute.xlu0 %1059
        %vm1061 = vcmp.lt.s32.totalorder %v227, 1
        %v1062 = vsel %vm1061, %v1046, %v1054
        %v1063 = vsel %vm1061, %v1048, %v1056
        %v1064 = vsel %vm1061, %v1050, %v1058
        %v1065 = vsel %vm1061, %v1052, %v1060
        %v1066 = vsel %vm1061, %v1038, %v1046
        %v1067 = vsel %vm1061, %v1040, %v1048
        %v1068 = vsel %vm1061, %v1042, %v1050
        %v1069 = vsel %vm1061, %v1044, %v1052
        %v1070 = vsel %vm1061, %v1030, %v1038
        %v1071 = vsel %vm1061, %v1032, %v1040
        %v1072 = vsel %vm1061, %v1034, %v1042
        %v1073 = vsel %vm1061, %v1036, %v1044
        %v1074 = vsel %vm1061, %v1054, %v1030
        %v1075 = vsel %vm1061, %v1056, %v1032
        %v1076 = vsel %vm1061, %v1058, %v1034
        %v1077 = vsel %vm1061, %v1060, %v1036
        %1078 = vrot.lane.b32.xlu0 %v1013, 127
        %v1079 = vpop.permute.xlu0 %1078
        %1080 = vrot.lane.b32.xlu0 %v1017, 127
        %v1081 = vpop.permute.xlu0 %1080
        %1082 = vrot.lane.b32.xlu0 %v1021, 127
        %v1083 = vpop.permute.xlu0 %1082
        %1084 = vrot.lane.b32.xlu0 %v1025, 127
        %v1085 = vpop.permute.xlu0 %1084
        %1086 = vrot.lane.b32.xlu0 %v1014, 127
        %v1087 = vpop.permute.xlu0 %1086
        %1088 = vrot.lane.b32.xlu0 %v1018, 127
        %v1089 = vpop.permute.xlu0 %1088
        %1090 = vrot.lane.b32.xlu0 %v1022, 127
        %v1091 = vpop.permute.xlu0 %1090
        %1092 = vrot.lane.b32.xlu0 %v1026, 127
        %v1093 = vpop.permute.xlu0 %1092
        %1094 = vrot.lane.b32.xlu0 %v1015, 127
        %v1095 = vpop.permute.xlu0 %1094
        %1096 = vrot.lane.b32.xlu0 %v1019, 127
        %v1097 = vpop.permute.xlu0 %1096
        %1098 = vrot.lane.b32.xlu0 %v1023, 127
        %v1099 = vpop.permute.xlu0 %1098
        %1100 = vrot.lane.b32.xlu0 %v1027, 127
        %v1101 = vpop.permute.xlu0 %1100
        %1102 = vrot.lane.b32.xlu0 %v1016, 127
        %v1103 = vpop.permute.xlu0 %1102
        %1104 = vrot.lane.b32.xlu0 %v1020, 127
        %v1105 = vpop.permute.xlu0 %1104
        %1106 = vrot.lane.b32.xlu0 %v1024, 127
        %v1107 = vpop.permute.xlu0 %1106
        %1108 = vrot.lane.b32.xlu0 %v1028, 127
        %v1109 = vpop.permute.xlu0 %1108
        %v1110 = vsel %vm578, %v1095, %v1103
        %v1111 = vsel %vm578, %v1097, %v1105
        %v1112 = vsel %vm578, %v1099, %v1107
        %v1113 = vsel %vm578, %v1101, %v1109
        %v1114 = vsel %vm578, %v1087, %v1095
        %v1115 = vsel %vm578, %v1089, %v1097
        %v1116 = vsel %vm578, %v1091, %v1099
        %v1117 = vsel %vm578, %v1093, %v1101
        %v1118 = vsel %vm578, %v1079, %v1087
        %v1119 = vsel %vm578, %v1081, %v1089
        %v1120 = vsel %vm578, %v1083, %v1091
        %v1121 = vsel %vm578, %v1085, %v1093
        %v1122 = vsel %vm578, %v1103, %v1079
        %v1123 = vsel %vm578, %v1105, %v1081
        %v1124 = vsel %vm578, %v1107, %v1083
        %v1125 = vsel %vm578, %v1109, %v1085
        %v1126 = vld [vmem:[#allocation5] sm:$0xff]
        %v1127 = vld [vmem:[#allocation5 + $0x8] sm:$0xff]
        %v1128 = vld [vmem:[#allocation5 + $0x10] sm:$0xff]
        %v1129 = vld [vmem:[#allocation5 + $0x18] sm:$0xff]
        %vm1130 = vcmask 785408
        %v1132 = vsel %vm1130, %v1126, 0
        %v1135 = vsel %vm1130, %v1127, 0
        %v1138 = vsel %vm1130, %v1128, 0
        %v1141 = vsel %vm1130, %v1129, 0
        %1143 = vmatprep.subr.mxu0 %v1070
        %1144 = vmatpush1.msra.mxu0 %v1074
        %1145 = vmatprep.subr.mxu0 %v1071
        %1146 = vmatpush1.msra.mxu0 %v1075
        %1147 = vmatprep.subr.mxu0 %v1072
        %1148 = vmatpush1.msra.mxu0 %v1076
        %1149 = vmatprep.subr.mxu0 %v1073
        %1150 = vmatpush1.msra.mxu0 %v1077
        %1151 = vmatprep.subr.mxu0 %v1014
        %1152 = vmatpush1.msra.mxu0 %v1013
        %1153 = vmatprep.subr.mxu0 %v1018
        %1154 = vmatpush1.msra.mxu0 %v1017
        %1155 = vmatprep.subr.mxu0 %v1022
        %1156 = vmatpush1.msra.mxu0 %v1021
        %1157 = vmatprep.subr.mxu0 %v1026
        %1158 = vmatpush1.msra.mxu0 %v1025
        %1159 = vmatprep.subr.mxu0 %v1114
        %1160 = vmatpush1.msra.mxu0 %v1118
        %1161 = vmatprep.subr.mxu0 %v1115
        %1162 = vmatpush1.msra.mxu0 %v1119
        %1163 = vmatprep.subr.mxu0 %v1116
        %1164 = vmatpush1.msra.mxu0 %v1120
        %1165 = vmatprep.subr.mxu0 %v1117
        %1166 = vmatpush1.msra.mxu0 %v1121
        %1167 = vmatprep.subr.mxu0 0.0
        %1168 = vmatpush1.msra.mxu0 0.0
        %1169 = vmatprep.subr.mxu0 0.0
        %1170 = vmatpush1.msra.mxu0 0.0
        %1171 = vmatprep.subr.mxu0 0.0
        %1172 = vmatpush1.msra.mxu0 0.0
        %1173 = vmatprep.subr.mxu0 0.0
        %1174 = vmatpush1.msra.mxu0 0.0
        %1175 = vmatprep.subr.mxu0 0.0
        %1176 = vmatpush1.msra.mxu0 0.0
        %1177 = vmatprep.subr.mxu0 0.0
        %1178 = vmatpush1.msra.mxu0 0.0
        %1179 = vmatprep.subr.mxu0 0.0
        %1180 = vmatpush1.msra.mxu0 0.0
        %1181 = vmatprep.subr.mxu0 0.0
        %1182 = vmatpush1.msra.mxu0 0.0
        %1183 = vmatprep.subr.mxu0 0.0
        %1184 = vmatpush1.msra.mxu0 0.0
        %1185 = vmatprep.subr.mxu0 0.0
        %1186 = vmatpush1.msra.mxu0 0.0
        %1187 = vmatprep.subr.mxu0 0.0
        %1188 = vmatpush1.msra.mxu0 0.0
        %1189 = vmatprep.subr.mxu0 0.0
        %1190 = vmatpush1.msra.mxu0 0.0
        %1191 = vmatprep.subr.mxu0 0.0
        %1192 = vmatpush1.msra.mxu0 0.0
        %1193 = vmatprep.subr.mxu0 0.0
        %1194 = vmatpush1.msra.mxu0 0.0
        %1195 = vmatprep.subr.mxu0 0.0
        %1196 = vmatpush1.msra.mxu0 0.0
        %1197 = vmatprep.subr.mxu0 0.0
        %1198 = vmatpush1.msra.mxu0 0.0
        %1199 = vmatprep.subr.mxu0 0.0
        %1200 = vmatpush1.msra.mxu0 0.0
        %1201 = vmatprep.subr.mxu0 0.0
        %1202 = vmatpush1.msra.mxu0 0.0
        %1203 = vmatprep.subr.mxu0 0.0
        %1204 = vmatpush1.msra.mxu0 0.0
        %1205 = vmatprep.subr.mxu0 0.0
        %1206 = vmatpush1.msra.mxu0 0.0
        %1207 = vmatprep.mubr.f32.mxu0 0.0
        %1208 = vmatmul.mubr.f32.gmra.mrb[0].mxu0 %v1132
        %v1209 = vpop.f32.mrb[0].mxu0
        %v1210 = vadd.f32 0.0, %v1209
        %v1211 = vpop.f32.mrb[0].mxu0
        %v1212 = vadd.f32 0.0, %v1211
        %1213 = vmatprep.mubr.f32.mxu0 0.0
        %1214 = vmatmul.mubr.f32.gmra.mrb[0].mxu0 %v1135
        %v1215 = vpop.f32.mrb[0].mxu0
        %v1216 = vadd.f32 0.0, %v1215
        %v1217 = vpop.f32.mrb[0].mxu0
        %v1218 = vadd.f32 0.0, %v1217
        %1219 = vmatprep.mubr.f32.mxu0 0.0
        %1220 = vmatmul.mubr.f32.gmra.mrb[0].mxu0 %v1138
        %v1221 = vpop.f32.mrb[0].mxu0
        %v1222 = vadd.f32 0.0, %v1221
        %v1223 = vpop.f32.mrb[0].mxu0
        %v1224 = vadd.f32 0.0, %v1223
        %1225 = vmatprep.mubr.f32.mxu0 0.0
        %1226 = vmatmul.mubr.f32.gmra.mrb[0].mxu0 %v1141
        %v1227 = vpop.f32.mrb[0].mxu0
        %v1228 = vadd.f32 0.0, %v1227
        %v1229 = vpop.f32.mrb[0].mxu0
        %v1230 = vadd.f32 0.0, %v1229
        %1231 = vdwg.mxu0
        %1232 = vmatprep.subr.mxu0 %v1062
        %1233 = vmatpush1.msra.mxu0 %v1066
        %1234 = vmatprep.subr.mxu0 %v1063
        %1235 = vmatpush1.msra.mxu0 %v1067
        %1236 = vmatprep.subr.mxu0 %v1064
        %1237 = vmatpush1.msra.mxu0 %v1068
        %1238 = vmatprep.subr.mxu0 %v1065
        %1239 = vmatpush1.msra.mxu0 %v1069
        %1240 = vmatprep.subr.mxu0 %v1016
        %1241 = vmatpush1.msra.mxu0 %v1015
        %1242 = vmatprep.subr.mxu0 %v1020
        %1243 = vmatpush1.msra.mxu0 %v1019
        %1244 = vmatprep.subr.mxu0 %v1024
        %1245 = vmatpush1.msra.mxu0 %v1023
        %1246 = vmatprep.subr.mxu0 %v1028
        %1247 = vmatpush1.msra.mxu0 %v1027
        %1248 = vmatprep.subr.mxu0 %v1122
        %1249 = vmatpush1.msra.mxu0 %v1110
        %1250 = vmatprep.subr.mxu0 %v1123
        %1251 = vmatpush1.msra.mxu0 %v1111
        %1252 = vmatprep.subr.mxu0 %v1124
        %1253 = vmatpush1.msra.mxu0 %v1112
        %1254 = vmatprep.subr.mxu0 %v1125
        %1255 = vmatpush1.msra.mxu0 %v1113
        %1256 = vmatprep.subr.mxu0 0.0
        %1257 = vmatpush1.msra.mxu0 0.0
        %1258 = vmatprep.subr.mxu0 0.0
        %1259 = vmatpush1.msra.mxu0 0.0
        %1260 = vmatprep.subr.mxu0 0.0
        %1261 = vmatpush1.msra.mxu0 0.0
        %1262 = vmatprep.subr.mxu0 0.0
        %1263 = vmatpush1.msra.mxu0 0.0
        %1264 = vmatprep.subr.mxu0 0.0
        %1265 = vmatpush1.msra.mxu0 0.0
        %1266 = vmatprep.subr.mxu0 0.0
        %1267 = vmatpush1.msra.mxu0 0.0
        %1268 = vmatprep.subr.mxu0 0.0
        %1269 = vmatpush1.msra.mxu0 0.0
        %1270 = vmatprep.subr.mxu0 0.0
        %1271 = vmatpush1.msra.mxu0 0.0
        %1272 = vmatprep.subr.mxu0 0.0
        %1273 = vmatpush1.msra.mxu0 0.0
        %1274 = vmatprep.subr.mxu0 0.0
        %1275 = vmatpush1.msra.mxu0 0.0
        %1276 = vmatprep.subr.mxu0 0.0
        %1277 = vmatpush1.msra.mxu0 0.0
        %1278 = vmatprep.subr.mxu0 0.0
        %1279 = vmatpush1.msra.mxu0 0.0
        %1280 = vmatprep.subr.mxu0 0.0
        %1281 = vmatpush1.msra.mxu0 0.0
        %1282 = vmatprep.subr.mxu0 0.0
        %1283 = vmatpush1.msra.mxu0 0.0
        %1284 = vmatprep.subr.mxu0 0.0
        %1285 = vmatpush1.msra.mxu0 0.0
        %1286 = vmatprep.subr.mxu0 0.0
        %1287 = vmatpush1.msra.mxu0 0.0
        %1288 = vmatprep.subr.mxu0 0.0
        %1289 = vmatpush1.msra.mxu0 0.0
        %1290 = vmatprep.subr.mxu0 0.0
        %1291 = vmatpush1.msra.mxu0 0.0
        %1292 = vmatprep.subr.mxu0 0.0
        %1293 = vmatpush1.msra.mxu0 0.0
        %1294 = vmatprep.subr.mxu0 0.0
        %1295 = vmatpush1.msra.mxu0 0.0
        %1296 = vmatprep.mubr.f32.mxu0 0.0
        %1297 = vmatmul.mubr.f32.gmra.mrb[0].mxu0 %v1132
        %v1298 = vpop.f32.mrb[0].mxu0
        %v1299 = vadd.f32 0.0, %v1298
        %v1300 = vpop.f32.mrb[0].mxu0
        %v1301 = vadd.f32 0.0, %v1300
        %1302 = vmatprep.mubr.f32.mxu0 0.0
        %1303 = vmatmul.mubr.f32.gmra.mrb[0].mxu0 %v1135
        %v1304 = vpop.f32.mrb[0].mxu0
        %v1305 = vadd.f32 0.0, %v1304
        %v1306 = vpop.f32.mrb[0].mxu0
        %v1307 = vadd.f32 0.0, %v1306
        %1308 = vmatprep.mubr.f32.mxu0 0.0
        %1309 = vmatmul.mubr.f32.gmra.mrb[0].mxu0 %v1138
        %v1310 = vpop.f32.mrb[0].mxu0
        %v1311 = vadd.f32 0.0, %v1310
        %v1312 = vpop.f32.mrb[0].mxu0
        %v1313 = vadd.f32 0.0, %v1312
        %1314 = vmatprep.mubr.f32.mxu0 0.0
        %1315 = vmatmul.mubr.f32.gmra.mrb[0].mxu0 %v1141
        %v1316 = vpop.f32.mrb[0].mxu0
        %v1317 = vadd.f32 0.0, %v1316
        %v1318 = vpop.f32.mrb[0].mxu0
        %v1319 = vadd.f32 0.0, %v1318
        %1320 = vdwg.mxu0
        %v1321 = vsel %vm615, %v1210, 0.0
        %v1322 = vsel %vm616, %v1212, 0.0
        %v1323 = vsel %vm617, %v1299, 0.0
        %v1324 = vsel %vm618, %v1301, 0.0
        %v1325 = vsel %vm615, %v1216, 0.0
        %v1326 = vsel %vm616, %v1218, 0.0
        %v1327 = vsel %vm617, %v1305, 0.0
        %v1328 = vsel %vm618, %v1307, 0.0
        %v1329 = vsel %vm615, %v1222, 0.0
        %v1330 = vsel %vm616, %v1224, 0.0
        %v1331 = vsel %vm617, %v1311, 0.0
        %v1332 = vsel %vm618, %v1313, 0.0
        %v1333 = vsel %vm615, %v1228, 0.0
        %v1334 = vsel %vm616, %v1230, 0.0
        %v1335 = vsel %vm617, %v1317, 0.0
        %v1336 = vsel %vm618, %v1319, 0.0
        %1337 = vadd.xlane.f32.xlu0 %v1321
        %v1338 = vpop.xlane.xlu0 %1337
        %1339 = vadd.xlane.f32.xlu0 %v1325
        %v1340 = vpop.xlane.xlu0 %1339
        %1341 = vadd.xlane.f32.xlu0 %v1329
        %v1342 = vpop.xlane.xlu0 %1341
        %1343 = vadd.xlane.f32.xlu0 %v1333
        %v1344 = vpop.xlane.xlu0 %1343
        %v1345 = vmul.f32 %v1338, 0.05882353
        %v1346 = vmul.f32 %v1340, 0.05882353
        %v1347 = vmul.f32 %v1342, 0.05882353
        %v1348 = vmul.f32 %v1344, 0.05882353
        %v1349 = vsub.f32 %v1321, %v1345
        %v1350 = vsub.f32 %v1325, %v1346
        %v1351 = vsub.f32 %v1329, %v1347
        %v1352 = vsub.f32 %v1333, %v1348
        %v1353 = vmul.f32 %v1349, %v1349
        %v1354 = vmul.f32 %v1350, %v1350
        %v1355 = vmul.f32 %v1351, %v1351
        %v1356 = vmul.f32 %v1352, %v1352
        %1357 = vadd.xlane.f32.xlu0 %v1353
        %v1358 = vpop.xlane.xlu0 %1357
        %1359 = vadd.xlane.f32.xlu0 %v1354
        %v1360 = vpop.xlane.xlu0 %1359
        %1361 = vadd.xlane.f32.xlu0 %v1355
        %v1362 = vpop.xlane.xlu0 %1361
        %1363 = vadd.xlane.f32.xlu0 %v1356
        %v1364 = vpop.xlane.xlu0 %1363
        %v1365 = vmul.f32 %v1345, 111.0
        %v1366 = vmul.f32 %v1346, 111.0
        %v1367 = vmul.f32 %v1347, 111.0
        %v1368 = vmul.f32 %v1348, 111.0
        %v1369 = vmul.f32 %v1365, %v1345
        %v1370 = vmul.f32 %v1366, %v1346
        %v1371 = vmul.f32 %v1367, %v1347
        %v1372 = vmul.f32 %v1368, %v1348
        %v1373 = vsub.f32 %v1358, %v1369
        %v1374 = vsub.f32 %v1360, %v1370
        %v1375 = vsub.f32 %v1362, %v1371
        %v1376 = vsub.f32 %v1364, %v1372
        %v1377 = vmul.f32 %v1373, 0.05882353
        %v1378 = vmul.f32 %v1374, 0.05882353
        %v1379 = vmul.f32 %v1375, 0.05882353
        %v1380 = vmul.f32 %v1376, 0.05882353
        %v1381 = vmax.f32 %v1377, 0.0
        %v1382 = vmax.f32 %v1378, 0.0
        %v1383 = vmax.f32 %v1379, 0.0
        %v1384 = vmax.f32 %v1380, 0.0
        %v1385 = vadd.f32 %v1381, 1e-05
        %v1386 = vadd.f32 %v1382, 1e-05
        %v1387 = vadd.f32 %v1383, 1e-05
        %v1388 = vadd.f32 %v1384, 1e-05
        %v1389 = vrsqrt.pop %v1385
        %v1390 = vrsqrt.pop %v1386
        %v1391 = vrsqrt.pop %v1387
        %v1392 = vrsqrt.pop %v1388
        %v1393 = vmul.f32 %v1349, %v1389
        %v1394 = vmul.f32 %v1350, %v1390
        %v1395 = vmul.f32 %v1351, %v1391
        %v1396 = vmul.f32 %v1352, %v1392
        %1397 = vadd.xlane.f32.xlu0 %v1322
        %v1398 = vpop.xlane.xlu0 %1397
        %1399 = vadd.xlane.f32.xlu0 %v1326
        %v1400 = vpop.xlane.xlu0 %1399
        %1401 = vadd.xlane.f32.xlu0 %v1330
        %v1402 = vpop.xlane.xlu0 %1401
        %1403 = vadd.xlane.f32.xlu0 %v1334
        %v1404 = vpop.xlane.xlu0 %1403
        %v1405 = vmul.f32 %v1398, 0.05882353
        %v1406 = vmul.f32 %v1400, 0.05882353
        %v1407 = vmul.f32 %v1402, 0.05882353
        %v1408 = vmul.f32 %v1404, 0.05882353
        %v1409 = vsub.f32 %v1322, %v1405
        %v1410 = vsub.f32 %v1326, %v1406
        %v1411 = vsub.f32 %v1330, %v1407
        %v1412 = vsub.f32 %v1334, %v1408
        %v1413 = vmul.f32 %v1409, %v1409
        %v1414 = vmul.f32 %v1410, %v1410
        %v1415 = vmul.f32 %v1411, %v1411
        %v1416 = vmul.f32 %v1412, %v1412
        %1417 = vadd.xlane.f32.xlu0 %v1413
        %v1418 = vpop.xlane.xlu0 %1417
        %1419 = vadd.xlane.f32.xlu0 %v1414
        %v1420 = vpop.xlane.xlu0 %1419
        %1421 = vadd.xlane.f32.xlu0 %v1415
        %v1422 = vpop.xlane.xlu0 %1421
        %1423 = vadd.xlane.f32.xlu0 %v1416
        %v1424 = vpop.xlane.xlu0 %1423
        %v1425 = vmul.f32 %v1405, 111.0
        %v1426 = vmul.f32 %v1406, 111.0
        %v1427 = vmul.f32 %v1407, 111.0
        %v1428 = vmul.f32 %v1408, 111.0
        %v1429 = vmul.f32 %v1425, %v1405
        %v1430 = vmul.f32 %v1426, %v1406
        %v1431 = vmul.f32 %v1427, %v1407
        %v1432 = vmul.f32 %v1428, %v1408
        %v1433 = vsub.f32 %v1418, %v1429
        %v1434 = vsub.f32 %v1420, %v1430
        %v1435 = vsub.f32 %v1422, %v1431
        %v1436 = vsub.f32 %v1424, %v1432
        %v1437 = vmul.f32 %v1433, 0.05882353
        %v1438 = vmul.f32 %v1434, 0.05882353
        %v1439 = vmul.f32 %v1435, 0.05882353
        %v1440 = vmul.f32 %v1436, 0.05882353
        %v1441 = vmax.f32 %v1437, 0.0
        %v1442 = vmax.f32 %v1438, 0.0
        %v1443 = vmax.f32 %v1439, 0.0
        %v1444 = vmax.f32 %v1440, 0.0
        %v1445 = vadd.f32 %v1441, 1e-05
        %v1446 = vadd.f32 %v1442, 1e-05
        %v1447 = vadd.f32 %v1443, 1e-05
        %v1448 = vadd.f32 %v1444, 1e-05
        %v1449 = vrsqrt.pop %v1445
        %v1450 = vrsqrt.pop %v1446
        %v1451 = vrsqrt.pop %v1447
        %v1452 = vrsqrt.pop %v1448
        %v1453 = vmul.f32 %v1409, %v1449
        %v1454 = vmul.f32 %v1410, %v1450
        %v1455 = vmul.f32 %v1411, %v1451
        %v1456 = vmul.f32 %v1412, %v1452
        %1457 = vadd.xlane.f32.xlu0 %v1323
        %v1458 = vpop.xlane.xlu0 %1457
        %1459 = vadd.xlane.f32.xlu0 %v1327
        %v1460 = vpop.xlane.xlu0 %1459
        %1461 = vadd.xlane.f32.xlu0 %v1331
        %v1462 = vpop.xlane.xlu0 %1461
        %1463 = vadd.xlane.f32.xlu0 %v1335
        %v1464 = vpop.xlane.xlu0 %1463
        %v1465 = vmul.f32 %v1458, 0.05882353
        %v1466 = vmul.f32 %v1460, 0.05882353
        %v1467 = vmul.f32 %v1462, 0.05882353
        %v1468 = vmul.f32 %v1464, 0.05882353
        %v1469 = vsub.f32 %v1323, %v1465
        %v1470 = vsub.f32 %v1327, %v1466
        %v1471 = vsub.f32 %v1331, %v1467
        %v1472 = vsub.f32 %v1335, %v1468
        %v1473 = vmul.f32 %v1469, %v1469
        %v1474 = vmul.f32 %v1470, %v1470
        %v1475 = vmul.f32 %v1471, %v1471
        %v1476 = vmul.f32 %v1472, %v1472
        %1477 = vadd.xlane.f32.xlu0 %v1473
        %v1478 = vpop.xlane.xlu0 %1477
        %1479 = vadd.xlane.f32.xlu0 %v1474
        %v1480 = vpop.xlane.xlu0 %1479
        %1481 = vadd.xlane.f32.xlu0 %v1475
        %v1482 = vpop.xlane.xlu0 %1481
        %1483 = vadd.xlane.f32.xlu0 %v1476
        %v1484 = vpop.xlane.xlu0 %1483
        %v1485 = vmul.f32 %v1465, 111.0
        %v1486 = vmul.f32 %v1466, 111.0
        %v1487 = vmul.f32 %v1467, 111.0
        %v1488 = vmul.f32 %v1468, 111.0
        %v1489 = vmul.f32 %v1485, %v1465
        %v1490 = vmul.f32 %v1486, %v1466
        %v1491 = vmul.f32 %v1487, %v1467
        %v1492 = vmul.f32 %v1488, %v1468
        %v1493 = vsub.f32 %v1478, %v1489
        %v1494 = vsub.f32 %v1480, %v1490
        %v1495 = vsub.f32 %v1482, %v1491
        %v1496 = vsub.f32 %v1484, %v1492
        %v1497 = vmul.f32 %v1493, 0.05882353
        %v1498 = vmul.f32 %v1494, 0.05882353
        %v1499 = vmul.f32 %v1495, 0.05882353
        %v1500 = vmul.f32 %v1496, 0.05882353
        %v1501 = vmax.f32 %v1497, 0.0
        %v1502 = vmax.f32 %v1498, 0.0
        %v1503 = vmax.f32 %v1499, 0.0
        %v1504 = vmax.f32 %v1500, 0.0
        %v1505 = vadd.f32 %v1501, 1e-05
        %v1506 = vadd.f32 %v1502, 1e-05
        %v1507 = vadd.f32 %v1503, 1e-05
        %v1508 = vadd.f32 %v1504, 1e-05
        %v1509 = vrsqrt.pop %v1505
        %v1510 = vrsqrt.pop %v1506
        %v1511 = vrsqrt.pop %v1507
        %v1512 = vrsqrt.pop %v1508
        %v1513 = vmul.f32 %v1469, %v1509
        %v1514 = vmul.f32 %v1470, %v1510
        %v1515 = vmul.f32 %v1471, %v1511
        %v1516 = vmul.f32 %v1472, %v1512
        %1517 = vadd.xlane.f32.xlu0 %v1324
        %v1518 = vpop.xlane.xlu0 %1517
        %1519 = vadd.xlane.f32.xlu0 %v1328
        %v1520 = vpop.xlane.xlu0 %1519
        %1521 = vadd.xlane.f32.xlu0 %v1332
        %v1522 = vpop.xlane.xlu0 %1521
        %1523 = vadd.xlane.f32.xlu0 %v1336
        %v1524 = vpop.xlane.xlu0 %1523
        %v1525 = vmul.f32 %v1518, 0.05882353
        %v1526 = vmul.f32 %v1520, 0.05882353
        %v1527 = vmul.f32 %v1522, 0.05882353
        %v1528 = vmul.f32 %v1524, 0.05882353
        %v1529 = vsub.f32 %v1324, %v1525
        %v1530 = vsub.f32 %v1328, %v1526
        %v1531 = vsub.f32 %v1332, %v1527
        %v1532 = vsub.f32 %v1336, %v1528
        %v1533 = vmul.f32 %v1529, %v1529
        %v1534 = vmul.f32 %v1530, %v1530
        %v1535 = vmul.f32 %v1531, %v1531
        %v1536 = vmul.f32 %v1532, %v1532
        %1537 = vadd.xlane.f32.xlu0 %v1533
        %v1538 = vpop.xlane.xlu0 %1537
        %1539 = vadd.xlane.f32.xlu0 %v1534
        %v1540 = vpop.xlane.xlu0 %1539
        %1541 = vadd.xlane.f32.xlu0 %v1535
        %v1542 = vpop.xlane.xlu0 %1541
        %1543 = vadd.xlane.f32.xlu0 %v1536
        %v1544 = vpop.xlane.xlu0 %1543
        %v1545 = vmul.f32 %v1525, 111.0
        %v1546 = vmul.f32 %v1526, 111.0
        %v1547 = vmul.f32 %v1527, 111.0
        %v1548 = vmul.f32 %v1528, 111.0
        %v1549 = vmul.f32 %v1545, %v1525
        %v1550 = vmul.f32 %v1546, %v1526
        %v1551 = vmul.f32 %v1547, %v1527
        %v1552 = vmul.f32 %v1548, %v1528
        %v1553 = vsub.f32 %v1538, %v1549
        %v1554 = vsub.f32 %v1540, %v1550
        %v1555 = vsub.f32 %v1542, %v1551
        %v1556 = vsub.f32 %v1544, %v1552
        %v1557 = vmul.f32 %v1553, 0.05882353
        %v1558 = vmul.f32 %v1554, 0.05882353
        %v1559 = vmul.f32 %v1555, 0.05882353
        %v1560 = vmul.f32 %v1556, 0.05882353
        %v1561 = vmax.f32 %v1557, 0.0
        %v1562 = vmax.f32 %v1558, 0.0
        %v1563 = vmax.f32 %v1559, 0.0
        %v1564 = vmax.f32 %v1560, 0.0
        %v1565 = vadd.f32 %v1561, 1e-05
        %v1566 = vadd.f32 %v1562, 1e-05
        %v1567 = vadd.f32 %v1563, 1e-05
        %v1568 = vadd.f32 %v1564, 1e-05
        %v1569 = vrsqrt.pop %v1565
        %v1570 = vrsqrt.pop %v1566
        %v1571 = vrsqrt.pop %v1567
        %v1572 = vrsqrt.pop %v1568
        %v1573 = vmul.f32 %v1529, %v1569
        %v1574 = vmul.f32 %v1530, %v1570
        %v1575 = vmul.f32 %v1531, %v1571
        %v1576 = vmul.f32 %v1532, %v1572
        %s1577 = scalar_lea.vmem [#allocation2], 8
        %v1578 = vld [vmem:[%s1577] sm:$0xff]
        %v1580 = vlaneseq
        %v1581 = vshrl.u32 %v1580, 7
        %v1582 = vsub.s32 0, %v1581
        %v1583 = vrot.slane %v1578, %v1582
        %v1584 = vlaneseq
        %v1585 = vshrl.u32 %v1584, 7
        %v1586 = vsub.s32 2, %v1585
        %v1587 = vrot.slane %v1578, %v1586
        %v1588 = vlaneseq
        %v1589 = vshrl.u32 %v1588, 7
        %v1590 = vsub.s32 4, %v1589
        %v1591 = vrot.slane %v1578, %v1590
        %v1592 = vlaneseq
        %v1593 = vshrl.u32 %v1592, 7
        %v1594 = vsub.s32 6, %v1593
        %v1595 = vrot.slane %v1578, %v1594
        %v1600 = vlaneseq
        %v1601 = vshrl.u32 %v1600, 7
        %v1602 = vsub.s32 0, %v1601
        %v1603 = vrot.slane %v1583, %v1602
        %v1604 = vlaneseq
        %v1605 = vshrl.u32 %v1604, 7
        %v1606 = vsub.s32 0, %v1605
        %v1607 = vrot.slane %v1587, %v1606
        %v1608 = vlaneseq
        %v1609 = vshrl.u32 %v1608, 7
        %v1610 = vsub.s32 0, %v1609
        %v1611 = vrot.slane %v1591, %v1610
        %v1612 = vlaneseq
        %v1613 = vshrl.u32 %v1612, 7
        %v1614 = vsub.s32 0, %v1613
        %v1615 = vrot.slane %v1595, %v1614
        %v1616 = vmul.f32 %v1393, %v1603
        %v1617 = vmul.f32 %v1453, %v1607
        %v1618 = vmul.f32 %v1513, %v1611
        %v1619 = vmul.f32 %v1573, %v1615
        %v1620 = vmul.f32 %v1394, %v1603
        %v1621 = vmul.f32 %v1454, %v1607
        %v1622 = vmul.f32 %v1514, %v1611
        %v1623 = vmul.f32 %v1574, %v1615
        %v1624 = vmul.f32 %v1395, %v1603
        %v1625 = vmul.f32 %v1455, %v1607
        %v1626 = vmul.f32 %v1515, %v1611
        %v1627 = vmul.f32 %v1575, %v1615
        %v1628 = vmul.f32 %v1396, %v1603
        %v1629 = vmul.f32 %v1456, %v1607
        %v1630 = vmul.f32 %v1516, %v1611
        %v1631 = vmul.f32 %v1576, %v1615
        %v1632 = vlaneseq
        %v1633 = vshrl.u32 %v1632, 7
        %v1634 = vsub.s32 1, %v1633
        %v1635 = vrot.slane %v1578, %v1634
        %v1636 = vlaneseq
        %v1637 = vshrl.u32 %v1636, 7
        %v1638 = vsub.s32 3, %v1637
        %v1639 = vrot.slane %v1578, %v1638
        %v1640 = vlaneseq
        %v1641 = vshrl.u32 %v1640, 7
        %v1642 = vsub.s32 5, %v1641
        %v1643 = vrot.slane %v1578, %v1642
        %v1644 = vlaneseq
        %v1645 = vshrl.u32 %v1644, 7
        %v1646 = vsub.s32 7, %v1645
        %v1647 = vrot.slane %v1578, %v1646
        %v1652 = vlaneseq
        %v1653 = vshrl.u32 %v1652, 7
        %v1654 = vsub.s32 1, %v1653
        %v1655 = vrot.slane %v1635, %v1654
        %v1656 = vlaneseq
        %v1657 = vshrl.u32 %v1656, 7
        %v1658 = vsub.s32 1, %v1657
        %v1659 = vrot.slane %v1639, %v1658
        %v1660 = vlaneseq
        %v1661 = vshrl.u32 %v1660, 7
        %v1662 = vsub.s32 1, %v1661
        %v1663 = vrot.slane %v1643, %v1662
        %v1664 = vlaneseq
        %v1665 = vshrl.u32 %v1664, 7
        %v1666 = vsub.s32 1, %v1665
        %v1667 = vrot.slane %v1647, %v1666
        %v1668 = vadd.f32 %v1616, %v1655
        %v1669 = vadd.f32 %v1617, %v1659
        %v1670 = vadd.f32 %v1618, %v1663
        %v1671 = vadd.f32 %v1619, %v1667
        %v1672 = vadd.f32 %v1620, %v1655
        %v1673 = vadd.f32 %v1621, %v1659
        %v1674 = vadd.f32 %v1622, %v1663
        %v1675 = vadd.f32 %v1623, %v1667
        %v1676 = vadd.f32 %v1624, %v1655
        %v1677 = vadd.f32 %v1625, %v1659
        %v1678 = vadd.f32 %v1626, %v1663
        %v1679 = vadd.f32 %v1627, %v1667
        %v1680 = vadd.f32 %v1628, %v1655
        %v1681 = vadd.f32 %v1629, %v1659
        %v1682 = vadd.f32 %v1630, %v1663
        %v1683 = vadd.f32 %v1631, %v1667
        %vm1684 = vcmp.ge.f32.partialorder %v1668, 0.0
        %vm1685 = vcmp.ge.f32.partialorder %v1669, 0.0
        %vm1686 = vcmp.ge.f32.partialorder %v1670, 0.0
        %vm1687 = vcmp.ge.f32.partialorder %v1671, 0.0
        %vm1688 = vcmp.ge.f32.partialorder %v1672, 0.0
        %vm1689 = vcmp.ge.f32.partialorder %v1673, 0.0
        %vm1690 = vcmp.ge.f32.partialorder %v1674, 0.0
        %vm1691 = vcmp.ge.f32.partialorder %v1675, 0.0
        %vm1692 = vcmp.ge.f32.partialorder %v1676, 0.0
        %vm1693 = vcmp.ge.f32.partialorder %v1677, 0.0
        %vm1694 = vcmp.ge.f32.partialorder %v1678, 0.0
        %vm1695 = vcmp.ge.f32.partialorder %v1679, 0.0
        %vm1696 = vcmp.ge.f32.partialorder %v1680, 0.0
        %vm1697 = vcmp.ge.f32.partialorder %v1681, 0.0
        %vm1698 = vcmp.ge.f32.partialorder %v1682, 0.0
        %vm1699 = vcmp.ge.f32.partialorder %v1683, 0.0
        %v1700 = vmul.f32 %v1668, 0.2
        %v1701 = vmul.f32 %v1669, 0.2
        %v1702 = vmul.f32 %v1670, 0.2
        %v1703 = vmul.f32 %v1671, 0.2
        %v1704 = vmul.f32 %v1672, 0.2
        %v1705 = vmul.f32 %v1673, 0.2
        %v1706 = vmul.f32 %v1674, 0.2
        %v1707 = vmul.f32 %v1675, 0.2
        %v1708 = vmul.f32 %v1676, 0.2
        %v1709 = vmul.f32 %v1677, 0.2
        %v1710 = vmul.f32 %v1678, 0.2
        %v1711 = vmul.f32 %v1679, 0.2
        %v1712 = vmul.f32 %v1680, 0.2
        %v1713 = vmul.f32 %v1681, 0.2
        %v1714 = vmul.f32 %v1682, 0.2
        %v1715 = vmul.f32 %v1683, 0.2
        %v1716 = vsel %vm1684, %v1668, %v1700
        %v1717 = vsel %vm1685, %v1669, %v1701
        %v1718 = vsel %vm1686, %v1670, %v1702
        %v1719 = vsel %vm1687, %v1671, %v1703
        %v1720 = vsel %vm1688, %v1672, %v1704
        %v1721 = vsel %vm1689, %v1673, %v1705
        %v1722 = vsel %vm1690, %v1674, %v1706
        %v1723 = vsel %vm1691, %v1675, %v1707
        %v1724 = vsel %vm1692, %v1676, %v1708
        %v1725 = vsel %vm1693, %v1677, %v1709
        %v1726 = vsel %vm1694, %v1678, %v1710
        %v1727 = vsel %vm1695, %v1679, %v1711
        %v1728 = vsel %vm1696, %v1680, %v1712
        %v1729 = vsel %vm1697, %v1681, %v1713
        %v1730 = vsel %vm1698, %v1682, %v1714
        %v1731 = vsel %vm1699, %v1683, %v1715
        %1732 = vrot.lane.b32.xlu0 %v1716, 1
        %v1733 = vpop.permute.xlu0 %1732
        %1734 = vrot.lane.b32.xlu0 %v1720, 1
        %v1735 = vpop.permute.xlu0 %1734
        %1736 = vrot.lane.b32.xlu0 %v1724, 1
        %v1737 = vpop.permute.xlu0 %1736
        %1738 = vrot.lane.b32.xlu0 %v1728, 1
        %v1739 = vpop.permute.xlu0 %1738
        %1740 = vrot.lane.b32.xlu0 %v1717, 1
        %v1741 = vpop.permute.xlu0 %1740
        %1742 = vrot.lane.b32.xlu0 %v1721, 1
        %v1743 = vpop.permute.xlu0 %1742
        %1744 = vrot.lane.b32.xlu0 %v1725, 1
        %v1745 = vpop.permute.xlu0 %1744
        %1746 = vrot.lane.b32.xlu0 %v1729, 1
        %v1747 = vpop.permute.xlu0 %1746
        %1748 = vrot.lane.b32.xlu0 %v1718, 1
        %v1749 = vpop.permute.xlu0 %1748
        %1750 = vrot.lane.b32.xlu0 %v1722, 1
        %v1751 = vpop.permute.xlu0 %1750
        %1752 = vrot.lane.b32.xlu0 %v1726, 1
        %v1753 = vpop.permute.xlu0 %1752
        %1754 = vrot.lane.b32.xlu0 %v1730, 1
        %v1755 = vpop.permute.xlu0 %1754
        %1756 = vrot.lane.b32.xlu0 %v1719, 1
        %v1757 = vpop.permute.xlu0 %1756
        %1758 = vrot.lane.b32.xlu0 %v1723, 1
        %v1759 = vpop.permute.xlu0 %1758
        %1760 = vrot.lane.b32.xlu0 %v1727, 1
        %v1761 = vpop.permute.xlu0 %1760
        %1762 = vrot.lane.b32.xlu0 %v1731, 1
        %v1763 = vpop.permute.xlu0 %1762
        %v1764 = vsel %vm1061, %v1749, %v1757
        %v1765 = vsel %vm1061, %v1751, %v1759
        %v1766 = vsel %vm1061, %v1753, %v1761
        %v1767 = vsel %vm1061, %v1755, %v1763
        %v1768 = vsel %vm1061, %v1741, %v1749
        %v1769 = vsel %vm1061, %v1743, %v1751
        %v1770 = vsel %vm1061, %v1745, %v1753
        %v1771 = vsel %vm1061, %v1747, %v1755
        %v1772 = vsel %vm1061, %v1733, %v1741
        %v1773 = vsel %vm1061, %v1735, %v1743
        %v1774 = vsel %vm1061, %v1737, %v1745
        %v1775 = vsel %vm1061, %v1739, %v1747
        %v1776 = vsel %vm1061, %v1757, %v1733
        %v1777 = vsel %vm1061, %v1759, %v1735
        %v1778 = vsel %vm1061, %v1761, %v1737
        %v1779 = vsel %vm1061, %v1763, %v1739
        %1780 = vrot.lane.b32.xlu0 %v1716, 127
        %v1781 = vpop.permute.xlu0 %1780
        %1782 = vrot.lane.b32.xlu0 %v1720, 127
        %v1783 = vpop.permute.xlu0 %1782
        %1784 = vrot.lane.b32.xlu0 %v1724, 127
        %v1785 = vpop.permute.xlu0 %1784
        %1786 = vrot.lane.b32.xlu0 %v1728, 127
        %v1787 = vpop.permute.xlu0 %1786
        %1788 = vrot.lane.b32.xlu0 %v1717, 127
        %v1789 = vpop.permute.xlu0 %1788
        %1790 = vrot.lane.b32.xlu0 %v1721, 127
        %v1791 = vpop.permute.xlu0 %1790
        %1792 = vrot.lane.b32.xlu0 %v1725, 127
        %v1793 = vpop.permute.xlu0 %1792
        %1794 = vrot.lane.b32.xlu0 %v1729, 127
        %v1795 = vpop.permute.xlu0 %1794
        %1796 = vrot.lane.b32.xlu0 %v1718, 127
        %v1797 = vpop.permute.xlu0 %1796
        %1798 = vrot.lane.b32.xlu0 %v1722, 127
        %v1799 = vpop.permute.xlu0 %1798
        %1800 = vrot.lane.b32.xlu0 %v1726, 127
        %v1801 = vpop.permute.xlu0 %1800
        %1802 = vrot.lane.b32.xlu0 %v1730, 127
        %v1803 = vpop.permute.xlu0 %1802
        %1804 = vrot.lane.b32.xlu0 %v1719, 127
        %v1805 = vpop.permute.xlu0 %1804
        %1806 = vrot.lane.b32.xlu0 %v1723, 127
        %v1807 = vpop.permute.xlu0 %1806
        %1808 = vrot.lane.b32.xlu0 %v1727, 127
        %v1809 = vpop.permute.xlu0 %1808
        %1810 = vrot.lane.b32.xlu0 %v1731, 127
        %v1811 = vpop.permute.xlu0 %1810
        %v1812 = vsel %vm578, %v1797, %v1805
        %v1813 = vsel %vm578, %v1799, %v1807
        %v1814 = vsel %vm578, %v1801, %v1809
        %v1815 = vsel %vm578, %v1803, %v1811
        %v1816 = vsel %vm578, %v1789, %v1797
        %v1817 = vsel %vm578, %v1791, %v1799
        %v1818 = vsel %vm578, %v1793, %v1801
        %v1819 = vsel %vm578, %v1795, %v1803
        %v1820 = vsel %vm578, %v1781, %v1789
        %v1821 = vsel %vm578, %v1783, %v1791
        %v1822 = vsel %vm578, %v1785, %v1793
        %v1823 = vsel %vm578, %v1787, %v1795
        %v1824 = vsel %vm578, %v1805, %v1781
        %v1825 = vsel %vm578, %v1807, %v1783
        %v1826 = vsel %vm578, %v1809, %v1785
        %v1827 = vsel %vm578, %v1811, %v1787
        %s1828 = scalar_lea.vmem [#allocation5], 32
        %v1829 = vld [vmem:[%s1828] sm:$0xff]
        %v1830 = vld [vmem:[%s1828 + $0x8] sm:$0xff]
        %v1831 = vld [vmem:[%s1828 + $0x10] sm:$0xff]
        %v1832 = vld [vmem:[%s1828 + $0x18] sm:$0xff]
        %v1834 = vsel %vm1130, %v1829, 0
        %v1837 = vsel %vm1130, %v1830, 0
        %v1840 = vsel %vm1130, %v1831, 0
        %v1843 = vsel %vm1130, %v1832, 0
        %1845 = vmatprep.subr.mxu0 %v1772
        %1846 = vmatpush1.msra.mxu0 %v1776
        %1847 = vmatprep.subr.mxu0 %v1773
        %1848 = vmatpush1.msra.mxu0 %v1777
        %1849 = vmatprep.subr.mxu0 %v1774
        %1850 = vmatpush1.msra.mxu0 %v1778
        %1851 = vmatprep.subr.mxu0 %v1775
        %1852 = vmatpush1.msra.mxu0 %v1779
        %1853 = vmatprep.subr.mxu0 %v1717
        %1854 = vmatpush1.msra.mxu0 %v1716
        %1855 = vmatprep.subr.mxu0 %v1721
        %1856 = vmatpush1.msra.mxu0 %v1720
        %1857 = vmatprep.subr.mxu0 %v1725
        %1858 = vmatpush1.msra.mxu0 %v1724
        %1859 = vmatprep.subr.mxu0 %v1729
        %1860 = vmatpush1.msra.mxu0 %v1728
        %1861 = vmatprep.subr.mxu0 %v1816
        %1862 = vmatpush1.msra.mxu0 %v1820
        %1863 = vmatprep.subr.mxu0 %v1817
        %1864 = vmatpush1.msra.mxu0 %v1821
        %1865 = vmatprep.subr.mxu0 %v1818
        %1866 = vmatpush1.msra.mxu0 %v1822
        %1867 = vmatprep.subr.mxu0 %v1819
        %1868 = vmatpush1.msra.mxu0 %v1823
        %1869 = vmatprep.subr.mxu0 0.0
        %1870 = vmatpush1.msra.mxu0 0.0
        %1871 = vmatprep.subr.mxu0 0.0
        %1872 = vmatpush1.msra.mxu0 0.0
        %1873 = vmatprep.subr.mxu0 0.0
        %1874 = vmatpush1.msra.mxu0 0.0
        %1875 = vmatprep.subr.mxu0 0.0
        %1876 = vmatpush1.msra.mxu0 0.0
        %1877 = vmatprep.subr.mxu0 0.0
        %1878 = vmatpush1.msra.mxu0 0.0
        %1879 = vmatprep.subr.mxu0 0.0
        %1880 = vmatpush1.msra.mxu0 0.0
        %1881 = vmatprep.subr.mxu0 0.0
        %1882 = vmatpush1.msra.mxu0 0.0
        %1883 = vmatprep.subr.mxu0 0.0
        %1884 = vmatpush1.msra.mxu0 0.0
        %1885 = vmatprep.subr.mxu0 0.0
        %1886 = vmatpush1.msra.mxu0 0.0
        %1887 = vmatprep.subr.mxu0 0.0
        %1888 = vmatpush1.msra.mxu0 0.0
        %1889 = vmatprep.subr.mxu0 0.0
        %1890 = vmatpush1.msra.mxu0 0.0
        %1891 = vmatprep.subr.mxu0 0.0
        %1892 = vmatpush1.msra.mxu0 0.0
        %1893 = vmatprep.subr.mxu0 0.0
        %1894 = vmatpush1.msra.mxu0 0.0
        %1895 = vmatprep.subr.mxu0 0.0
        %1896 = vmatpush1.msra.mxu0 0.0
        %1897 = vmatprep.subr.mxu0 0.0
        %1898 = vmatpush1.msra.mxu0 0.0
        %1899 = vmatprep.subr.mxu0 0.0
        %1900 = vmatpush1.msra.mxu0 0.0
        %1901 = vmatprep.subr.mxu0 0.0
        %1902 = vmatpush1.msra.mxu0 0.0
        %1903 = vmatprep.subr.mxu0 0.0
        %1904 = vmatpush1.msra.mxu0 0.0
        %1905 = vmatprep.subr.mxu0 0.0
        %1906 = vmatpush1.msra.mxu0 0.0
        %1907 = vmatprep.subr.mxu0 0.0
        %1908 = vmatpush1.msra.mxu0 0.0
        %1909 = vmatprep.mubr.f32.mxu0 0.0
        %1910 = vmatmul.mubr.f32.gmra.mrb[0].mxu0 %v1834
        %v1911 = vpop.f32.mrb[0].mxu0
        %v1912 = vadd.f32 0.0, %v1911
        %v1913 = vpop.f32.mrb[0].mxu0
        %v1914 = vadd.f32 0.0, %v1913
        %1915 = vmatprep.mubr.f32.mxu0 0.0
        %1916 = vmatmul.mubr.f32.gmra.mrb[0].mxu0 %v1837
        %v1917 = vpop.f32.mrb[0].mxu0
        %v1918 = vadd.f32 0.0, %v1917
        %v1919 = vpop.f32.mrb[0].mxu0
        %v1920 = vadd.f32 0.0, %v1919
        %1921 = vmatprep.mubr.f32.mxu0 0.0
        %1922 = vmatmul.mubr.f32.gmra.mrb[0].mxu0 %v1840
        %v1923 = vpop.f32.mrb[0].mxu0
        %v1924 = vadd.f32 0.0, %v1923
        %v1925 = vpop.f32.mrb[0].mxu0
        %v1926 = vadd.f32 0.0, %v1925
        %1927 = vmatprep.mubr.f32.mxu0 0.0
        %1928 = vmatmul.mubr.f32.gmra.mrb[0].mxu0 %v1843
        %v1929 = vpop.f32.mrb[0].mxu0
        %v1930 = vadd.f32 0.0, %v1929
        %v1931 = vpop.f32.mrb[0].mxu0
        %v1932 = vadd.f32 0.0, %v1931
        %1933 = vdwg.mxu0
        %1934 = vmatprep.subr.mxu0 %v1764
        %1935 = vmatpush1.msra.mxu0 %v1768
        %1936 = vmatprep.subr.mxu0 %v1765
        %1937 = vmatpush1.msra.mxu0 %v1769
        %1938 = vmatprep.subr.mxu0 %v1766
        %1939 = vmatpush1.msra.mxu0 %v1770
        %1940 = vmatprep.subr.mxu0 %v1767
        %1941 = vmatpush1.msra.mxu0 %v1771
        %1942 = vmatprep.subr.mxu0 %v1719
        %1943 = vmatpush1.msra.mxu0 %v1718
        %1944 = vmatprep.subr.mxu0 %v1723
        %1945 = vmatpush1.msra.mxu0 %v1722
        %1946 = vmatprep.subr.mxu0 %v1727
        %1947 = vmatpush1.msra.mxu0 %v1726
        %1948 = vmatprep.subr.mxu0 %v1731
        %1949 = vmatpush1.msra.mxu0 %v1730
        %1950 = vmatprep.subr.mxu0 %v1824
        %1951 = vmatpush1.msra.mxu0 %v1812
        %1952 = vmatprep.subr.mxu0 %v1825
        %1953 = vmatpush1.msra.mxu0 %v1813
        %1954 = vmatprep.subr.mxu0 %v1826
        %1955 = vmatpush1.msra.mxu0 %v1814
        %1956 = vmatprep.subr.mxu0 %v1827
        %1957 = vmatpush1.msra.mxu0 %v1815
        %1958 = vmatprep.subr.mxu0 0.0
        %1959 = vmatpush1.msra.mxu0 0.0
        %1960 = vmatprep.subr.mxu0 0.0
        %1961 = vmatpush1.msra.mxu0 0.0
        %1962 = vmatprep.subr.mxu0 0.0
        %1963 = vmatpush1.msra.mxu0 0.0
        %1964 = vmatprep.subr.mxu0 0.0
        %1965 = vmatpush1.msra.mxu0 0.0
        %1966 = vmatprep.subr.mxu0 0.0
        %1967 = vmatpush1.msra.mxu0 0.0
        %1968 = vmatprep.subr.mxu0 0.0
        %1969 = vmatpush1.msra.mxu0 0.0
        %1970 = vmatprep.subr.mxu0 0.0
        %1971 = vmatpush1.msra.mxu0 0.0
        %1972 = vmatprep.subr.mxu0 0.0
        %1973 = vmatpush1.msra.mxu0 0.0
        %1974 = vmatprep.subr.mxu0 0.0
        %1975 = vmatpush1.msra.mxu0 0.0
        %1976 = vmatprep.subr.mxu0 0.0
        %1977 = vmatpush1.msra.mxu0 0.0
        %1978 = vmatprep.subr.mxu0 0.0
        %1979 = vmatpush1.msra.mxu0 0.0
        %1980 = vmatprep.subr.mxu0 0.0
        %1981 = vmatpush1.msra.mxu0 0.0
        %1982 = vmatprep.subr.mxu0 0.0
        %1983 = vmatpush1.msra.mxu0 0.0
        %1984 = vmatprep.subr.mxu0 0.0
        %1985 = vmatpush1.msra.mxu0 0.0
        %1986 = vmatprep.subr.mxu0 0.0
        %1987 = vmatpush1.msra.mxu0 0.0
        %1988 = vmatprep.subr.mxu0 0.0
        %1989 = vmatpush1.msra.mxu0 0.0
        %1990 = vmatprep.subr.mxu0 0.0
        %1991 = vmatpush1.msra.mxu0 0.0
        %1992 = vmatprep.subr.mxu0 0.0
        %1993 = vmatpush1.msra.mxu0 0.0
        %1994 = vmatprep.subr.mxu0 0.0
        %1995 = vmatpush1.msra.mxu0 0.0
        %1996 = vmatprep.subr.mxu0 0.0
        %1997 = vmatpush1.msra.mxu0 0.0
        %1998 = vmatprep.mubr.f32.mxu0 0.0
        %1999 = vmatmul.mubr.f32.gmra.mrb[0].mxu0 %v1834
        %v2000 = vpop.f32.mrb[0].mxu0
        %v2001 = vadd.f32 0.0, %v2000
        %v2002 = vpop.f32.mrb[0].mxu0
        %v2003 = vadd.f32 0.0, %v2002
        %2004 = vmatprep.mubr.f32.mxu0 0.0
        %2005 = vmatmul.mubr.f32.gmra.mrb[0].mxu0 %v1837
        %v2006 = vpop.f32.mrb[0].mxu0
        %v2007 = vadd.f32 0.0, %v2006
        %v2008 = vpop.f32.mrb[0].mxu0
        %v2009 = vadd.f32 0.0, %v2008
        %2010 = vmatprep.mubr.f32.mxu0 0.0
        %2011 = vmatmul.mubr.f32.gmra.mrb[0].mxu0 %v1840
        %v2012 = vpop.f32.mrb[0].mxu0
        %v2013 = vadd.f32 0.0, %v2012
        %v2014 = vpop.f32.mrb[0].mxu0
        %v2015 = vadd.f32 0.0, %v2014
        %2016 = vmatprep.mubr.f32.mxu0 0.0
        %2017 = vmatmul.mubr.f32.gmra.mrb[0].mxu0 %v1843
        %v2018 = vpop.f32.mrb[0].mxu0
        %v2019 = vadd.f32 0.0, %v2018
        %v2020 = vpop.f32.mrb[0].mxu0
        %v2021 = vadd.f32 0.0, %v2020
        %2022 = vdwg.mxu0
        %v2023 = vsel %vm615, %v1912, 0.0
        %v2024 = vsel %vm616, %v1914, 0.0
        %v2025 = vsel %vm617, %v2001, 0.0
        %v2026 = vsel %vm618, %v2003, 0.0
        %v2027 = vsel %vm615, %v1918, 0.0
        %v2028 = vsel %vm616, %v1920, 0.0
        %v2029 = vsel %vm617, %v2007, 0.0
        %v2030 = vsel %vm618, %v2009, 0.0
        %v2031 = vsel %vm615, %v1924, 0.0
        %v2032 = vsel %vm616, %v1926, 0.0
        %v2033 = vsel %vm617, %v2013, 0.0
        %v2034 = vsel %vm618, %v2015, 0.0
        %v2035 = vsel %vm615, %v1930, 0.0
        %v2036 = vsel %vm616, %v1932, 0.0
        %v2037 = vsel %vm617, %v2019, 0.0
        %v2038 = vsel %vm618, %v2021, 0.0
        %2039 = vadd.xlane.f32.xlu0 %v2023
        %v2040 = vpop.xlane.xlu0 %2039
        %2041 = vadd.xlane.f32.xlu0 %v2027
        %v2042 = vpop.xlane.xlu0 %2041
        %2043 = vadd.xlane.f32.xlu0 %v2031
        %v2044 = vpop.xlane.xlu0 %2043
        %2045 = vadd.xlane.f32.xlu0 %v2035
        %v2046 = vpop.xlane.xlu0 %2045
        %v2047 = vmul.f32 %v2040, 0.05882353
        %v2048 = vmul.f32 %v2042, 0.05882353
        %v2049 = vmul.f32 %v2044, 0.05882353
        %v2050 = vmul.f32 %v2046, 0.05882353
        %v2051 = vsub.f32 %v2023, %v2047
        %v2052 = vsub.f32 %v2027, %v2048
        %v2053 = vsub.f32 %v2031, %v2049
        %v2054 = vsub.f32 %v2035, %v2050
        %v2055 = vmul.f32 %v2051, %v2051
        %v2056 = vmul.f32 %v2052, %v2052
        %v2057 = vmul.f32 %v2053, %v2053
        %v2058 = vmul.f32 %v2054, %v2054
        %2059 = vadd.xlane.f32.xlu0 %v2055
        %v2060 = vpop.xlane.xlu0 %2059
        %2061 = vadd.xlane.f32.xlu0 %v2056
        %v2062 = vpop.xlane.xlu0 %2061
        %2063 = vadd.xlane.f32.xlu0 %v2057
        %v2064 = vpop.xlane.xlu0 %2063
        %2065 = vadd.xlane.f32.xlu0 %v2058
        %v2066 = vpop.xlane.xlu0 %2065
        %v2067 = vmul.f32 %v2047, 111.0
        %v2068 = vmul.f32 %v2048, 111.0
        %v2069 = vmul.f32 %v2049, 111.0
        %v2070 = vmul.f32 %v2050, 111.0
        %v2071 = vmul.f32 %v2067, %v2047
        %v2072 = vmul.f32 %v2068, %v2048
        %v2073 = vmul.f32 %v2069, %v2049
        %v2074 = vmul.f32 %v2070, %v2050
        %v2075 = vsub.f32 %v2060, %v2071
        %v2076 = vsub.f32 %v2062, %v2072
        %v2077 = vsub.f32 %v2064, %v2073
        %v2078 = vsub.f32 %v2066, %v2074
        %v2079 = vmul.f32 %v2075, 0.05882353
        %v2080 = vmul.f32 %v2076, 0.05882353
        %v2081 = vmul.f32 %v2077, 0.05882353
        %v2082 = vmul.f32 %v2078, 0.05882353
        %v2083 = vmax.f32 %v2079, 0.0
        %v2084 = vmax.f32 %v2080, 0.0
        %v2085 = vmax.f32 %v2081, 0.0
        %v2086 = vmax.f32 %v2082, 0.0
        %v2087 = vadd.f32 %v2083, 1e-05
        %v2088 = vadd.f32 %v2084, 1e-05
        %v2089 = vadd.f32 %v2085, 1e-05
        %v2090 = vadd.f32 %v2086, 1e-05
        %v2091 = vrsqrt.pop %v2087
        %v2092 = vrsqrt.pop %v2088
        %v2093 = vrsqrt.pop %v2089
        %v2094 = vrsqrt.pop %v2090
        %v2095 = vmul.f32 %v2051, %v2091
        %v2096 = vmul.f32 %v2052, %v2092
        %v2097 = vmul.f32 %v2053, %v2093
        %v2098 = vmul.f32 %v2054, %v2094
        %2099 = vadd.xlane.f32.xlu0 %v2024
        %v2100 = vpop.xlane.xlu0 %2099
        %2101 = vadd.xlane.f32.xlu0 %v2028
        %v2102 = vpop.xlane.xlu0 %2101
        %2103 = vadd.xlane.f32.xlu0 %v2032
        %v2104 = vpop.xlane.xlu0 %2103
        %2105 = vadd.xlane.f32.xlu0 %v2036
        %v2106 = vpop.xlane.xlu0 %2105
        %v2107 = vmul.f32 %v2100, 0.05882353
        %v2108 = vmul.f32 %v2102, 0.05882353
        %v2109 = vmul.f32 %v2104, 0.05882353
        %v2110 = vmul.f32 %v2106, 0.05882353
        %v2111 = vsub.f32 %v2024, %v2107
        %v2112 = vsub.f32 %v2028, %v2108
        %v2113 = vsub.f32 %v2032, %v2109
        %v2114 = vsub.f32 %v2036, %v2110
        %v2115 = vmul.f32 %v2111, %v2111
        %v2116 = vmul.f32 %v2112, %v2112
        %v2117 = vmul.f32 %v2113, %v2113
        %v2118 = vmul.f32 %v2114, %v2114
        %2119 = vadd.xlane.f32.xlu0 %v2115
        %v2120 = vpop.xlane.xlu0 %2119
        %2121 = vadd.xlane.f32.xlu0 %v2116
        %v2122 = vpop.xlane.xlu0 %2121
        %2123 = vadd.xlane.f32.xlu0 %v2117
        %v2124 = vpop.xlane.xlu0 %2123
        %2125 = vadd.xlane.f32.xlu0 %v2118
        %v2126 = vpop.xlane.xlu0 %2125
        %v2127 = vmul.f32 %v2107, 111.0
        %v2128 = vmul.f32 %v2108, 111.0
        %v2129 = vmul.f32 %v2109, 111.0
        %v2130 = vmul.f32 %v2110, 111.0
        %v2131 = vmul.f32 %v2127, %v2107
        %v2132 = vmul.f32 %v2128, %v2108
        %v2133 = vmul.f32 %v2129, %v2109
        %v2134 = vmul.f32 %v2130, %v2110
        %v2135 = vsub.f32 %v2120, %v2131
        %v2136 = vsub.f32 %v2122, %v2132
        %v2137 = vsub.f32 %v2124, %v2133
        %v2138 = vsub.f32 %v2126, %v2134
        %v2139 = vmul.f32 %v2135, 0.05882353
        %v2140 = vmul.f32 %v2136, 0.05882353
        %v2141 = vmul.f32 %v2137, 0.05882353
        %v2142 = vmul.f32 %v2138, 0.05882353
        %v2143 = vmax.f32 %v2139, 0.0
        %v2144 = vmax.f32 %v2140, 0.0
        %v2145 = vmax.f32 %v2141, 0.0
        %v2146 = vmax.f32 %v2142, 0.0
        %v2147 = vadd.f32 %v2143, 1e-05
        %v2148 = vadd.f32 %v2144, 1e-05
        %v2149 = vadd.f32 %v2145, 1e-05
        %v2150 = vadd.f32 %v2146, 1e-05
        %v2151 = vrsqrt.pop %v2147
        %v2152 = vrsqrt.pop %v2148
        %v2153 = vrsqrt.pop %v2149
        %v2154 = vrsqrt.pop %v2150
        %v2155 = vmul.f32 %v2111, %v2151
        %v2156 = vmul.f32 %v2112, %v2152
        %v2157 = vmul.f32 %v2113, %v2153
        %v2158 = vmul.f32 %v2114, %v2154
        %2159 = vadd.xlane.f32.xlu0 %v2025
        %v2160 = vpop.xlane.xlu0 %2159
        %2161 = vadd.xlane.f32.xlu0 %v2029
        %v2162 = vpop.xlane.xlu0 %2161
        %2163 = vadd.xlane.f32.xlu0 %v2033
        %v2164 = vpop.xlane.xlu0 %2163
        %2165 = vadd.xlane.f32.xlu0 %v2037
        %v2166 = vpop.xlane.xlu0 %2165
        %v2167 = vmul.f32 %v2160, 0.05882353
        %v2168 = vmul.f32 %v2162, 0.05882353
        %v2169 = vmul.f32 %v2164, 0.05882353
        %v2170 = vmul.f32 %v2166, 0.05882353
        %v2171 = vsub.f32 %v2025, %v2167
        %v2172 = vsub.f32 %v2029, %v2168
        %v2173 = vsub.f32 %v2033, %v2169
        %v2174 = vsub.f32 %v2037, %v2170
        %v2175 = vmul.f32 %v2171, %v2171
        %v2176 = vmul.f32 %v2172, %v2172
        %v2177 = vmul.f32 %v2173, %v2173
        %v2178 = vmul.f32 %v2174, %v2174
        %2179 = vadd.xlane.f32.xlu0 %v2175
        %v2180 = vpop.xlane.xlu0 %2179
        %2181 = vadd.xlane.f32.xlu0 %v2176
        %v2182 = vpop.xlane.xlu0 %2181
        %2183 = vadd.xlane.f32.xlu0 %v2177
        %v2184 = vpop.xlane.xlu0 %2183
        %2185 = vadd.xlane.f32.xlu0 %v2178
        %v2186 = vpop.xlane.xlu0 %2185
        %v2187 = vmul.f32 %v2167, 111.0
        %v2188 = vmul.f32 %v2168, 111.0
        %v2189 = vmul.f32 %v2169, 111.0
        %v2190 = vmul.f32 %v2170, 111.0
        %v2191 = vmul.f32 %v2187, %v2167
        %v2192 = vmul.f32 %v2188, %v2168
        %v2193 = vmul.f32 %v2189, %v2169
        %v2194 = vmul.f32 %v2190, %v2170
        %v2195 = vsub.f32 %v2180, %v2191
        %v2196 = vsub.f32 %v2182, %v2192
        %v2197 = vsub.f32 %v2184, %v2193
        %v2198 = vsub.f32 %v2186, %v2194
        %v2199 = vmul.f32 %v2195, 0.05882353
        %v2200 = vmul.f32 %v2196, 0.05882353
        %v2201 = vmul.f32 %v2197, 0.05882353
        %v2202 = vmul.f32 %v2198, 0.05882353
        %v2203 = vmax.f32 %v2199, 0.0
        %v2204 = vmax.f32 %v2200, 0.0
        %v2205 = vmax.f32 %v2201, 0.0
        %v2206 = vmax.f32 %v2202, 0.0
        %v2207 = vadd.f32 %v2203, 1e-05
        %v2208 = vadd.f32 %v2204, 1e-05
        %v2209 = vadd.f32 %v2205, 1e-05
        %v2210 = vadd.f32 %v2206, 1e-05
        %v2211 = vrsqrt.pop %v2207
        %v2212 = vrsqrt.pop %v2208
        %v2213 = vrsqrt.pop %v2209
        %v2214 = vrsqrt.pop %v2210
        %v2215 = vmul.f32 %v2171, %v2211
        %v2216 = vmul.f32 %v2172, %v2212
        %v2217 = vmul.f32 %v2173, %v2213
        %v2218 = vmul.f32 %v2174, %v2214
        %2219 = vadd.xlane.f32.xlu0 %v2026
        %v2220 = vpop.xlane.xlu0 %2219
        %2221 = vadd.xlane.f32.xlu0 %v2030
        %v2222 = vpop.xlane.xlu0 %2221
        %2223 = vadd.xlane.f32.xlu0 %v2034
        %v2224 = vpop.xlane.xlu0 %2223
        %2225 = vadd.xlane.f32.xlu0 %v2038
        %v2226 = vpop.xlane.xlu0 %2225
        %v2227 = vmul.f32 %v2220, 0.05882353
        %v2228 = vmul.f32 %v2222, 0.05882353
        %v2229 = vmul.f32 %v2224, 0.05882353
        %v2230 = vmul.f32 %v2226, 0.05882353
        %v2231 = vsub.f32 %v2026, %v2227
        %v2232 = vsub.f32 %v2030, %v2228
        %v2233 = vsub.f32 %v2034, %v2229
        %v2234 = vsub.f32 %v2038, %v2230
        %v2235 = vmul.f32 %v2231, %v2231
        %v2236 = vmul.f32 %v2232, %v2232
        %v2237 = vmul.f32 %v2233, %v2233
        %v2238 = vmul.f32 %v2234, %v2234
        %2239 = vadd.xlane.f32.xlu0 %v2235
        %v2240 = vpop.xlane.xlu0 %2239
        %2241 = vadd.xlane.f32.xlu0 %v2236
        %v2242 = vpop.xlane.xlu0 %2241
        %2243 = vadd.xlane.f32.xlu0 %v2237
        %v2244 = vpop.xlane.xlu0 %2243
        %2245 = vadd.xlane.f32.xlu0 %v2238
        %v2246 = vpop.xlane.xlu0 %2245
        %v2247 = vmul.f32 %v2227, 111.0
        %v2248 = vmul.f32 %v2228, 111.0
        %v2249 = vmul.f32 %v2229, 111.0
        %v2250 = vmul.f32 %v2230, 111.0
        %v2251 = vmul.f32 %v2247, %v2227
        %v2252 = vmul.f32 %v2248, %v2228
        %v2253 = vmul.f32 %v2249, %v2229
        %v2254 = vmul.f32 %v2250, %v2230
        %v2255 = vsub.f32 %v2240, %v2251
        %v2256 = vsub.f32 %v2242, %v2252
        %v2257 = vsub.f32 %v2244, %v2253
        %v2258 = vsub.f32 %v2246, %v2254
        %v2259 = vmul.f32 %v2255, 0.05882353
        %v2260 = vmul.f32 %v2256, 0.05882353
        %v2261 = vmul.f32 %v2257, 0.05882353
        %v2262 = vmul.f32 %v2258, 0.05882353
        %v2263 = vmax.f32 %v2259, 0.0
        %v2264 = vmax.f32 %v2260, 0.0
        %v2265 = vmax.f32 %v2261, 0.0
        %v2266 = vmax.f32 %v2262, 0.0
        %v2267 = vadd.f32 %v2263, 1e-05
        %v2268 = vadd.f32 %v2264, 1e-05
        %v2269 = vadd.f32 %v2265, 1e-05
        %v2270 = vadd.f32 %v2266, 1e-05
        %v2271 = vrsqrt.pop %v2267
        %v2272 = vrsqrt.pop %v2268
        %v2273 = vrsqrt.pop %v2269
        %v2274 = vrsqrt.pop %v2270
        %v2275 = vmul.f32 %v2231, %v2271
        %v2276 = vmul.f32 %v2232, %v2272
        %v2277 = vmul.f32 %v2233, %v2273
        %v2278 = vmul.f32 %v2234, %v2274
        %s2279 = scalar_lea.vmem [#allocation2], 16
        %v2280 = vld [vmem:[%s2279] sm:$0xff]
        %v2282 = vlaneseq
        %v2283 = vshrl.u32 %v2282, 7
        %v2284 = vsub.s32 0, %v2283
        %v2285 = vrot.slane %v2280, %v2284
        %v2286 = vlaneseq
        %v2287 = vshrl.u32 %v2286, 7
        %v2288 = vsub.s32 2, %v2287
        %v2289 = vrot.slane %v2280, %v2288
        %v2290 = vlaneseq
        %v2291 = vshrl.u32 %v2290, 7
        %v2292 = vsub.s32 4, %v2291
        %v2293 = vrot.slane %v2280, %v2292
        %v2294 = vlaneseq
        %v2295 = vshrl.u32 %v2294, 7
        %v2296 = vsub.s32 6, %v2295
        %v2297 = vrot.slane %v2280, %v2296
        %v2302 = vlaneseq
        %v2303 = vshrl.u32 %v2302, 7
        %v2304 = vsub.s32 0, %v2303
        %v2305 = vrot.slane %v2285, %v2304
        %v2306 = vlaneseq
        %v2307 = vshrl.u32 %v2306, 7
        %v2308 = vsub.s32 0, %v2307
        %v2309 = vrot.slane %v2289, %v2308
        %v2310 = vlaneseq
        %v2311 = vshrl.u32 %v2310, 7
        %v2312 = vsub.s32 0, %v2311
        %v2313 = vrot.slane %v2293, %v2312
        %v2314 = vlaneseq
        %v2315 = vshrl.u32 %v2314, 7
        %v2316 = vsub.s32 0, %v2315
        %v2317 = vrot.slane %v2297, %v2316
        %v2318 = vmul.f32 %v2095, %v2305
        %v2319 = vmul.f32 %v2155, %v2309
        %v2320 = vmul.f32 %v2215, %v2313
        %v2321 = vmul.f32 %v2275, %v2317
        %v2322 = vmul.f32 %v2096, %v2305
        %v2323 = vmul.f32 %v2156, %v2309
        %v2324 = vmul.f32 %v2216, %v2313
        %v2325 = vmul.f32 %v2276, %v2317
        %v2326 = vmul.f32 %v2097, %v2305
        %v2327 = vmul.f32 %v2157, %v2309
        %v2328 = vmul.f32 %v2217, %v2313
        %v2329 = vmul.f32 %v2277, %v2317
        %v2330 = vmul.f32 %v2098, %v2305
        %v2331 = vmul.f32 %v2158, %v2309
        %v2332 = vmul.f32 %v2218, %v2313
        %v2333 = vmul.f32 %v2278, %v2317
        %v2334 = vlaneseq
        %v2335 = vshrl.u32 %v2334, 7
        %v2336 = vsub.s32 1, %v2335
        %v2337 = vrot.slane %v2280, %v2336
        %v2338 = vlaneseq
        %v2339 = vshrl.u32 %v2338, 7
        %v2340 = vsub.s32 3, %v2339
        %v2341 = vrot.slane %v2280, %v2340
        %v2342 = vlaneseq
        %v2343 = vshrl.u32 %v2342, 7
        %v2344 = vsub.s32 5, %v2343
        %v2345 = vrot.slane %v2280, %v2344
        %v2346 = vlaneseq
        %v2347 = vshrl.u32 %v2346, 7
        %v2348 = vsub.s32 7, %v2347
        %v2349 = vrot.slane %v2280, %v2348
        %v2354 = vlaneseq
        %v2355 = vshrl.u32 %v2354, 7
        %v2356 = vsub.s32 1, %v2355
        %v2357 = vrot.slane %v2337, %v2356
        %v2358 = vlaneseq
        %v2359 = vshrl.u32 %v2358, 7
        %v2360 = vsub.s32 1, %v2359
        %v2361 = vrot.slane %v2341, %v2360
        %v2362 = vlaneseq
        %v2363 = vshrl.u32 %v2362, 7
        %v2364 = vsub.s32 1, %v2363
        %v2365 = vrot.slane %v2345, %v2364
        %v2366 = vlaneseq
        %v2367 = vshrl.u32 %v2366, 7
        %v2368 = vsub.s32 1, %v2367
        %v2369 = vrot.slane %v2349, %v2368
        %v2370 = vadd.f32 %v2318, %v2357
        %v2371 = vadd.f32 %v2319, %v2361
        %v2372 = vadd.f32 %v2320, %v2365
        %v2373 = vadd.f32 %v2321, %v2369
        %v2374 = vadd.f32 %v2322, %v2357
        %v2375 = vadd.f32 %v2323, %v2361
        %v2376 = vadd.f32 %v2324, %v2365
        %v2377 = vadd.f32 %v2325, %v2369
        %v2378 = vadd.f32 %v2326, %v2357
        %v2379 = vadd.f32 %v2327, %v2361
        %v2380 = vadd.f32 %v2328, %v2365
        %v2381 = vadd.f32 %v2329, %v2369
        %v2382 = vadd.f32 %v2330, %v2357
        %v2383 = vadd.f32 %v2331, %v2361
        %v2384 = vadd.f32 %v2332, %v2365
        %v2385 = vadd.f32 %v2333, %v2369
        %vm2386 = vcmp.ge.f32.partialorder %v2370, 0.0
        %vm2387 = vcmp.ge.f32.partialorder %v2371, 0.0
        %vm2388 = vcmp.ge.f32.partialorder %v2372, 0.0
        %vm2389 = vcmp.ge.f32.partialorder %v2373, 0.0
        %vm2390 = vcmp.ge.f32.partialorder %v2374, 0.0
        %vm2391 = vcmp.ge.f32.partialorder %v2375, 0.0
        %vm2392 = vcmp.ge.f32.partialorder %v2376, 0.0
        %vm2393 = vcmp.ge.f32.partialorder %v2377, 0.0
        %vm2394 = vcmp.ge.f32.partialorder %v2378, 0.0
        %vm2395 = vcmp.ge.f32.partialorder %v2379, 0.0
        %vm2396 = vcmp.ge.f32.partialorder %v2380, 0.0
        %vm2397 = vcmp.ge.f32.partialorder %v2381, 0.0
        %vm2398 = vcmp.ge.f32.partialorder %v2382, 0.0
        %vm2399 = vcmp.ge.f32.partialorder %v2383, 0.0
        %vm2400 = vcmp.ge.f32.partialorder %v2384, 0.0
        %vm2401 = vcmp.ge.f32.partialorder %v2385, 0.0
        %v2402 = vmul.f32 %v2370, 0.2
        %v2403 = vmul.f32 %v2371, 0.2
        %v2404 = vmul.f32 %v2372, 0.2
        %v2405 = vmul.f32 %v2373, 0.2
        %v2406 = vmul.f32 %v2374, 0.2
        %v2407 = vmul.f32 %v2375, 0.2
        %v2408 = vmul.f32 %v2376, 0.2
        %v2409 = vmul.f32 %v2377, 0.2
        %v2410 = vmul.f32 %v2378, 0.2
        %v2411 = vmul.f32 %v2379, 0.2
        %v2412 = vmul.f32 %v2380, 0.2
        %v2413 = vmul.f32 %v2381, 0.2
        %v2414 = vmul.f32 %v2382, 0.2
        %v2415 = vmul.f32 %v2383, 0.2
        %v2416 = vmul.f32 %v2384, 0.2
        %v2417 = vmul.f32 %v2385, 0.2
        %v2418 = vsel %vm2386, %v2370, %v2402
        %v2419 = vsel %vm2387, %v2371, %v2403
        %v2420 = vsel %vm2388, %v2372, %v2404
        %v2421 = vsel %vm2389, %v2373, %v2405
        %v2422 = vsel %vm2390, %v2374, %v2406
        %v2423 = vsel %vm2391, %v2375, %v2407
        %v2424 = vsel %vm2392, %v2376, %v2408
        %v2425 = vsel %vm2393, %v2377, %v2409
        %v2426 = vsel %vm2394, %v2378, %v2410
        %v2427 = vsel %vm2395, %v2379, %v2411
        %v2428 = vsel %vm2396, %v2380, %v2412
        %v2429 = vsel %vm2397, %v2381, %v2413
        %v2430 = vsel %vm2398, %v2382, %v2414
        %v2431 = vsel %vm2399, %v2383, %v2415
        %v2432 = vsel %vm2400, %v2384, %v2416
        %v2433 = vsel %vm2401, %v2385, %v2417
        %2434 = vrot.lane.b32.xlu0 %v2418, 1
        %v2435 = vpop.permute.xlu0 %2434
        %2436 = vrot.lane.b32.xlu0 %v2422, 1
        %v2437 = vpop.permute.xlu0 %2436
        %2438 = vrot.lane.b32.xlu0 %v2426, 1
        %v2439 = vpop.permute.xlu0 %2438
        %2440 = vrot.lane.b32.xlu0 %v2430, 1
        %v2441 = vpop.permute.xlu0 %2440
        %2442 = vrot.lane.b32.xlu0 %v2419, 1
        %v2443 = vpop.permute.xlu0 %2442
        %2444 = vrot.lane.b32.xlu0 %v2423, 1
        %v2445 = vpop.permute.xlu0 %2444
        %2446 = vrot.lane.b32.xlu0 %v2427, 1
        %v2447 = vpop.permute.xlu0 %2446
        %2448 = vrot.lane.b32.xlu0 %v2431, 1
        %v2449 = vpop.permute.xlu0 %2448
        %2450 = vrot.lane.b32.xlu0 %v2420, 1
        %v2451 = vpop.permute.xlu0 %2450
        %2452 = vrot.lane.b32.xlu0 %v2424, 1
        %v2453 = vpop.permute.xlu0 %2452
        %2454 = vrot.lane.b32.xlu0 %v2428, 1
        %v2455 = vpop.permute.xlu0 %2454
        %2456 = vrot.lane.b32.xlu0 %v2432, 1
        %v2457 = vpop.permute.xlu0 %2456
        %2458 = vrot.lane.b32.xlu0 %v2421, 1
        %v2459 = vpop.permute.xlu0 %2458
        %2460 = vrot.lane.b32.xlu0 %v2425, 1
        %v2461 = vpop.permute.xlu0 %2460
        %2462 = vrot.lane.b32.xlu0 %v2429, 1
        %v2463 = vpop.permute.xlu0 %2462
        %2464 = vrot.lane.b32.xlu0 %v2433, 1
        %v2465 = vpop.permute.xlu0 %2464
        %v2466 = vsel %vm1061, %v2451, %v2459
        %v2467 = vsel %vm1061, %v2453, %v2461
        %v2468 = vsel %vm1061, %v2455, %v2463
        %v2469 = vsel %vm1061, %v2457, %v2465
        %v2470 = vsel %vm1061, %v2443, %v2451
        %v2471 = vsel %vm1061, %v2445, %v2453
        %v2472 = vsel %vm1061, %v2447, %v2455
        %v2473 = vsel %vm1061, %v2449, %v2457
        %v2474 = vsel %vm1061, %v2435, %v2443
        %v2475 = vsel %vm1061, %v2437, %v2445
        %v2476 = vsel %vm1061, %v2439, %v2447
        %v2477 = vsel %vm1061, %v2441, %v2449
        %v2478 = vsel %vm1061, %v2459, %v2435
        %v2479 = vsel %vm1061, %v2461, %v2437
        %v2480 = vsel %vm1061, %v2463, %v2439
        %v2481 = vsel %vm1061, %v2465, %v2441
        %2482 = vrot.lane.b32.xlu0 %v2418, 127
        %v2483 = vpop.permute.xlu0 %2482
        %2484 = vrot.lane.b32.xlu0 %v2422, 127
        %v2485 = vpop.permute.xlu0 %2484
        %2486 = vrot.lane.b32.xlu0 %v2426, 127
        %v2487 = vpop.permute.xlu0 %2486
        %2488 = vrot.lane.b32.xlu0 %v2430, 127
        %v2489 = vpop.permute.xlu0 %2488
        %2490 = vrot.lane.b32.xlu0 %v2419, 127
        %v2491 = vpop.permute.xlu0 %2490
        %2492 = vrot.lane.b32.xlu0 %v2423, 127
        %v2493 = vpop.permute.xlu0 %2492
        %2494 = vrot.lane.b32.xlu0 %v2427, 127
        %v2495 = vpop.permute.xlu0 %2494
        %2496 = vrot.lane.b32.xlu0 %v2431, 127
        %v2497 = vpop.permute.xlu0 %2496
        %2498 = vrot.lane.b32.xlu0 %v2420, 127
        %v2499 = vpop.permute.xlu0 %2498
        %2500 = vrot.lane.b32.xlu0 %v2424, 127
        %v2501 = vpop.permute.xlu0 %2500
        %2502 = vrot.lane.b32.xlu0 %v2428, 127
        %v2503 = vpop.permute.xlu0 %2502
        %2504 = vrot.lane.b32.xlu0 %v2432, 127
        %v2505 = vpop.permute.xlu0 %2504
        %2506 = vrot.lane.b32.xlu0 %v2421, 127
        %v2507 = vpop.permute.xlu0 %2506
        %2508 = vrot.lane.b32.xlu0 %v2425, 127
        %v2509 = vpop.permute.xlu0 %2508
        %2510 = vrot.lane.b32.xlu0 %v2429, 127
        %v2511 = vpop.permute.xlu0 %2510
        %2512 = vrot.lane.b32.xlu0 %v2433, 127
        %v2513 = vpop.permute.xlu0 %2512
        %v2514 = vsel %vm578, %v2499, %v2507
        %v2515 = vsel %vm578, %v2501, %v2509
        %v2516 = vsel %vm578, %v2503, %v2511
        %v2517 = vsel %vm578, %v2505, %v2513
        %v2518 = vsel %vm578, %v2491, %v2499
        %v2519 = vsel %vm578, %v2493, %v2501
        %v2520 = vsel %vm578, %v2495, %v2503
        %v2521 = vsel %vm578, %v2497, %v2505
        %v2522 = vsel %vm578, %v2483, %v2491
        %v2523 = vsel %vm578, %v2485, %v2493
        %v2524 = vsel %vm578, %v2487, %v2495
        %v2525 = vsel %vm578, %v2489, %v2497
        %v2526 = vsel %vm578, %v2507, %v2483
        %v2527 = vsel %vm578, %v2509, %v2485
        %v2528 = vsel %vm578, %v2511, %v2487
        %v2529 = vsel %vm578, %v2513, %v2489
        %s2530 = scalar_lea.vmem [#allocation5], 64
        %v2531 = vld [vmem:[%s2530] sm:$0xff]
        %v2532 = vld [vmem:[%s2530 + $0x8] sm:$0xff]
        %v2533 = vld [vmem:[%s2530 + $0x10] sm:$0xff]
        %v2534 = vld [vmem:[%s2530 + $0x18] sm:$0xff]
        %v2536 = vsel %vm1130, %v2531, 0
        %v2539 = vsel %vm1130, %v2532, 0
        %v2542 = vsel %vm1130, %v2533, 0
        %v2545 = vsel %vm1130, %v2534, 0
        %2547 = vmatprep.subr.mxu0 %v2474
        %2548 = vmatpush1.msra.mxu0 %v2478
        %2549 = vmatprep.subr.mxu0 %v2475
        %2550 = vmatpush1.msra.mxu0 %v2479
        %2551 = vmatprep.subr.mxu0 %v2476
        %2552 = vmatpush1.msra.mxu0 %v2480
        %2553 = vmatprep.subr.mxu0 %v2477
        %2554 = vmatpush1.msra.mxu0 %v2481
        %2555 = vmatprep.subr.mxu0 %v2419
        %2556 = vmatpush1.msra.mxu0 %v2418
        %2557 = vmatprep.subr.mxu0 %v2423
        %2558 = vmatpush1.msra.mxu0 %v2422
        %2559 = vmatprep.subr.mxu0 %v2427
        %2560 = vmatpush1.msra.mxu0 %v2426
        %2561 = vmatprep.subr.mxu0 %v2431
        %2562 = vmatpush1.msra.mxu0 %v2430
        %2563 = vmatprep.subr.mxu0 %v2518
        %2564 = vmatpush1.msra.mxu0 %v2522
        %2565 = vmatprep.subr.mxu0 %v2519
        %2566 = vmatpush1.msra.mxu0 %v2523
        %2567 = vmatprep.subr.mxu0 %v2520
        %2568 = vmatpush1.msra.mxu0 %v2524
        %2569 = vmatprep.subr.mxu0 %v2521
        %2570 = vmatpush1.msra.mxu0 %v2525
        %2571 = vmatprep.subr.mxu0 0.0
        %2572 = vmatpush1.msra.mxu0 0.0
        %2573 = vmatprep.subr.mxu0 0.0
        %2574 = vmatpush1.msra.mxu0 0.0
        %2575 = vmatprep.subr.mxu0 0.0
        %2576 = vmatpush1.msra.mxu0 0.0
        %2577 = vmatprep.subr.mxu0 0.0
        %2578 = vmatpush1.msra.mxu0 0.0
        %2579 = vmatprep.subr.mxu0 0.0
        %2580 = vmatpush1.msra.mxu0 0.0
        %2581 = vmatprep.subr.mxu0 0.0
        %2582 = vmatpush1.msra.mxu0 0.0
        %2583 = vmatprep.subr.mxu0 0.0
        %2584 = vmatpush1.msra.mxu0 0.0
        %2585 = vmatprep.subr.mxu0 0.0
        %2586 = vmatpush1.msra.mxu0 0.0
        %2587 = vmatprep.subr.mxu0 0.0
        %2588 = vmatpush1.msra.mxu0 0.0
        %2589 = vmatprep.subr.mxu0 0.0
        %2590 = vmatpush1.msra.mxu0 0.0
        %2591 = vmatprep.subr.mxu0 0.0
        %2592 = vmatpush1.msra.mxu0 0.0
        %2593 = vmatprep.subr.mxu0 0.0
        %2594 = vmatpush1.msra.mxu0 0.0
        %2595 = vmatprep.subr.mxu0 0.0
        %2596 = vmatpush1.msra.mxu0 0.0
        %2597 = vmatprep.subr.mxu0 0.0
        %2598 = vmatpush1.msra.mxu0 0.0
        %2599 = vmatprep.subr.mxu0 0.0
        %2600 = vmatpush1.msra.mxu0 0.0
        %2601 = vmatprep.subr.mxu0 0.0
        %2602 = vmatpush1.msra.mxu0 0.0
        %2603 = vmatprep.subr.mxu0 0.0
        %2604 = vmatpush1.msra.mxu0 0.0
        %2605 = vmatprep.subr.mxu0 0.0
        %2606 = vmatpush1.msra.mxu0 0.0
        %2607 = vmatprep.subr.mxu0 0.0
        %2608 = vmatpush1.msra.mxu0 0.0
        %2609 = vmatprep.subr.mxu0 0.0
        %2610 = vmatpush1.msra.mxu0 0.0
        %2611 = vmatprep.mubr.f32.mxu0 0.0
        %2612 = vmatmul.mubr.f32.gmra.mrb[0].mxu0 %v2536
        %v2613 = vpop.f32.mrb[0].mxu0
        %v2614 = vadd.f32 0.0, %v2613
        %v2615 = vpop.f32.mrb[0].mxu0
        %v2616 = vadd.f32 0.0, %v2615
        %2617 = vmatprep.mubr.f32.mxu0 0.0
        %2618 = vmatmul.mubr.f32.gmra.mrb[0].mxu0 %v2539
        %v2619 = vpop.f32.mrb[0].mxu0
        %v2620 = vadd.f32 0.0, %v2619
        %v2621 = vpop.f32.mrb[0].mxu0
        %v2622 = vadd.f32 0.0, %v2621
        %2623 = vmatprep.mubr.f32.mxu0 0.0
        %2624 = vmatmul.mubr.f32.gmra.mrb[0].mxu0 %v2542
        %v2625 = vpop.f32.mrb[0].mxu0
        %v2626 = vadd.f32 0.0, %v2625
        %v2627 = vpop.f32.mrb[0].mxu0
        %v2628 = vadd.f32 0.0, %v2627
        %2629 = vmatprep.mubr.f32.mxu0 0.0
        %2630 = vmatmul.mubr.f32.gmra.mrb[0].mxu0 %v2545
        %v2631 = vpop.f32.mrb[0].mxu0
        %v2632 = vadd.f32 0.0, %v2631
        %v2633 = vpop.f32.mrb[0].mxu0
        %v2634 = vadd.f32 0.0, %v2633
        %2635 = vdwg.mxu0
        %2636 = vmatprep.subr.mxu0 %v2466
        %2637 = vmatpush1.msra.mxu0 %v2470
        %2638 = vmatprep.subr.mxu0 %v2467
        %2639 = vmatpush1.msra.mxu0 %v2471
        %2640 = vmatprep.subr.mxu0 %v2468
        %2641 = vmatpush1.msra.mxu0 %v2472
        %2642 = vmatprep.subr.mxu0 %v2469
        %2643 = vmatpush1.msra.mxu0 %v2473
        %2644 = vmatprep.subr.mxu0 %v2421
        %2645 = vmatpush1.msra.mxu0 %v2420
        %2646 = vmatprep.subr.mxu0 %v2425
        %2647 = vmatpush1.msra.mxu0 %v2424
        %2648 = vmatprep.subr.mxu0 %v2429
        %2649 = vmatpush1.msra.mxu0 %v2428
        %2650 = vmatprep.subr.mxu0 %v2433
        %2651 = vmatpush1.msra.mxu0 %v2432
        %2652 = vmatprep.subr.mxu0 %v2526
        %2653 = vmatpush1.msra.mxu0 %v2514
        %2654 = vmatprep.subr.mxu0 %v2527
        %2655 = vmatpush1.msra.mxu0 %v2515
        %2656 = vmatprep.subr.mxu0 %v2528
        %2657 = vmatpush1.msra.mxu0 %v2516
        %2658 = vmatprep.subr.mxu0 %v2529
        %2659 = vmatpush1.msra.mxu0 %v2517
        %2660 = vmatprep.subr.mxu0 0.0
        %2661 = vmatpush1.msra.mxu0 0.0
        %2662 = vmatprep.subr.mxu0 0.0
        %2663 = vmatpush1.msra.mxu0 0.0
        %2664 = vmatprep.subr.mxu0 0.0
        %2665 = vmatpush1.msra.mxu0 0.0
        %2666 = vmatprep.subr.mxu0 0.0
        %2667 = vmatpush1.msra.mxu0 0.0
        %2668 = vmatprep.subr.mxu0 0.0
        %2669 = vmatpush1.msra.mxu0 0.0
        %2670 = vmatprep.subr.mxu0 0.0
        %2671 = vmatpush1.msra.mxu0 0.0
        %2672 = vmatprep.subr.mxu0 0.0
        %2673 = vmatpush1.msra.mxu0 0.0
        %2674 = vmatprep.subr.mxu0 0.0
        %2675 = vmatpush1.msra.mxu0 0.0
        %2676 = vmatprep.subr.mxu0 0.0
        %2677 = vmatpush1.msra.mxu0 0.0
        %2678 = vmatprep.subr.mxu0 0.0
        %2679 = vmatpush1.msra.mxu0 0.0
        %2680 = vmatprep.subr.mxu0 0.0
        %2681 = vmatpush1.msra.mxu0 0.0
        %2682 = vmatprep.subr.mxu0 0.0
        %2683 = vmatpush1.msra.mxu0 0.0
        %2684 = vmatprep.subr.mxu0 0.0
        %2685 = vmatpush1.msra.mxu0 0.0
        %2686 = vmatprep.subr.mxu0 0.0
        %2687 = vmatpush1.msra.mxu0 0.0
        %2688 = vmatprep.subr.mxu0 0.0
        %2689 = vmatpush1.msra.mxu0 0.0
        %2690 = vmatprep.subr.mxu0 0.0
        %2691 = vmatpush1.msra.mxu0 0.0
        %2692 = vmatprep.subr.mxu0 0.0
        %2693 = vmatpush1.msra.mxu0 0.0
        %2694 = vmatprep.subr.mxu0 0.0
        %2695 = vmatpush1.msra.mxu0 0.0
        %2696 = vmatprep.subr.mxu0 0.0
        %2697 = vmatpush1.msra.mxu0 0.0
        %2698 = vmatprep.subr.mxu0 0.0
        %2699 = vmatpush1.msra.mxu0 0.0
        %2700 = vmatprep.mubr.f32.mxu0 0.0
        %2701 = vmatmul.mubr.f32.gmra.mrb[0].mxu0 %v2536
        %v2702 = vpop.f32.mrb[0].mxu0
        %v2703 = vadd.f32 0.0, %v2702
        %v2704 = vpop.f32.mrb[0].mxu0
        %v2705 = vadd.f32 0.0, %v2704
        %2706 = vmatprep.mubr.f32.mxu0 0.0
        %2707 = vmatmul.mubr.f32.gmra.mrb[0].mxu0 %v2539
        %v2708 = vpop.f32.mrb[0].mxu0
        %v2709 = vadd.f32 0.0, %v2708
        %v2710 = vpop.f32.mrb[0].mxu0
        %v2711 = vadd.f32 0.0, %v2710
        %2712 = vmatprep.mubr.f32.mxu0 0.0
        %2713 = vmatmul.mubr.f32.gmra.mrb[0].mxu0 %v2542
        %v2714 = vpop.f32.mrb[0].mxu0
        %v2715 = vadd.f32 0.0, %v2714
        %v2716 = vpop.f32.mrb[0].mxu0
        %v2717 = vadd.f32 0.0, %v2716
        %2718 = vmatprep.mubr.f32.mxu0 0.0
        %2719 = vmatmul.mubr.f32.gmra.mrb[0].mxu0 %v2545
        %v2720 = vpop.f32.mrb[0].mxu0
        %v2721 = vadd.f32 0.0, %v2720
        %v2722 = vpop.f32.mrb[0].mxu0
        %v2723 = vadd.f32 0.0, %v2722
        %2724 = vdwg.mxu0
        %2725 = vst [vmem:[%s220] sm:$0xff] %v2614
        %2726 = vst [vmem:[%s220 + $0x8] sm:$0xff] %v2616
        %2727 = vst [vmem:[%s220 + $0x10] sm:$0xff] %v2703
        %2728 = vst [vmem:[%s220 + $0x18] sm:$0xff] %v2705
        %2729 = vst [vmem:[%s220 + $0x20] sm:$0xff] %v2620
        %2730 = vst [vmem:[%s220 + $0x28] sm:$0xff] %v2622
        %2731 = vst [vmem:[%s220 + $0x30] sm:$0xff] %v2709
        %2732 = vst [vmem:[%s220 + $0x38] sm:$0xff] %v2711
        %2733 = vst [vmem:[%s220 + $0x40] sm:$0xff] %v2626
        %2734 = vst [vmem:[%s220 + $0x48] sm:$0xff] %v2628
        %2735 = vst [vmem:[%s220 + $0x50] sm:$0xff] %v2715
        %2736 = vst [vmem:[%s220 + $0x58] sm:$0xff] %v2717
        %2737 = vst [vmem:[%s220 + $0x60] sm:$0xff] %v2632
        %2738 = vst [vmem:[%s220 + $0x68] sm:$0xff] %v2634
        %2739 = vst [vmem:[%s220 + $0x70] sm:$0xff] %v2721
        %2740 = vst [vmem:[%s220 + $0x78] sm:$0xff] %v2723
        %s2741 = sand.u32 %s117, 1
        %s2742 = scalar_lea.sflag [#allocation4], %s2741
        %s2743 = sand.u32 %s117, 1
        %s2744 = smul.addr %s2743, 128
        %s2745 = scalar_lea.vmem [#allocation7], %s2744
        // Predicated region
        $region45: #{tpu_custom_call.1} parent=35 // pred_check
          %p2746 = pneg %p127
        $region46: #{tpu_custom_call.1} parent=35 // pred_check_branch
          %2748 = sbr.rel (%p2746) target = $region48
        $region47: #{tpu_custom_call.1} parent=35 // pred_region
          %s2750 = ssub.s32 2048, 2048
          %2751 = vsyncadd %s2742, %s2750
          %s2752 = smul.addr %s20, 16
          %s2753 = smul.addr %s2752, 128
          %s2754 = scalar_lea.hbm %s4, %s2753
          %s2755 = sshll.u32 %s2745, 4
          %s2756 = int_to_ptr.vmem [resolvable:$true] %s2755
          %2761 = dma.vmem_to_hbm [thread:$0]  %s2756, 2048, %s2754, %s2742, 512, 512, 32
        $region48: #{tpu_custom_call.1} parent=35 // pred_fallthru
          _
      $region36: #{tpu_custom_call.1} parent=5 // pred_fallthru
        _
      %p2762 = scmp.le.s32.totalorder 2, %s15
      // Predicated region
      $region49: #{tpu_custom_call.1} parent=5 // pred_check
        %p2763 = pneg %p2762
      $region50: #{tpu_custom_call.1} parent=5 // pred_check_branch
        %2765 = sbr.rel (%p2763) target = $region52
      $region51: #{tpu_custom_call.1} parent=5 // pred_region
        %s2766 = ssub.s32 %s15, 2
        // Predicated region
        $region53: #{tpu_custom_call.1} parent=51 // pred_check
          %p2767 = pneg %p133
        $region54: #{tpu_custom_call.1} parent=51 // pred_check_branch
          %2769 = sbr.rel (%p2767) target = $region56
        $region55: #{tpu_custom_call.1} parent=51 // pred_region
          %s2770 = sand.u32 %s118, 1
          %s2771 = scalar_lea.sflag [#allocation4], %s2770
          %s2772 = sand.u32 %s118, 1
          %s2773 = smul.addr %s2772, 128
          %s2774 = scalar_lea.vmem [#allocation7], %s2773
          %2775 = dma.done %s2771, 2048
        $region56: #{tpu_custom_call.1} parent=51 // pred_fallthru
          _
      $region52: #{tpu_custom_call.1} parent=5 // pred_fallthru
        _
    $region6: #{tpu_custom_call.1} parent=1 // loop_footer
      %s19 = sadd.s32 1, %s15
    $region7: #{tpu_custom_call.1} parent=1 // loop_footer_branch
      %14 = sbr.rel target = $region3
    $region8: #{tpu_custom_call.1} parent=1 // loop_exit
      _
    %2776 = vsyncpa [#allocation3], 1
    %s2777 = scalar_lea.sflag [#allocation3], 1
    %2778 = vsyncpa %s2777, 1
    %2779 = vsyncpa [#allocation6], 1
    %2780 = vsyncpa [#allocation4], 1
    %s2781 = scalar_lea.sflag [#allocation4], 1
    %2782 = vsyncpa %s2781, 1

</llo_original>
